<compile_context>
chip_gen: v5e
topology: v5e:2x2
jax: 0.10.0
libtpu: 0.0.40
codegen_flags: <defaults>
</compile_context>

<pallas_src>
import functools
from typing import NamedTuple

import jax
import jax.numpy as jnp
import numpy as np
from jax import lax
from jax.experimental import pallas as pl
from jax.experimental.pallas import tpu as pltpu

EPS = 1e-5
LANES = 128          # lane width / minimum channel pad
ROW_TILE = 16        # output row tile for high-resolution conv layers


def _rup(n, m=LANES):
    return ((n + m - 1) // m) * m


def _vmem_limit_bytes():
    # ~75% of physical VMEM: v5e/v6e (128 MiB) -> 96 MiB, v7x (64 MiB) -> 48 MiB.
    try:
        cap = int(pltpu.get_tpu_info().vmem_capacity_bytes)
    except Exception:
        cap = 64 * 1024 * 1024
    lim = min(int(cap * 3 // 4), 100 * 1024 * 1024)
    return max(lim, 48 * 1024 * 1024)


_VMEM_LIMIT = _vmem_limit_bytes()


class PT(NamedTuple):
    """Channel-padded NHWC activation: real channels are data[..., :c]."""
    data: jax.Array        # (N, H, W, Cp) bf16, Cp a multiple of 128
    c: int                 # number of real (logical) channels


def _to_pt(x):
    N, H, W, C = x.shape
    cp = _rup(C)
    return PT(jnp.pad(x.astype(jnp.bfloat16),
                      ((0, 0), (0, 0), (0, 0), (0, cp - C))), C)


def _from_pt(t):
    return t.data[..., :t.c].astype(jnp.float32)


# ---------------------------------------------------------------------------
# Pallas kernels
# ---------------------------------------------------------------------------
def _conv3x3_kernel(x_ref, w_ref, s_ref, t_ref, o_ref, *, th, W, relu):
    """Fused 3x3 SAME conv + folded (bias+BN) + optional ReLU, one row/Cout tile.

    x_ref: (H+2, W+2, Cin_p) bf16   spatially pre-padded whole image (resident)
    w_ref: (9*Cin_p, CT)     bf16   tap-major weights (dy outer, dx, cin inner)
    s_ref, t_ref: (1, CT)    f32    folded BN scale / (BN shift + bias*scale)
    o_ref: (th, W, CT)       bf16
    """
    cin = x_ref.shape[-1]
    ct = o_ref.shape[-1]
    hw = th * W
    base = pl.multiple_of(pl.program_id(2) * th, th)
    xw = x_ref[pl.ds(base, th + 2), :, :]                    # (th+2, W+2, cin)
    xs = [xw[:, dx:dx + W, :] for dx in range(3)]            # 3 column-shifted copies
    taps = [xs[dx][dy:dy + th].reshape(hw, cin)
            for dy in range(3) for dx in range(3)]
    slab = jnp.concatenate(taps, axis=-1)                    # (hw, 9*cin) im2col slab
    acc = jnp.dot(slab, w_ref[...], preferred_element_type=jnp.float32)
    y = acc * s_ref[...] + t_ref[...]
    if relu:
        y = jnp.maximum(y, 0.0)
    o_ref[...] = y.reshape(th, W, ct).astype(o_ref.dtype)


def conv3x3(t, w, b=None, bn=None, relu=True):
    """t: PT (N,H,W,Cp); w: (Cout, Cin, 3, 3) torch layout. Returns PT."""
    x = t.data
    N, H, W, cp = x.shape
    Cout, Cin = w.shape[0], w.shape[1]
    assert Cin == t.c, (Cin, t.c)
    cout_p = _rup(Cout)
    ct = 256 if cout_p % 256 == 0 else 128                   # 256-wide MXU tiles when possible
    th = H if H <= ROW_TILE else ROW_TILE
    assert H % th == 0
    nt = H // th

    if bn is None:
        scale = jnp.ones((Cout,), jnp.float32)
        shift = jnp.zeros((Cout,), jnp.float32)
    else:
        gamma, beta, mean, var = bn
        scale = gamma / jnp.sqrt(var + EPS)
        shift = beta - mean * scale
    if b is not None:
        shift = shift + b.astype(jnp.float32) * scale        # fold conv bias into shift

    wt = jnp.transpose(w, (2, 3, 1, 0))                      # (3,3,Cin,Cout)
    wt = jnp.pad(wt, ((0, 0), (0, 0), (0, cp - Cin), (0, cout_p - Cout)))
    wt = wt.reshape(9 * cp, cout_p).astype(jnp.bfloat16)
    sk = jnp.pad(scale, (0, cout_p - Cout)).reshape(1, cout_p).astype(jnp.float32)
    tk = jnp.pad(shift, (0, cout_p - Cout)).reshape(1, cout_p).astype(jnp.float32)

    # Halo pad only (channels stay padded between layers).
    xp = jnp.pad(x, ((0, 0), (1, 1), (1, 1), (0, 0)))

    flops = 2 * N * H * W * 9 * cp * cout_p
    bytes_acc = xp.size * 2 + wt.size * 2 + N * H * W * cout_p * 2 + 2 * cout_p * 4

    out = pl.pallas_call(
        functools.partial(_conv3x3_kernel, th=th, W=W, relu=relu),
        out_shape=jax.ShapeDtypeStruct((N, H, W, cout_p), jnp.bfloat16),
        grid_spec=pltpu.PrefetchScalarGridSpec(
            num_scalar_prefetch=0,
            grid=(N, cout_p // ct, nt),
            in_specs=[
                pl.BlockSpec((None, H + 2, W + 2, cp), lambda n, co, r: (n, 0, 0, 0)),
                pl.BlockSpec((9 * cp, ct), lambda n, co, r: (0, co)),
                pl.BlockSpec((1, ct), lambda n, co, r: (0, co)),
                pl.BlockSpec((1, ct), lambda n, co, r: (0, co)),
            ],
            out_specs=pl.BlockSpec((None, th, W, ct), lambda n, co, r: (n, r, 0, co)),
        ),
        compiler_params=pltpu.CompilerParams(
            dimension_semantics=("parallel", "parallel", "arbitrary"),
            vmem_limit_bytes=_VMEM_LIMIT),
        cost_estimate=pl.CostEstimate(flops=flops, transcendentals=0,
                                      bytes_accessed=bytes_acc),
    )(xp, wt, sk, tk)
    return PT(out, Cout)


def _conv1x1_kernel(x_ref, w_ref, b_ref, o_ref):
    y = jnp.dot(x_ref[...], w_ref[...], preferred_element_type=jnp.float32) + b_ref[...]
    o_ref[...] = y.astype(o_ref.dtype)


def conv1x1(t, w, b):
    """t: PT (N,H,W,Cp); w: (Cout, Cin, 1, 1). Returns PT."""
    x = t.data
    N, H, W, cp = x.shape
    Cout, Cin = w.shape[0], w.shape[1]
    assert Cin == t.c, (Cin, t.c)
    cout_p = _rup(Cout)
    hw = H * W
    xf = x.reshape(N, hw, cp)
    wk = jnp.pad(jnp.transpose(w[:, :, 0, 0]),
                 ((0, cp - Cin), (0, cout_p - Cout))).astype(jnp.bfloat16)
    bk = jnp.pad(b.astype(jnp.float32), (0, cout_p - Cout)).reshape(1, cout_p)

    out = pl.pallas_call(
        _conv1x1_kernel,
        out_shape=jax.ShapeDtypeStruct((N, hw, cout_p), jnp.bfloat16),
        grid_spec=pltpu.PrefetchScalarGridSpec(
            num_scalar_prefetch=0,
            grid=(N,),
            in_specs=[
                pl.BlockSpec((None, hw, cp), lambda n: (n, 0, 0)),
                pl.BlockSpec((cp, cout_p), lambda n: (0, 0)),
                pl.BlockSpec((1, cout_p), lambda n: (0, 0)),
            ],
            out_specs=pl.BlockSpec((None, hw, cout_p), lambda n: (n, 0, 0)),
        ),
        compiler_params=pltpu.CompilerParams(
            dimension_semantics=("parallel",),
            vmem_limit_bytes=_VMEM_LIMIT),
        cost_estimate=pl.CostEstimate(
            flops=2 * N * hw * cp * cout_p, transcendentals=0,
            bytes_accessed=xf.size * 2 + wk.size * 2 + N * hw * cout_p * 2),
    )(xf, wk, bk)
    return PT(out.reshape(N, H, W, cout_p), Cout)


def _self_attn_kernel(x_ref, wq_ref, bq_ref, wk_ref, bk_ref, wv_ref, bv_ref,
                      g_ref, o_ref, k_sc, v_sc, *, tq):
    """Self_Attn for one query-row tile; K/V are computed once per image."""
    qi = pl.program_id(1)

    @pl.when(qi == 0)
    def _():
        x_all = x_ref[...]                                    # (HW, Cp) bf16
        k = jnp.dot(x_all, wk_ref[...], preferred_element_type=jnp.float32) + bk_ref[...]
        v = jnp.dot(x_all, wv_ref[...], preferred_element_type=jnp.float32) + bv_ref[...]
        k_sc[...] = k.astype(k_sc.dtype)
        v_sc[...] = v.astype(v_sc.dtype)

    start = pl.multiple_of(qi * tq, tq)
    x_q = x_ref[pl.ds(start, tq), :]                          # (tq, Cp) bf16
    q = jnp.dot(x_q, wq_ref[...], preferred_element_type=jnp.float32) + bq_ref[...]
    e = lax.dot_general(q.astype(jnp.bfloat16), k_sc[...],
                        (((1,), (1,)), ((), ())),
                        preferred_element_type=jnp.float32)   # (tq, HW)
    m = jnp.max(e, axis=-1, keepdims=True)
    p = jnp.exp(e - m)
    l = jnp.sum(p, axis=-1, keepdims=True)
    attn = (p * (1.0 / l)).astype(jnp.bfloat16)
    out = jnp.dot(attn, v_sc[...], preferred_element_type=jnp.float32)  # (tq, Cp)
    out = g_ref[...] * out + x_q.astype(jnp.float32)
    o_ref[...] = out.astype(o_ref.dtype)


def self_attention(t, prm, tq=512):
    """Self_Attn module. t: PT (N,H,W,Cp); returns PT."""
    x, C = t.data, t.c
    N, H, W, cp = x.shape
    hw = H * W
    tq = min(tq, hw)
    assert hw % tq == 0
    xq = x.reshape(N, hw, cp)

    def pw(p):
        w = jnp.transpose(p["w"][:, :, 0, 0])                 # (Cin, Cout)
        return jnp.pad(w, ((0, cp - w.shape[0]), (0, cp - w.shape[1]))).astype(jnp.bfloat16)

    def pb(p):
        return jnp.pad(p["b"].astype(jnp.float32), (0, cp - p["b"].shape[0])).reshape(1, cp)

    gamma = prm["gamma"].reshape(1, 1).astype(jnp.float32)

    out = pl.pallas_call(
        functools.partial(_self_attn_kernel, tq=tq),
        out_shape=jax.ShapeDtypeStruct((N, hw, cp), jnp.bfloat16),
        grid_spec=pltpu.PrefetchScalarGridSpec(
            num_scalar_prefetch=0,
            grid=(N, hw // tq),
            in_specs=[
                pl.BlockSpec((None, hw, cp), lambda n, qi: (n, 0, 0)),
                pl.BlockSpec((cp, cp), lambda n, qi: (0, 0)),
                pl.BlockSpec((1, cp), lambda n, qi: (0, 0)),
                pl.BlockSpec((cp, cp), lambda n, qi: (0, 0)),
                pl.BlockSpec((1, cp), lambda n, qi: (0, 0)),
                pl.BlockSpec((cp, cp), lambda n, qi: (0, 0)),
                pl.BlockSpec((1, cp), lambda n, qi: (0, 0)),
                pl.BlockSpec((1, 1), lambda n, qi: (0, 0)),
            ],
            out_specs=pl.BlockSpec((None, tq, cp), lambda n, qi: (n, qi, 0)),
            scratch_shapes=[pltpu.VMEM((hw, cp), jnp.bfloat16),
                            pltpu.VMEM((hw, cp), jnp.bfloat16)],
        ),
        compiler_params=pltpu.CompilerParams(
            dimension_semantics=("parallel", "arbitrary"),
            vmem_limit_bytes=_VMEM_LIMIT),
        cost_estimate=pl.CostEstimate(
            flops=N * (4 * hw * cp * cp + 4 * hw * hw * cp),
            transcendentals=N * hw * hw,
            bytes_accessed=2 * xq.size * 2 + 3 * cp * cp * 2),
    )(xq, pw(prm["q"]), pb(prm["q"]), pw(prm["k"]), pb(prm["k"]),
      pw(prm["v"]), pb(prm["v"]), gamma)
    return PT(out.reshape(N, H, W, cp), C)


# ---------------------------------------------------------------------------
# XLA data-movement glue (pooling / upsampling / resize / concat)
# ---------------------------------------------------------------------------
def maxpool2x2(x):
    N, H, W, C = x.shape
    return jnp.max(x.reshape(N, H // 2, 2, W // 2, 2, C), axis=(2, 4))


def upsample_nearest_2x(x):
    x = jnp.repeat(x, 2, axis=1)
    return jnp.repeat(x, 2, axis=2)


def resize_bilinear_align_corners(x, out_h, out_w):
    N, H, W, C = x.shape
    if (H, W) == (out_h, out_w):
        return x

    def src(out_size, in_size):
        if out_size == 1:
            return jnp.zeros((out_size,), jnp.float32)
        return jnp.arange(out_size, dtype=jnp.float32) * ((in_size - 1) / (out_size - 1))

    ys, xs = src(out_h, H), src(out_w, W)
    y0 = jnp.clip(jnp.floor(ys).astype(jnp.int32), 0, H - 1)
    x0 = jnp.clip(jnp.floor(xs).astype(jnp.int32), 0, W - 1)
    y1 = jnp.minimum(y0 + 1, H - 1)
    x1 = jnp.minimum(x0 + 1, W - 1)
    wy = (ys - y0.astype(jnp.float32)).reshape(1, out_h, 1, 1)
    wx = (xs - x0.astype(jnp.float32)).reshape(1, 1, out_w, 1)
    xf = x.astype(jnp.float32)
    top = xf[:, y0, :, :] * (1.0 - wy) + xf[:, y1, :, :] * wy
    out = top[:, :, x0, :] * (1.0 - wx) + top[:, :, x1, :] * wx
    return out.astype(x.dtype)


def _pt_pool(t):
    return PT(maxpool2x2(t.data), t.c)


def _pt_up2(t):
    return PT(upsample_nearest_2x(t.data), t.c)


def _pt_resize(t, h, w):
    return PT(resize_bilinear_align_corners(t.data, h, w), t.c)


def _pt_cat(ts):
    c = sum(t.c for t in ts)
    cp = _rup(c)
    data = jnp.concatenate([t.data[..., :t.c] for t in ts], axis=-1)
    if cp > c:
        data = jnp.pad(data, ((0, 0), (0, 0), (0, 0), (0, cp - c)))
    return PT(data, c)


# ---------------------------------------------------------------------------
# Parameters (PyTorch layouts, deterministic)
# ---------------------------------------------------------------------------
class _KeyGen:
    def __init__(self, key):
        self._key = key

    def __call__(self):
        self._key, sub = jax.random.split(self._key)
        return sub


def _make_conv(kg, cin, cout, ksize):
    std = float(np.sqrt(2.0 / (cin * ksize * ksize)))
    return {"w": std * jax.random.normal(kg(), (cout, cin, ksize, ksize), jnp.float32),
            "b": 0.05 * jax.random.normal(kg(), (cout,), jnp.float32)}


def _make_bn(kg, c):
    return {"gamma": 1.0 + 0.1 * jax.random.normal(kg(), (c,), jnp.float32),
            "beta": 0.1 * jax.random.normal(kg(), (c,), jnp.float32),
            "mean": 0.1 * jax.random.normal(kg(), (c,), jnp.float32),
            "var": 1.0 + 0.5 * jax.random.uniform(kg(), (c,), jnp.float32)}


def _make_cbr(kg, cin, cout):          # single conv+BN+ReLU unit
    return {"conv": _make_conv(kg, cin, cout, 3), "bn": _make_bn(kg, cout)}


def _make_block(kg, cin, cout):        # conv_block = two units
    return {"u1": _make_cbr(kg, cin, cout), "u2": _make_cbr(kg, cout, cout)}


def _make_attn(kg, c):
    return {"q": _make_conv(kg, c, c // 8, 1),
            "k": _make_conv(kg, c, c // 8, 1),
            "v": _make_conv(kg, c, c, 1),
            "gamma": 0.5 * jax.random.normal(kg(), (1,), jnp.float32)}


def make_model_params(key):
    kg = _KeyGen(key)
    return {
        "Conv1": _make_block(kg, 3, 64),
        "Conv2": _make_block(kg, 64, 128),
        "Conv3": _make_block(kg, 128, 256),
        "Conv4": _make_block(kg, 256, 512),
        "Conv5": _make_block(kg, 512, 1024),
        "Up5": _make_cbr(kg, 1024, 512),
        "Up_conv5": _make_block(kg, 1024, 512),
        "Up4": _make_cbr(kg, 512, 256),
        "Up_conv4": _make_block(kg, 512, 256),
        "Up3": _make_cbr(kg, 256, 128),
        "Up_conv3": _make_block(kg, 256, 128),
        "Up2": _make_cbr(kg, 128, 64),
        "Up_conv2": _make_block(kg, 128, 64),
        "pred_1": _make_cbr(kg, 64, 32),
        "pred_2": _make_cbr(kg, 64, 32),
        "pred_3": _make_cbr(kg, 64, 32),
        "pred1": _make_conv(kg, 32, 1, 1),
        "pred2": _make_conv(kg, 32, 1, 1),
        "pred3": _make_conv(kg, 32, 1, 1),
        "Atten1": _make_attn(kg, 32),
        "Atten2": _make_attn(kg, 32),
        "Atten3": _make_attn(kg, 32),
        "conv_fusion1": _make_block(kg, 192, 64),
        "conv_fusion2": _make_conv(kg, 64, 1, 1),
        "conv_boundary1": _make_block(kg, 320, 128),
        "conv_boundary2": _make_block(kg, 192, 64),
        "conv_boundary3": _make_block(kg, 64, 32),
        "conv_boundary4": _make_conv(kg, 32, 3, 1),
    }


# ---------------------------------------------------------------------------
# Shared forward graph (same wiring for Pallas and reference paths)
# ---------------------------------------------------------------------------
def _forward(x0, P, ops):
    cbr, conv1 = ops["cbr"], ops["conv1x1"]
    attn, edge = ops["attn"], ops["edge"]
    cat, pool, up2, resize = ops["cat"], ops["pool"], ops["up2"], ops["resize"]

    def block(z, prm):
        return cbr(cbr(z, prm["u1"]), prm["u2"])

    def up(z, prm):
        return cbr(up2(z), prm)

    x1 = block(x0, P["Conv1"])
    x2 = block(pool(x1), P["Conv2"])
    x3 = block(pool(x2), P["Conv3"])
    x4 = block(pool(x3), P["Conv4"])
    x5 = block(pool(x4), P["Conv5"])

    d5 = up(x5, P["Up5"])
    d5 = block(cat([x4, d5]), P["Up_conv5"])
    d4 = up(d5, P["Up4"])
    d4 = block(cat([x3, d4]), P["Up_conv4"])
    edge_fea1 = resize(d4, 64, 64)
    d3 = up(d4, P["Up3"])
    d3 = block(cat([x2, d3]), P["Up_conv3"])
    d2 = up(d3, P["Up2"])
    d2 = block(cat([x1, d2]), P["Up_conv2"])
    edge_fea2 = resize(d2, 64, 64)

    p_1 = cbr(d2, P["pred_1"])
    p_2 = cbr(d2, P["pred_2"])
    p_3 = cbr(d2, P["pred_3"])
    pred1 = conv1(p_1, P["pred1"])
    pred2 = conv1(p_2, P["pred2"])
    pred3 = conv1(p_3, P["pred3"])

    em = cat([edge_fea1, edge_fea2])
    em = block(em, P["conv_boundary1"])
    em = edge(em)
    em = cat([em, edge_fea2])
    em = block(em, P["conv_boundary2"])
    em = block(em, P["conv_boundary3"])
    edge_pred = conv1(em, P["conv_boundary4"])

    att_higher = attn(p_1, P["Atten1"])
    att_lower = attn(p_2, P["Atten2"])
    att_all = attn(p_3, P["Atten3"])
    y = cat([att_higher, att_all, att_lower, em, d2])
    y = block(y, P["conv_fusion1"])
    pred = conv1(y, P["conv_fusion2"])
    return pred1, pred2, pred3, pred, edge_pred


# ----- Pallas layer ops -----
def _p_cbr(t, prm, relu=True):
    bn = prm["bn"]
    return conv3x3(t, prm["conv"]["w"], prm["conv"]["b"],
                   bn=(bn["gamma"], bn["beta"], bn["mean"], bn["var"]), relu=relu)


def _p_edgeconv(t):
    C = t.c
    sobel = jnp.array([[-1., -1., -1.], [-1., 8., -1.], [-1., -1., -1.]], jnp.float32)
    w = jnp.broadcast_to(sobel, (C, C, 3, 3))
    return conv3x3(t, w, b=None, bn=None, relu=False)


_PALLAS_OPS = {
    "cbr": _p_cbr,
    "conv1x1": lambda t, prm: conv1x1(t, prm["w"], prm["b"]),
    "attn": self_attention,
    "edge": _p_edgeconv,
    "cat": _pt_cat,
    "pool": _pt_pool,
    "up2": _pt_up2,
    "resize": _pt_resize,
}


# ----- pure-JAX reference layer ops (f32) -----
def _ref_conv3x3(x, w, b=None, bn=None, relu=True):
    y = lax.conv_general_dilated(x, jnp.transpose(w, (2, 3, 1, 0)),
                                 window_strides=(1, 1), padding="SAME",
                                 dimension_numbers=("NHWC", "HWIO", "NHWC"))
    if b is not None:
        y = y + b
    if bn is not None:
        gamma, beta, mean, var = bn
        s = gamma / jnp.sqrt(var + EPS)
        y = y * s + (beta - mean * s)
    if relu:
        y = jnp.maximum(y, 0.0)
    return y


def _ref_cbr(x, prm, relu=True):
    bn = prm["bn"]
    return _ref_conv3x3(x, prm["conv"]["w"], prm["conv"]["b"],
                        bn=(bn["gamma"], bn["beta"], bn["mean"], bn["var"]), relu=relu)


def _ref_conv1x1(x, prm):
    return jnp.einsum("nhwc,oc->nhwo", x, prm["w"][:, :, 0, 0]) + prm["b"]


def _ref_attn(x, prm):
    N, H, W, C = x.shape
    hw = H * W

    def pw(p):
        return jnp.einsum("nhwc,oc->nhwo", x, p["w"][:, :, 0, 0]) + p["b"]

    q = pw(prm["q"]).reshape(N, hw, -1)
    k = pw(prm["k"]).reshape(N, hw, -1)
    v = pw(prm["v"]).reshape(N, hw, C)
    e = jnp.einsum("nic,njc->nij", q, k)
    a = jax.nn.softmax(e, axis=-1)
    out = jnp.einsum("nij,njc->nic", a, v).reshape(N, H, W, C)
    return prm["gamma"].reshape(()) * out + x


def _ref_edgeconv(x):
    C = x.shape[-1]
    sobel = jnp.array([[-1., -1., -1.], [-1., 8., -1.], [-1., -1., -1.]], jnp.float32)
    w = jnp.broadcast_to(sobel, (C, C, 3, 3))
    return _ref_conv3x3(x, w, b=None, bn=None, relu=False)


_REF_OPS = {
    "cbr": _ref_cbr,
    "conv1x1": _ref_conv1x1,
    "attn": _ref_attn,
    "edge": _ref_edgeconv,
    "cat": lambda ts: jnp.concatenate(ts, axis=-1),
    "pool": maxpool2x2,
    "up2": upsample_nearest_2x,
    "resize": resize_bilinear_align_corners,
}


def pallas_forward(x_nchw, P):
    x = _to_pt(jnp.transpose(x_nchw, (0, 2, 3, 1)))
    outs = _forward(x, P, _PALLAS_OPS)
    return tuple(jnp.transpose(_from_pt(o), (0, 3, 1, 2)) for o in outs)


def reference_forward(x_nchw, P):
    x = jnp.transpose(x_nchw, (0, 2, 3, 1)).astype(jnp.float32)
    outs = _forward(x, P, _REF_OPS)
    return tuple(jnp.transpose(o.astype(jnp.float32), (0, 3, 1, 2)) for o in outs)


# ---------------------------------------------------------------------------
# Self-checks
# ---------------------------------------------------------------------------
def _assert_close(name, got, want, tol):
    rel = float(jnp.linalg.norm(got - want) / (jnp.linalg.norm(want) + 1e-6))
    assert np.isfinite(rel), f"{name}: non-finite output"
    assert rel < tol, f"{name}: relative L2 error {rel:.4f} >= {tol}"


def _unit_checks(key):
    k1, k2, k3, kp = jax.random.split(key, 4)
    kg = _KeyGen(kp)

    # 3x3 conv + BN + ReLU exercising Cout tiling (3 x 128) and row tiling (nt=2)
    x = jax.random.normal(k1, (2, 32, 32, 48), jnp.float32)
    prm = _make_cbr(kg, 48, 320)
    _assert_close("conv3x3_bn_relu", _from_pt(_p_cbr(_to_pt(x), prm)), _ref_cbr(x, prm), 0.02)

    # 256-wide Cout tile path
    prm2 = _make_cbr(kg, 48, 256)
    _assert_close("conv3x3_ct256", _from_pt(_p_cbr(_to_pt(x), prm2)), _ref_cbr(x, prm2), 0.02)

    # EdgeConv-style conv (no bias / BN / ReLU)
    xe = jax.random.normal(k1, (2, 16, 16, 48), jnp.float32)
    _assert_close("edgeconv", _from_pt(_p_edgeconv(_to_pt(xe))), _ref_edgeconv(xe), 0.02)

    # 1x1 conv head
    xh = jax.random.normal(k2, (2, 8, 8, 24), jnp.float32)
    cprm = _make_conv(kg, 24, 10, 1)
    _assert_close("conv1x1", _from_pt(conv1x1(_to_pt(xh), cprm["w"], cprm["b"])),
                  _ref_conv1x1(xh, cprm), 0.02)

    # Self attention (K/V computed once into VMEM scratch)
    xa = jax.random.normal(k3, (2, 64, 64, 32), jnp.float32)
    aprm = _make_attn(kg, 32)
    _assert_close("self_attention", _from_pt(self_attention(_to_pt(xa), aprm)),
                  _ref_attn(xa, aprm), 0.05)


if __name__ == "__main__":
    key = jax.random.PRNGKey(0)
    kx, kp, kt = jax.random.split(key, 3)

    # 64x64 spatial input is implied by the forward (edge_map at 64x64 is
    # concatenated with d2); channel widths are fixed by the module.
    N, C_in, H, W = 2, 3, 64, 64
    x = jax.random.normal(kx, (N, C_in, H, W), jnp.float32)
    P = make_model_params(kp)

    # Tight per-kernel checks against XLA references.
    _unit_checks(kt)

    # Full Mymodel forward with Pallas kernels.
    outs = jax.block_until_ready(jax.jit(pallas_forward)(x, P))
    expected = [(N, 1, H, W)] * 4 + [(N, 3, H, W)]
    for o, shp in zip(outs, expected):
        assert o.shape == shp, (o.shape, shp)
        assert bool(jnp.all(jnp.isfinite(o)))

    # Loose end-to-end check (bf16 activations/weights vs f32 reference).
    refs = jax.block_until_ready(jax.jit(reference_forward)(x, P))
    for name, o, r in zip(["pred1", "pred2", "pred3", "pred", "edge_pred"], outs, refs):
        _assert_close(name, o, r, 0.25)

    print("KERNEL_OK")
</pallas_src>

<mosaic_0001>
module attributes {stable_mosaic.version = 11 : i64} {
  func.func @_conv3x3_kernel(%arg0: i32, %arg1: i32, %arg2: i32, %arg3: memref<1x34x34x128xbf16, #tpu.memory_space<vmem>>, %arg4: memref<1152x128xbf16, #tpu.memory_space<vmem>>, %arg5: memref<1x128xf32, #tpu.memory_space<vmem>>, %arg6: memref<1x128xf32, #tpu.memory_space<vmem>>, %arg7: memref<1x16x32x128xbf16, #tpu.memory_space<vmem>>) attributes {dimension_semantics = [#tpu.dimension_semantics<parallel>, #tpu.dimension_semantics<parallel>, #tpu.dimension_semantics<arbitrary>], iteration_bounds = array<i64: 2, 3, 2>, scalar_prefetch = 0 : i64, scratch_operands = 0 : i64, tpu.core_type = #tpu.core_type<tc>, window_params = [{transform_indices = @transform_0, window_bounds = array<i64: 1, 34, 34, 128>}, {transform_indices = @transform_1, window_bounds = array<i64: 1152, 128>}, {transform_indices = @transform_2, window_bounds = array<i64: 1, 128>}, {transform_indices = @transform_3, window_bounds = array<i64: 1, 128>}, {transform_indices = @transform_4, window_bounds = array<i64: 1, 16, 32, 128>}]} {
    %c16_i32 = arith.constant 16 : i32
    %0 = arith.muli %arg2, %c16_i32 : i32
    %1 = tpu.assume_multiple %0, 16 : i32
    %c0 = arith.constant 0 : index
    %2 = arith.index_cast %1 : i32 to index
    %c0_0 = arith.constant 0 : index
    %c0_1 = arith.constant 0 : index
    %3 = vector.load %arg3[%c0, %2, %c0_0, %c0_1] : memref<1x34x34x128xbf16, #tpu.memory_space<vmem>>, vector<1x18x34x128xbf16>
    %4 = vector.shape_cast %3 : vector<1x18x34x128xbf16> to vector<18x34x128xbf16>
    %5 = vector.extract_strided_slice %4 {offsets = [0, 0, 0], sizes = [18, 32, 128], strides = [1, 1, 1]} : vector<18x34x128xbf16> to vector<18x32x128xbf16>
    %6 = vector.extract_strided_slice %4 {offsets = [0, 1, 0], sizes = [18, 32, 128], strides = [1, 1, 1]} : vector<18x34x128xbf16> to vector<18x32x128xbf16>
    %7 = vector.extract_strided_slice %4 {offsets = [0, 2, 0], sizes = [18, 32, 128], strides = [1, 1, 1]} : vector<18x34x128xbf16> to vector<18x32x128xbf16>
    %8 = vector.extract_strided_slice %5 {offsets = [0, 0, 0], sizes = [16, 32, 128], strides = [1, 1, 1]} : vector<18x32x128xbf16> to vector<16x32x128xbf16>
    %9 = vector.shape_cast %8 : vector<16x32x128xbf16> to vector<512x128xbf16>
    %10 = vector.extract_strided_slice %6 {offsets = [0, 0, 0], sizes = [16, 32, 128], strides = [1, 1, 1]} : vector<18x32x128xbf16> to vector<16x32x128xbf16>
    %11 = vector.shape_cast %10 : vector<16x32x128xbf16> to vector<512x128xbf16>
    %12 = vector.extract_strided_slice %7 {offsets = [0, 0, 0], sizes = [16, 32, 128], strides = [1, 1, 1]} : vector<18x32x128xbf16> to vector<16x32x128xbf16>
    %13 = vector.shape_cast %12 : vector<16x32x128xbf16> to vector<512x128xbf16>
    %14 = vector.extract_strided_slice %5 {offsets = [1, 0, 0], sizes = [16, 32, 128], strides = [1, 1, 1]} : vector<18x32x128xbf16> to vector<16x32x128xbf16>
    %15 = vector.shape_cast %14 : vector<16x32x128xbf16> to vector<512x128xbf16>
    %16 = vector.extract_strided_slice %6 {offsets = [1, 0, 0], sizes = [16, 32, 128], strides = [1, 1, 1]} : vector<18x32x128xbf16> to vector<16x32x128xbf16>
    %17 = vector.shape_cast %16 : vector<16x32x128xbf16> to vector<512x128xbf16>
    %18 = vector.extract_strided_slice %7 {offsets = [1, 0, 0], sizes = [16, 32, 128], strides = [1, 1, 1]} : vector<18x32x128xbf16> to vector<16x32x128xbf16>
    %19 = vector.shape_cast %18 : vector<16x32x128xbf16> to vector<512x128xbf16>
    %20 = vector.extract_strided_slice %5 {offsets = [2, 0, 0], sizes = [16, 32, 128], strides = [1, 1, 1]} : vector<18x32x128xbf16> to vector<16x32x128xbf16>
    %21 = vector.shape_cast %20 : vector<16x32x128xbf16> to vector<512x128xbf16>
    %22 = vector.extract_strided_slice %6 {offsets = [2, 0, 0], sizes = [16, 32, 128], strides = [1, 1, 1]} : vector<18x32x128xbf16> to vector<16x32x128xbf16>
    %23 = vector.shape_cast %22 : vector<16x32x128xbf16> to vector<512x128xbf16>
    %24 = vector.extract_strided_slice %7 {offsets = [2, 0, 0], sizes = [16, 32, 128], strides = [1, 1, 1]} : vector<18x32x128xbf16> to vector<16x32x128xbf16>
    %25 = vector.shape_cast %24 : vector<16x32x128xbf16> to vector<512x128xbf16>
    %26 = tpu.concatenate %9, %11, %13, %15, %17, %19, %21, %23, %25 in 1 : vector<512x128xbf16>, vector<512x128xbf16>, vector<512x128xbf16>, vector<512x128xbf16>, vector<512x128xbf16>, vector<512x128xbf16>, vector<512x128xbf16>, vector<512x128xbf16>, vector<512x128xbf16> -> vector<512x1152xbf16>
    %c0_2 = arith.constant 0 : index
    %c0_3 = arith.constant 0 : index
    %27 = vector.load %arg4[%c0_2, %c0_3] : memref<1152x128xbf16, #tpu.memory_space<vmem>>, vector<1152x128xbf16>
    %cst = arith.constant dense<0.000000e+00> : vector<512x128xf32>
    %28 = tpu.matmul %26, %27, %cst {dimension_numbers = #tpu.dot_dimension_numbers<[1], [0], [0], [1], [0, 0, 1, 1], [], []>} : vector<512x1152xbf16>, vector<1152x128xbf16>, vector<512x128xf32> -> vector<512x128xf32>
    %c0_4 = arith.constant 0 : index
    %c0_5 = arith.constant 0 : index
    %29 = vector.load %arg5[%c0_4, %c0_5] : memref<1x128xf32, #tpu.memory_space<vmem>>, vector<1x128xf32>
    %30 = vector.broadcast %29 : vector<1x128xf32> to vector<512x128xf32>
    %31 = arith.mulf %28, %30 : vector<512x128xf32>
    %c0_6 = arith.constant 0 : index
    %c0_7 = arith.constant 0 : index
    %32 = vector.load %arg6[%c0_6, %c0_7] : memref<1x128xf32, #tpu.memory_space<vmem>>, vector<1x128xf32>
    %33 = vector.broadcast %32 : vector<1x128xf32> to vector<512x128xf32>
    %34 = arith.addf %31, %33 : vector<512x128xf32>
    %cst_8 = arith.constant 0.000000e+00 : f32
    %35 = vector.broadcast %cst_8 : f32 to vector<512x128xf32>
    %36 = arith.maximumf %34, %35 : vector<512x128xf32>
    %37 = vector.shape_cast %36 : vector<512x128xf32> to vector<16x32x128xf32>
    %38 = arith.truncf %37 : vector<16x32x128xf32> to vector<16x32x128xbf16>
    %c0_9 = arith.constant 0 : index
    %c0_10 = arith.constant 0 : index
    %c0_11 = arith.constant 0 : index
    %c0_12 = arith.constant 0 : index
    %39 = vector.load %arg7[%c0_9, %c0_10, %c0_11, %c0_12] : memref<1x16x32x128xbf16, #tpu.memory_space<vmem>>, vector<1x16x32x128xbf16>
    %40 = vector.shape_cast %39 : vector<1x16x32x128xbf16> to vector<16x32x128xbf16>
    %41 = vector.shape_cast %38 : vector<16x32x128xbf16> to vector<1x16x32x128xbf16>
    tpu.vector_store %arg7[%c0_9, %c0_10, %c0_11, %c0_12], %41 {strides = array<i32>} : memref<1x16x32x128xbf16, #tpu.memory_space<vmem>>, vector<1x16x32x128xbf16>,
    return
  }
  func.func @transform_0(%arg0: i32, %arg1: i32, %arg2: i32) -> (i32, i32, i32, i32) {
    %c0_i32 = arith.constant 0 : i32
    %c0_i32_0 = arith.constant 0 : i32
    %c0_i32_1 = arith.constant 0 : i32
    %c0_i32_2 = arith.constant 0 : i32
    return %arg0, %c0_i32, %c0_i32_0, %c0_i32_1 : i32, i32, i32, i32
  }
  func.func @transform_1(%arg0: i32, %arg1: i32, %arg2: i32) -> (i32, i32) {
    %c0_i32 = arith.constant 0 : i32
    %c0_i32_0 = arith.constant 0 : i32
    return %c0_i32, %arg1 : i32, i32
  }
  func.func @transform_2(%arg0: i32, %arg1: i32, %arg2: i32) -> (i32, i32) {
    %c0_i32 = arith.constant 0 : i32
    %c0_i32_0 = arith.constant 0 : i32
    return %c0_i32, %arg1 : i32, i32
  }
  func.func @transform_3(%arg0: i32, %arg1: i32, %arg2: i32) -> (i32, i32) {
    %c0_i32 = arith.constant 0 : i32
    %c0_i32_0 = arith.constant 0 : i32
    return %c0_i32, %arg1 : i32, i32
  }
  func.func @transform_4(%arg0: i32, %arg1: i32, %arg2: i32) -> (i32, i32, i32, i32) {
    %c0_i32 = arith.constant 0 : i32
    %c0_i32_0 = arith.constant 0 : i32
    return %arg0, %arg2, %c0_i32, %arg1 : i32, i32, i32, i32
  }
}

</mosaic_0001>

<llo_original>
// kernel: tpu_custom_call.1
$region0: #{tpu_custom_call.1}
  #allocation0 [shape = 'u32[]', space=smem, size = 0x4, offset = 0x4, fixed_abs, tag = 'smem constant byte address 0x4 - core index']
  #allocation1 [shape = 'u32[72,128]{1,0:T(1,128)}', space=vmem, size = 0x9000, scoped, tag = 'internal scratch']
  %s0 = inlined_call_operand.vmem [shape: bf16[2,34,34,128], index: 0, kind: input, shape index: {}]
  %s1 = inlined_call_operand.hbm [shape: bf16[1152,384], index: 1, kind: input, shape index: {}]
  %s2 = inlined_call_operand.hbm [shape: f32[1,384], index: 2, kind: input, shape index: {}]
  %s3 = inlined_call_operand.hbm [shape: f32[1,384], index: 3, kind: input, shape index: {}]
  %s4 = inlined_call_operand.hbm [shape: bf16[2,32,32,384], index: 4, kind: output, shape index: {}]
  %s5 = sld [smem:[#allocation0]]
  $region61: #{tpu_custom_call.1} parent=0
    _
  %s7 = ssub.s32 1, %s5
  %s8 = scalar_select 0, %s7, %s5
  $region1: #{tpu_custom_call.1} parent=0
    #allocation2 [shape = 'u8[589824]{0}', space=vmem, size = 0x90000, scoped, tag = 'input window, operand 1']
    #allocation3 [shape = 's32[2]{0}', space=sflag, size = 0x8, scoped, tag = 'scoped memory for tpu_custom_call.1']
    #allocation4 [shape = 's32[2]{0}', space=sflag, size = 0x8, scoped, tag = 'scoped memory for tpu_custom_call.1']
    #allocation5 [shape = 'u8[1024]{0}', space=vmem, size = 0x400, scoped, tag = 'input window, operand 2']
    #allocation6 [shape = 's32[2]{0}', space=sflag, size = 0x8, scoped, tag = 'scoped memory for tpu_custom_call.1']
    #allocation7 [shape = 'u8[1024]{0}', space=vmem, size = 0x400, scoped, tag = 'input window, operand 3']
    #allocation8 [shape = 'u8[262144]{0}', space=vmem, size = 0x40000, scoped, tag = 'output window, operand 0']
    %9 = vsyncpa [#allocation3], 0
    %s10 = scalar_lea.sflag [#allocation3], 1
    %11 = vsyncpa %s10, 0
    %12 = vsyncpa [#allocation6], 0
    %s13 = scalar_lea.sflag [#allocation6], 1
    %14 = vsyncpa %s13, 0
    %15 = vsyncpa [#allocation4], 0
    %s16 = scalar_lea.sflag [#allocation4], 1
    %17 = vsyncpa %s16, 0
    loop: start=0, step=1, limit=14
    $region2: #{tpu_custom_call.1} parent=1 // loop_pre_header
      _
    $region3: #{tpu_custom_call.1} parent=1 // loop_header
      %s19 = sphi 0, %s23
      %p20 = scmp.ge.s32.totalorder %s19, 14
      %s26 = sphi 0, %s45
      %s27 = sphi 0, %s41
      %s28 = sphi 0, %s37
      %s29 = sphi 0, %s26
      %s30 = sphi 0, %s27
      %s31 = sphi 0, %s28
      %s32 = sphi 0, %s29
      %s33 = sphi 0, %s30
      %s34 = sphi 0, %s31
      %s48 = sphi 0, %s50
      %s51 = sphi 0, %s48
      %s52 = sphi 0, %s51
      %s68 = sphi 0, %s52
      %s74 = sphi 0, %s76
      %s77 = sphi 0, %s74
      %s78 = sphi 0, %s77
      %s94 = sphi 0, %s78
      %s100 = sphi 0, %s102
      %s103 = sphi 0, %s100
      %s104 = sphi 0, %s103
      %s120 = sphi 0, %s104
      %s126 = sphi 0, %s128
      %s129 = sphi 0, %s126
      %s130 = sphi 0, %s129
      %s146 = sphi 0, %s130
      %s156 = sphi 0, %s158
      %s159 = sphi 0, %s156
      %s160 = sphi 0, %s159
      %s176 = sphi 0, %s160
    $region4: #{tpu_custom_call.1} parent=1 // loop_header_branch
      %22 = sbr.rel (%p20) target = $region8
    $region5: #{tpu_custom_call.1} parent=1 // loop_body
      %s24 = ssub.s32 %s19, 1
      %s25 = ssub.s32 %s19, 2
      %s35 = sadd.s32 1, %s28
      %p36 = scmp.ge.s32.totalorder %s35, 2
      %s37 = scalar_select %p36, 0, %s35
      %s38 = sadd.s32 1, %s27
      %s39 = scalar_select %p36, %s38, %s27
      %p40 = scmp.ge.s32.totalorder %s39, 3
      %s41 = scalar_select %p40, 0, %s39
      %s42 = sadd.s32 1, %s26
      %s43 = scalar_select %p40, %s42, %s26
      %p44 = scmp.ge.s32.totalorder %s43, 2
      %s45 = scalar_select %p44, 0, %s43
      %s46 = ssub.s32 %s26, %s45
      %p47 = scmp.eq.s32.totalorder %s46, 0
      %s49 = sadd.s32 %s48, 1
      %s50 = scalar_select %p47, %s48, %s49
      %p53 = pneg %p47
      %p54 = scmp.eq.s32.totalorder %s19, 11
      %p55 = por %p53, %p54
      %p56 = scmp.ne.s32.totalorder %s48, %s51
      %p57 = scmp.eq.s32.totalorder %s19, 0
      %p58 = por %p56, %p57
      %p59 = scmp.ne.s32.totalorder %s48, %s51
      %p60 = scmp.eq.s32.totalorder %s24, 11
      %p61 = por %p59, %p60
      %p62 = scmp.ne.s32.totalorder %s51, %s52
      %p63 = scmp.eq.s32.totalorder %s24, 0
      %p64 = por %p62, %p63
      %p65 = scmp.ne.s32.totalorder %s51, %s52
      %p66 = scmp.eq.s32.totalorder %s25, 11
      %p67 = por %p65, %p66
      %p69 = scmp.ne.s32.totalorder %s52, %s68
      %p70 = scmp.eq.s32.totalorder %s25, 0
      %p71 = por %p69, %p70
      %s72 = ssub.s32 %s27, %s41
      %p73 = scmp.eq.s32.totalorder %s72, 0
      %s75 = sadd.s32 %s74, 1
      %s76 = scalar_select %p73, %s74, %s75
      %p79 = pneg %p73
      %p80 = scmp.eq.s32.totalorder %s19, 11
      %p81 = por %p79, %p80
      %p82 = scmp.ne.s32.totalorder %s74, %s77
      %p83 = scmp.eq.s32.totalorder %s19, 0
      %p84 = por %p82, %p83
      %p85 = scmp.ne.s32.totalorder %s74, %s77
      %p86 = scmp.eq.s32.totalorder %s24, 11
      %p87 = por %p85, %p86
      %p88 = scmp.ne.s32.totalorder %s77, %s78
      %p89 = scmp.eq.s32.totalorder %s24, 0
      %p90 = por %p88, %p89
      %p91 = scmp.ne.s32.totalorder %s77, %s78
      %p92 = scmp.eq.s32.totalorder %s25, 11
      %p93 = por %p91, %p92
      %p95 = scmp.ne.s32.totalorder %s78, %s94
      %p96 = scmp.eq.s32.totalorder %s25, 0
      %p97 = por %p95, %p96
      %s98 = ssub.s32 %s27, %s41
      %p99 = scmp.eq.s32.totalorder %s98, 0
      %s101 = sadd.s32 %s100, 1
      %s102 = scalar_select %p99, %s100, %s101
      %p105 = pneg %p99
      %p106 = scmp.eq.s32.totalorder %s19, 11
      %p107 = por %p105, %p106
      %p108 = scmp.ne.s32.totalorder %s100, %s103
      %p109 = scmp.eq.s32.totalorder %s19, 0
      %p110 = por %p108, %p109
      %p111 = scmp.ne.s32.totalorder %s100, %s103
      %p112 = scmp.eq.s32.totalorder %s24, 11
      %p113 = por %p111, %p112
      %p114 = scmp.ne.s32.totalorder %s103, %s104
      %p115 = scmp.eq.s32.totalorder %s24, 0
      %p116 = por %p114, %p115
      %p117 = scmp.ne.s32.totalorder %s103, %s104
      %p118 = scmp.eq.s32.totalorder %s25, 11
      %p119 = por %p117, %p118
      %p121 = scmp.ne.s32.totalorder %s104, %s120
      %p122 = scmp.eq.s32.totalorder %s25, 0
      %p123 = por %p121, %p122
      %s124 = ssub.s32 %s27, %s41
      %p125 = scmp.eq.s32.totalorder %s124, 0
      %s127 = sadd.s32 %s126, 1
      %s128 = scalar_select %p125, %s126, %s127
      %p131 = pneg %p125
      %p132 = scmp.eq.s32.totalorder %s19, 11
      %p133 = por %p131, %p132
      %p134 = scmp.ne.s32.totalorder %s126, %s129
      %p135 = scmp.eq.s32.totalorder %s19, 0
      %p136 = por %p134, %p135
      %p137 = scmp.ne.s32.totalorder %s126, %s129
      %p138 = scmp.eq.s32.totalorder %s24, 11
      %p139 = por %p137, %p138
      %p140 = scmp.ne.s32.totalorder %s129, %s130
      %p141 = scmp.eq.s32.totalorder %s24, 0
      %p142 = por %p140, %p141
      %p143 = scmp.ne.s32.totalorder %s129, %s130
      %p144 = scmp.eq.s32.totalorder %s25, 11
      %p145 = por %p143, %p144
      %p147 = scmp.ne.s32.totalorder %s130, %s146
      %p148 = scmp.eq.s32.totalorder %s25, 0
      %p149 = por %p147, %p148
      %s150 = ssub.s32 %s26, %s45
      %s151 = ssub.s32 %s28, %s37
      %s152 = sor.u32 %s150, %s151
      %s153 = ssub.s32 %s27, %s41
      %s154 = sor.u32 %s152, %s153
      %p155 = scmp.eq.s32.totalorder %s154, 0
      %s157 = sadd.s32 %s156, 1
      %s158 = scalar_select %p155, %s156, %s157
      %p161 = pneg %p155
      %p162 = scmp.eq.s32.totalorder %s19, 11
      %p163 = por %p161, %p162
      %p164 = scmp.ne.s32.totalorder %s156, %s159
      %p165 = scmp.eq.s32.totalorder %s19, 0
      %p166 = por %p164, %p165
      %p167 = scmp.ne.s32.totalorder %s156, %s159
      %p168 = scmp.eq.s32.totalorder %s24, 11
      %p169 = por %p167, %p168
      %p170 = scmp.ne.s32.totalorder %s159, %s160
      %p171 = scmp.eq.s32.totalorder %s24, 0
      %p172 = por %p170, %p171
      %p173 = scmp.ne.s32.totalorder %s159, %s160
      %p174 = scmp.eq.s32.totalorder %s25, 11
      %p175 = por %p173, %p174
      %p177 = scmp.ne.s32.totalorder %s160, %s176
      %p178 = scmp.eq.s32.totalorder %s25, 0
      %p179 = por %p177, %p178
      %p180 = scmp.le.s32.totalorder 1, %s19
      %p181 = scmp.lt.s32.totalorder %s19, 13
      %p182 = pnand %p180, %p181
      %p183 = pneg %p182
      // Predicated region
      $region9: #{tpu_custom_call.1} parent=5 // pred_check
        _
      $region10: #{tpu_custom_call.1} parent=5 // pred_check_branch
        %185 = sbr.rel (%p182) target = $region12
      $region11: #{tpu_custom_call.1} parent=5 // pred_region
        %s186 = ssub.s32 %s19, 1
      $region12: #{tpu_custom_call.1} parent=5 // pred_fallthru
        _
      %p187 = scmp.lt.s32.totalorder %s19, 12
      // Predicated region
      $region13: #{tpu_custom_call.1} parent=5 // pred_check
        %p188 = pneg %p187
      $region14: #{tpu_custom_call.1} parent=5 // pred_check_branch
        %190 = sbr.rel (%p188) target = $region16
      $region15: #{tpu_custom_call.1} parent=5 // pred_region
        // Predicated region
        $region17: #{tpu_custom_call.1} parent=15 // pred_check
          %p191 = pneg %p58
        $region18: #{tpu_custom_call.1} parent=15 // pred_check_branch
          %193 = sbr.rel (%p191) target = $region20
        $region19: #{tpu_custom_call.1} parent=15 // pred_region
          %p194 = scmp.lt.s32.totalorder %s26, 1
          %s195 = scalar_select %p194, %s26, 1
          %s196 = smul.addr %s195, 170
          %s197 = smul.addr %s196, 4
          %s198 = scalar_lea.vmem %s0, %s197
        $region20: #{tpu_custom_call.1} parent=15 // pred_fallthru
          _
        // Predicated region
        $region21: #{tpu_custom_call.1} parent=15 // pred_check
          %p199 = pneg %p84
        $region22: #{tpu_custom_call.1} parent=15 // pred_check_branch
          %201 = sbr.rel (%p199) target = $region24
        $region23: #{tpu_custom_call.1} parent=15 // pred_region
          %s202 = sand.u32 %s74, 1
          %s203 = scalar_lea.sflag [#allocation3], %s202
          %s204 = sand.u32 %s74, 1
          %s205 = smul.addr %s204, 576
          %s206 = scalar_lea.vmem [#allocation2], %s205
          %208 = vsyncadd %s203, 0
          %s209 = smul.addr %s27, 4
          %s210 = scalar_lea.hbm %s1, %s209
          %s211 = sshll.u32 %s210, 4
          %s212 = int_to_ptr.hbm [resolvable:$true] %s211
          %s213 = sshll.u32 %s206, 4
          %s214 = int_to_ptr.vmem [resolvable:$true] %s213
          %219 = dma.hbm_to_vmem [thread:$0]  %s212, 9216, %s214, %s203, 192, 64, 4
        $region24: #{tpu_custom_call.1} parent=15 // pred_fallthru
          _
        // Predicated region
        $region25: #{tpu_custom_call.1} parent=15 // pred_check
          %p220 = pneg %p110
        $region26: #{tpu_custom_call.1} parent=15 // pred_check_branch
          %222 = sbr.rel (%p220) target = $region28
        $region27: #{tpu_custom_call.1} parent=15 // pred_region
          %s223 = sand.u32 %s19, 1
          %s224 = scalar_lea.sflag [#allocation6], %s223
          %s225 = sand.u32 %s100, 1
          %s226 = scalar_lea.vmem [#allocation5], %s225
          %228 = vsyncadd %s224, 0
          %s229 = scalar_lea.hbm %s2, %s27
          %s231 = sshll.u32 %s229, 4
          %s232 = int_to_ptr.hbm [resolvable:$true] %s231
          %s233 = sshll.u32 %s226, 4
          %s234 = int_to_ptr.vmem [resolvable:$true] %s233
          %236 = dma.hbm_to_vmem [thread:$0]  %s232, 16, %s234, %s224
        $region28: #{tpu_custom_call.1} parent=15 // pred_fallthru
          _
        // Predicated region
        $region29: #{tpu_custom_call.1} parent=15 // pred_check
          %p237 = pneg %p136
        $region30: #{tpu_custom_call.1} parent=15 // pred_check_branch
          %239 = sbr.rel (%p237) target = $region32
        $region31: #{tpu_custom_call.1} parent=15 // pred_region
          %s240 = sand.u32 %s19, 1
          %s241 = scalar_lea.sflag [#allocation6], %s240
          %s242 = sand.u32 %s126, 1
          %s243 = scalar_lea.vmem [#allocation7], %s242
          %245 = vsyncadd %s241, 0
          %s246 = scalar_lea.hbm %s3, %s27
          %s248 = sshll.u32 %s246, 4
          %s249 = int_to_ptr.hbm [resolvable:$true] %s248
          %s250 = sshll.u32 %s243, 4
          %s251 = int_to_ptr.vmem [resolvable:$true] %s250
          %253 = dma.hbm_to_vmem [thread:$0]  %s249, 16, %s251, %s241
        $region32: #{tpu_custom_call.1} parent=15 // pred_fallthru
          _
      $region16: #{tpu_custom_call.1} parent=5 // pred_fallthru
        _
      %p254 = scmp.le.s32.totalorder 1, %s19
      %p255 = scmp.lt.s32.totalorder %s19, 13
      %p256 = pnand %p254, %p255
      %p257 = pneg %p256
      // Predicated region
      $region33: #{tpu_custom_call.1} parent=5 // pred_check
        _
      $region34: #{tpu_custom_call.1} parent=5 // pred_check_branch
        %259 = sbr.rel (%p256) target = $region36
      $region35: #{tpu_custom_call.1} parent=5 // pred_region
        %s260 = ssub.s32 %s19, 1
        %s261 = sand.u32 %s77, 1
        %s262 = scalar_lea.sflag [#allocation3], %s261
        %s263 = sand.u32 %s77, 1
        %s264 = smul.addr %s263, 576
        %s265 = scalar_lea.vmem [#allocation2], %s264
        // Predicated region
        $region37: #{tpu_custom_call.1} parent=35 // pred_check
          %p266 = pneg %p90
        $region38: #{tpu_custom_call.1} parent=35 // pred_check_branch
          %268 = sbr.rel (%p266) target = $region40
        $region39: #{tpu_custom_call.1} parent=35 // pred_region
          %270 = dma.done %s262, 9216
        $region40: #{tpu_custom_call.1} parent=35 // pred_fallthru
          _
        %s271 = sand.u32 %s24, 1
        %s272 = scalar_lea.sflag [#allocation6], %s271
        %s273 = sand.u32 %s103, 1
        %s274 = scalar_lea.vmem [#allocation5], %s273
        // Predicated region
        $region41: #{tpu_custom_call.1} parent=35 // pred_check
          %p275 = pneg %p116
        $region42: #{tpu_custom_call.1} parent=35 // pred_check_branch
          %277 = sbr.rel (%p275) target = $region44
        $region43: #{tpu_custom_call.1} parent=35 // pred_region
          %279 = dma.done %s272, 16
        $region44: #{tpu_custom_call.1} parent=35 // pred_fallthru
          _
        %s280 = sand.u32 %s24, 1
        %s281 = scalar_lea.sflag [#allocation6], %s280
        %s282 = sand.u32 %s129, 1
        %s283 = scalar_lea.vmem [#allocation7], %s282
        // Predicated region
        $region45: #{tpu_custom_call.1} parent=35 // pred_check
          %p284 = pneg %p142
        $region46: #{tpu_custom_call.1} parent=35 // pred_check_branch
          %286 = sbr.rel (%p284) target = $region48
        $region47: #{tpu_custom_call.1} parent=35 // pred_region
          %288 = dma.done %s281, 16
        $region48: #{tpu_custom_call.1} parent=35 // pred_fallthru
          _
        %p289 = scmp.lt.s32.totalorder %s29, 1
        %s290 = scalar_select %p289, %s29, 1
        %s291 = smul.addr %s290, 170
        %s292 = smul.addr %s291, 4
        %s293 = scalar_lea.vmem %s0, %s292
        %p294 = pneg %p64
        %p295 = pneg %p61
        %s296 = sand.u32 %s77, 1
        %s297 = scalar_lea.sflag [#allocation3], %s296
        %s298 = sand.u32 %s77, 1
        %s299 = smul.addr %s298, 576
        %s300 = scalar_lea.vmem [#allocation2], %s299
        %p301 = pneg %p90
        %p302 = pneg %p87
        %s303 = sand.u32 %s24, 1
        %s304 = scalar_lea.sflag [#allocation6], %s303
        %s305 = sand.u32 %s103, 1
        %s306 = scalar_lea.vmem [#allocation5], %s305
        %p307 = pneg %p116
        %p308 = pneg %p113
        %s309 = sand.u32 %s24, 1
        %s310 = scalar_lea.sflag [#allocation6], %s309
        %s311 = sand.u32 %s129, 1
        %s312 = scalar_lea.vmem [#allocation7], %s311
        %p313 = pneg %p142
        %p314 = pneg %p139
        %p315 = pneg %p172
        %p316 = pneg %p169
        %s317 = sand.u32 %s159, 1
        %s318 = scalar_lea.sflag [#allocation4], %s317
        %s319 = sand.u32 %s159, 1
        %s320 = smul.addr %s319, 256
        %s321 = scalar_lea.vmem [#allocation8], %s320
        %p322 = scmp.lt.s32.totalorder %s29, 1
        %s323 = scalar_select %p322, %s29, 1
        %s324 = smul.addr %s323, 170
        %s325 = smul.addr %s324, 4
        %s326 = scalar_lea.vmem %s0, %s325
        %s327 = smul.u32 16, %s31
        %s328 = smul.u32 %s31, 16
        %s329 = smul.u32 %s328, 5
        %s330 = smul.addr %s329, 4
        %s331 = scalar_lea.vmem %s326, %s330
        %v332 = vld [vmem:[%s331] sm:$0xf]
        %v333 = vld [vmem:[%s331 + $0x4] sm:$0xf]
        %v334 = vld [vmem:[%s331 + $0x8] sm:$0xf]
        %v335 = vld [vmem:[%s331 + $0xc] sm:$0xf]
        %v336 = vld [vmem:[%s331 + $0x10] sm:$0x1]
        %v337 = vld [vmem:[%s331 + $0x14] sm:$0xf]
        %v338 = vld [vmem:[%s331 + $0x18] sm:$0xf]
        %v339 = vld [vmem:[%s331 + $0x1c] sm:$0xf]
        %v340 = vld [vmem:[%s331 + $0x20] sm:$0xf]
        %v341 = vld [vmem:[%s331 + $0x24] sm:$0x1]
        %v342 = vld [vmem:[%s331 + $0x28] sm:$0xf]
        %v343 = vld [vmem:[%s331 + $0x2c] sm:$0xf]
        %v344 = vld [vmem:[%s331 + $0x30] sm:$0xf]
        %v345 = vld [vmem:[%s331 + $0x34] sm:$0xf]
        %v346 = vld [vmem:[%s331 + $0x38] sm:$0x1]
        %v347 = vld [vmem:[%s331 + $0x3c] sm:$0xf]
        %v348 = vld [vmem:[%s331 + $0x40] sm:$0xf]
        %v349 = vld [vmem:[%s331 + $0x44] sm:$0xf]
        %v350 = vld [vmem:[%s331 + $0x48] sm:$0xf]
        %v351 = vld [vmem:[%s331 + $0x4c] sm:$0x1]
        %v352 = vld [vmem:[%s331 + $0x50] sm:$0xf]
        %v353 = vld [vmem:[%s331 + $0x54] sm:$0xf]
        %v354 = vld [vmem:[%s331 + $0x58] sm:$0xf]
        %v355 = vld [vmem:[%s331 + $0x5c] sm:$0xf]
        %v356 = vld [vmem:[%s331 + $0x60] sm:$0x1]
        %v357 = vld [vmem:[%s331 + $0x64] sm:$0xf]
        %v358 = vld [vmem:[%s331 + $0x68] sm:$0xf]
        %v359 = vld [vmem:[%s331 + $0x6c] sm:$0xf]
        %v360 = vld [vmem:[%s331 + $0x70] sm:$0xf]
        %v361 = vld [vmem:[%s331 + $0x74] sm:$0x1]
        %v362 = vld [vmem:[%s331 + $0x78] sm:$0xf]
        %v363 = vld [vmem:[%s331 + $0x7c] sm:$0xf]
        %v364 = vld [vmem:[%s331 + $0x80] sm:$0xf]
        %v365 = vld [vmem:[%s331 + $0x84] sm:$0xf]
        %v366 = vld [vmem:[%s331 + $0x88] sm:$0x1]
        %v367 = vld [vmem:[%s331 + $0x8c] sm:$0xf]
        %v368 = vld [vmem:[%s331 + $0x90] sm:$0xf]
        %v369 = vld [vmem:[%s331 + $0x94] sm:$0xf]
        %v370 = vld [vmem:[%s331 + $0x98] sm:$0xf]
        %v371 = vld [vmem:[%s331 + $0x9c] sm:$0x1]
        %v372 = vld [vmem:[%s331 + $0xa0] sm:$0xf]
        %v373 = vld [vmem:[%s331 + $0xa4] sm:$0xf]
        %v374 = vld [vmem:[%s331 + $0xa8] sm:$0xf]
        %v375 = vld [vmem:[%s331 + $0xac] sm:$0xf]
        %v376 = vld [vmem:[%s331 + $0xb0] sm:$0x1]
        %v377 = vld [vmem:[%s331 + $0xb4] sm:$0xf]
        %v378 = vld [vmem:[%s331 + $0xb8] sm:$0xf]
        %v379 = vld [vmem:[%s331 + $0xbc] sm:$0xf]
        %v380 = vld [vmem:[%s331 + $0xc0] sm:$0xf]
        %v381 = vld [vmem:[%s331 + $0xc4] sm:$0x1]
        %v382 = vld [vmem:[%s331 + $0xc8] sm:$0xf]
        %v383 = vld [vmem:[%s331 + $0xcc] sm:$0xf]
        %v384 = vld [vmem:[%s331 + $0xd0] sm:$0xf]
        %v385 = vld [vmem:[%s331 + $0xd4] sm:$0xf]
        %v386 = vld [vmem:[%s331 + $0xd8] sm:$0x1]
        %v387 = vld [vmem:[%s331 + $0xdc] sm:$0xf]
        %v388 = vld [vmem:[%s331 + $0xe0] sm:$0xf]
        %v389 = vld [vmem:[%s331 + $0xe4] sm:$0xf]
        %v390 = vld [vmem:[%s331 + $0xe8] sm:$0xf]
        %v391 = vld [vmem:[%s331 + $0xec] sm:$0x1]
        %v392 = vld [vmem:[%s331 + $0xf0] sm:$0xf]
        %v393 = vld [vmem:[%s331 + $0xf4] sm:$0xf]
        %v394 = vld [vmem:[%s331 + $0xf8] sm:$0xf]
        %v395 = vld [vmem:[%s331 + $0xfc] sm:$0xf]
        %v396 = vld [vmem:[%s331 + $0x100] sm:$0x1]
        %v397 = vld [vmem:[%s331 + $0x104] sm:$0xf]
        %v398 = vld [vmem:[%s331 + $0x108] sm:$0xf]
        %v399 = vld [vmem:[%s331 + $0x10c] sm:$0xf]
        %v400 = vld [vmem:[%s331 + $0x110] sm:$0xf]
        %v401 = vld [vmem:[%s331 + $0x114] sm:$0x1]
        %v402 = vld [vmem:[%s331 + $0x118] sm:$0xf]
        %v403 = vld [vmem:[%s331 + $0x11c] sm:$0xf]
        %v404 = vld [vmem:[%s331 + $0x120] sm:$0xf]
        %v405 = vld [vmem:[%s331 + $0x124] sm:$0xf]
        %v406 = vld [vmem:[%s331 + $0x128] sm:$0x1]
        %v407 = vld [vmem:[%s331 + $0x12c] sm:$0xf]
        %v408 = vld [vmem:[%s331 + $0x130] sm:$0xf]
        %v409 = vld [vmem:[%s331 + $0x134] sm:$0xf]
        %v410 = vld [vmem:[%s331 + $0x138] sm:$0xf]
        %v411 = vld [vmem:[%s331 + $0x13c] sm:$0x1]
        %v412 = vld [vmem:[%s331 + $0x140] sm:$0xf]
        %v413 = vld [vmem:[%s331 + $0x144] sm:$0xf]
        %v414 = vld [vmem:[%s331 + $0x148] sm:$0xf]
        %v415 = vld [vmem:[%s331 + $0x14c] sm:$0xf]
        %v416 = vld [vmem:[%s331 + $0x150] sm:$0x1]
        %v417 = vld [vmem:[%s331 + $0x154] sm:$0xf]
        %v418 = vld [vmem:[%s331 + $0x158] sm:$0xf]
        %v419 = vld [vmem:[%s331 + $0x15c] sm:$0xf]
        %v420 = vld [vmem:[%s331 + $0x160] sm:$0xf]
        %v421 = vld [vmem:[%s331 + $0x164] sm:$0x1]
        %vm422 = vsmask.f32 3328
        %vm423 = vsmask.f32 7440
        %vm424 = vmor %vm422, %vm423
        %v426 = vshrl.u32 %v332, 16
        %v428 = vrot.slane %v426, 4
        %v429 = vshll.u32 %v332, 16
        %v431 = vrot.slane %v429, 5
        %v432 = vor.u32 %v428, %v431
        %v433 = vrot.slane %v432, 4
        %v435 = vshll.u32 %v333, 16
        %v437 = vrot.slane %v435, 5
        %v438 = vsel %vm424, %v433, %v437
        %v439 = vshrl.u32 %v333, 16
        %v441 = vrot.slane %v439, 4
        %v442 = vor.u32 %v441, %v437
        %v443 = vrot.slane %v442, 4
        %v445 = vshll.u32 %v334, 16
        %v447 = vrot.slane %v445, 5
        %v448 = vsel %vm424, %v443, %v447
        %v449 = vshrl.u32 %v334, 16
        %v451 = vrot.slane %v449, 4
        %v452 = vor.u32 %v451, %v447
        %v453 = vrot.slane %v452, 4
        %v455 = vshll.u32 %v335, 16
        %v457 = vrot.slane %v455, 5
        %v458 = vsel %vm424, %v453, %v457
        %v459 = vshrl.u32 %v335, 16
        %v461 = vrot.slane %v459, 4
        %v462 = vor.u32 %v461, %v457
        %v463 = vrot.slane %v462, 4
        %v465 = vshll.u32 %v336, 16
        %v467 = vrot.slane %v465, 5
        %v468 = vsel %vm424, %v463, %v467
        %v470 = vshrl.u32 %v337, 16
        %v472 = vrot.slane %v470, 4
        %v473 = vshll.u32 %v337, 16
        %v475 = vrot.slane %v473, 5
        %v476 = vor.u32 %v472, %v475
        %v477 = vrot.slane %v476, 4
        %v479 = vshll.u32 %v338, 16
        %v481 = vrot.slane %v479, 5
        %v482 = vsel %vm424, %v477, %v481
        %v483 = vshrl.u32 %v338, 16
        %v485 = vrot.slane %v483, 4
        %v486 = vor.u32 %v485, %v481
        %v487 = vrot.slane %v486, 4
        %v489 = vshll.u32 %v339, 16
        %v491 = vrot.slane %v489, 5
        %v492 = vsel %vm424, %v487, %v491
        %v493 = vshrl.u32 %v339, 16
        %v495 = vrot.slane %v493, 4
        %v496 = vor.u32 %v495, %v491
        %v497 = vrot.slane %v496, 4
        %v499 = vshll.u32 %v340, 16
        %v501 = vrot.slane %v499, 5
        %v502 = vsel %vm424, %v497, %v501
        %v503 = vshrl.u32 %v340, 16
        %v505 = vrot.slane %v503, 4
        %v506 = vor.u32 %v505, %v501
        %v507 = vrot.slane %v506, 4
        %v509 = vshll.u32 %v341, 16
        %v511 = vrot.slane %v509, 5
        %v512 = vsel %vm424, %v507, %v511
        %v514 = vshrl.u32 %v342, 16
        %v516 = vrot.slane %v514, 4
        %v517 = vshll.u32 %v342, 16
        %v519 = vrot.slane %v517, 5
        %v520 = vor.u32 %v516, %v519
        %v521 = vrot.slane %v520, 4
        %v523 = vshll.u32 %v343, 16
        %v525 = vrot.slane %v523, 5
        %v526 = vsel %vm424, %v521, %v525
        %v527 = vshrl.u32 %v343, 16
        %v529 = vrot.slane %v527, 4
        %v530 = vor.u32 %v529, %v525
        %v531 = vrot.slane %v530, 4
        %v533 = vshll.u32 %v344, 16
        %v535 = vrot.slane %v533, 5
        %v536 = vsel %vm424, %v531, %v535
        %v537 = vshrl.u32 %v344, 16
        %v539 = vrot.slane %v537, 4
        %v540 = vor.u32 %v539, %v535
        %v541 = vrot.slane %v540, 4
        %v543 = vshll.u32 %v345, 16
        %v545 = vrot.slane %v543, 5
        %v546 = vsel %vm424, %v541, %v545
        %v547 = vshrl.u32 %v345, 16
        %v549 = vrot.slane %v547, 4
        %v550 = vor.u32 %v549, %v545
        %v551 = vrot.slane %v550, 4
        %v553 = vshll.u32 %v346, 16
        %v555 = vrot.slane %v553, 5
        %v556 = vsel %vm424, %v551, %v555
        %v558 = vshrl.u32 %v347, 16
        %v560 = vrot.slane %v558, 4
        %v561 = vshll.u32 %v347, 16
        %v563 = vrot.slane %v561, 5
        %v564 = vor.u32 %v560, %v563
        %v565 = vrot.slane %v564, 4
        %v567 = vshll.u32 %v348, 16
        %v569 = vrot.slane %v567, 5
        %v570 = vsel %vm424, %v565, %v569
        %v571 = vshrl.u32 %v348, 16
        %v573 = vrot.slane %v571, 4
        %v574 = vor.u32 %v573, %v569
        %v575 = vrot.slane %v574, 4
        %v577 = vshll.u32 %v349, 16
        %v579 = vrot.slane %v577, 5
        %v580 = vsel %vm424, %v575, %v579
        %v581 = vshrl.u32 %v349, 16
        %v583 = vrot.slane %v581, 4
        %v584 = vor.u32 %v583, %v579
        %v585 = vrot.slane %v584, 4
        %v587 = vshll.u32 %v350, 16
        %v589 = vrot.slane %v587, 5
        %v590 = vsel %vm424, %v585, %v589
        %v591 = vshrl.u32 %v350, 16
        %v593 = vrot.slane %v591, 4
        %v594 = vor.u32 %v593, %v589
        %v595 = vrot.slane %v594, 4
        %v597 = vshll.u32 %v351, 16
        %v599 = vrot.slane %v597, 5
        %v600 = vsel %vm424, %v595, %v599
        %v602 = vshrl.u32 %v352, 16
        %v604 = vrot.slane %v602, 4
        %v605 = vshll.u32 %v352, 16
        %v607 = vrot.slane %v605, 5
        %v608 = vor.u32 %v604, %v607
        %v609 = vrot.slane %v608, 4
        %v611 = vshll.u32 %v353, 16
        %v613 = vrot.slane %v611, 5
        %v614 = vsel %vm424, %v609, %v613
        %v615 = vshrl.u32 %v353, 16
        %v617 = vrot.slane %v615, 4
        %v618 = vor.u32 %v617, %v613
        %v619 = vrot.slane %v618, 4
        %v621 = vshll.u32 %v354, 16
        %v623 = vrot.slane %v621, 5
        %v624 = vsel %vm424, %v619, %v623
        %v625 = vshrl.u32 %v354, 16
        %v627 = vrot.slane %v625, 4
        %v628 = vor.u32 %v627, %v623
        %v629 = vrot.slane %v628, 4
        %v631 = vshll.u32 %v355, 16
        %v633 = vrot.slane %v631, 5
        %v634 = vsel %vm424, %v629, %v633
        %v635 = vshrl.u32 %v355, 16
        %v637 = vrot.slane %v635, 4
        %v638 = vor.u32 %v637, %v633
        %v639 = vrot.slane %v638, 4
        %v641 = vshll.u32 %v356, 16
        %v643 = vrot.slane %v641, 5
        %v644 = vsel %vm424, %v639, %v643
        %v646 = vshrl.u32 %v357, 16
        %v648 = vrot.slane %v646, 4
        %v649 = vshll.u32 %v357, 16
        %v651 = vrot.slane %v649, 5
        %v652 = vor.u32 %v648, %v651
        %v653 = vrot.slane %v652, 4
        %v655 = vshll.u32 %v358, 16
        %v657 = vrot.slane %v655, 5
        %v658 = vsel %vm424, %v653, %v657
        %v659 = vshrl.u32 %v358, 16
        %v661 = vrot.slane %v659, 4
        %v662 = vor.u32 %v661, %v657
        %v663 = vrot.slane %v662, 4
        %v665 = vshll.u32 %v359, 16
        %v667 = vrot.slane %v665, 5
        %v668 = vsel %vm424, %v663, %v667
        %v669 = vshrl.u32 %v359, 16
        %v671 = vrot.slane %v669, 4
        %v672 = vor.u32 %v671, %v667
        %v673 = vrot.slane %v672, 4
        %v675 = vshll.u32 %v360, 16
        %v677 = vrot.slane %v675, 5
        %v678 = vsel %vm424, %v673, %v677
        %v679 = vshrl.u32 %v360, 16
        %v681 = vrot.slane %v679, 4
        %v682 = vor.u32 %v681, %v677
        %v683 = vrot.slane %v682, 4
        %v685 = vshll.u32 %v361, 16
        %v687 = vrot.slane %v685, 5
        %v688 = vsel %vm424, %v683, %v687
        %v690 = vshrl.u32 %v362, 16
        %v692 = vrot.slane %v690, 4
        %v693 = vshll.u32 %v362, 16
        %v695 = vrot.slane %v693, 5
        %v696 = vor.u32 %v692, %v695
        %v697 = vrot.slane %v696, 4
        %v699 = vshll.u32 %v363, 16
        %v701 = vrot.slane %v699, 5
        %v702 = vsel %vm424, %v697, %v701
        %v703 = vshrl.u32 %v363, 16
        %v705 = vrot.slane %v703, 4
        %v706 = vor.u32 %v705, %v701
        %v707 = vrot.slane %v706, 4
        %v709 = vshll.u32 %v364, 16
        %v711 = vrot.slane %v709, 5
        %v712 = vsel %vm424, %v707, %v711
        %v713 = vshrl.u32 %v364, 16
        %v715 = vrot.slane %v713, 4
        %v716 = vor.u32 %v715, %v711
        %v717 = vrot.slane %v716, 4
        %v719 = vshll.u32 %v365, 16
        %v721 = vrot.slane %v719, 5
        %v722 = vsel %vm424, %v717, %v721
        %v723 = vshrl.u32 %v365, 16
        %v725 = vrot.slane %v723, 4
        %v726 = vor.u32 %v725, %v721
        %v727 = vrot.slane %v726, 4
        %v729 = vshll.u32 %v366, 16
        %v731 = vrot.slane %v729, 5
        %v732 = vsel %vm424, %v727, %v731
        %v734 = vshrl.u32 %v367, 16
        %v736 = vrot.slane %v734, 4
        %v737 = vshll.u32 %v367, 16
        %v739 = vrot.slane %v737, 5
        %v740 = vor.u32 %v736, %v739
        %v741 = vrot.slane %v740, 4
        %v743 = vshll.u32 %v368, 16
        %v745 = vrot.slane %v743, 5
        %v746 = vsel %vm424, %v741, %v745
        %v747 = vshrl.u32 %v368, 16
        %v749 = vrot.slane %v747, 4
        %v750 = vor.u32 %v749, %v745
        %v751 = vrot.slane %v750, 4
        %v753 = vshll.u32 %v369, 16
        %v755 = vrot.slane %v753, 5
        %v756 = vsel %vm424, %v751, %v755
        %v757 = vshrl.u32 %v369, 16
        %v759 = vrot.slane %v757, 4
        %v760 = vor.u32 %v759, %v755
        %v761 = vrot.slane %v760, 4
        %v763 = vshll.u32 %v370, 16
        %v765 = vrot.slane %v763, 5
        %v766 = vsel %vm424, %v761, %v765
        %v767 = vshrl.u32 %v370, 16
        %v769 = vrot.slane %v767, 4
        %v770 = vor.u32 %v769, %v765
        %v771 = vrot.slane %v770, 4
        %v773 = vshll.u32 %v371, 16
        %v775 = vrot.slane %v773, 5
        %v776 = vsel %vm424, %v771, %v775
        %v778 = vshrl.u32 %v372, 16
        %v780 = vrot.slane %v778, 4
        %v781 = vshll.u32 %v372, 16
        %v783 = vrot.slane %v781, 5
        %v784 = vor.u32 %v780, %v783
        %v785 = vrot.slane %v784, 4
        %v787 = vshll.u32 %v373, 16
        %v789 = vrot.slane %v787, 5
        %v790 = vsel %vm424, %v785, %v789
        %v791 = vshrl.u32 %v373, 16
        %v793 = vrot.slane %v791, 4
        %v794 = vor.u32 %v793, %v789
        %v795 = vrot.slane %v794, 4
        %v797 = vshll.u32 %v374, 16
        %v799 = vrot.slane %v797, 5
        %v800 = vsel %vm424, %v795, %v799
        %v801 = vshrl.u32 %v374, 16
        %v803 = vrot.slane %v801, 4
        %v804 = vor.u32 %v803, %v799
        %v805 = vrot.slane %v804, 4
        %v807 = vshll.u32 %v375, 16
        %v809 = vrot.slane %v807, 5
        %v810 = vsel %vm424, %v805, %v809
        %v811 = vshrl.u32 %v375, 16
        %v813 = vrot.slane %v811, 4
        %v814 = vor.u32 %v813, %v809
        %v815 = vrot.slane %v814, 4
        %v817 = vshll.u32 %v376, 16
        %v819 = vrot.slane %v817, 5
        %v820 = vsel %vm424, %v815, %v819
        %v822 = vshrl.u32 %v377, 16
        %v824 = vrot.slane %v822, 4
        %v825 = vshll.u32 %v377, 16
        %v827 = vrot.slane %v825, 5
        %v828 = vor.u32 %v824, %v827
        %v829 = vrot.slane %v828, 4
        %v831 = vshll.u32 %v378, 16
        %v833 = vrot.slane %v831, 5
        %v834 = vsel %vm424, %v829, %v833
        %v835 = vshrl.u32 %v378, 16
        %v837 = vrot.slane %v835, 4
        %v838 = vor.u32 %v837, %v833
        %v839 = vrot.slane %v838, 4
        %v841 = vshll.u32 %v379, 16
        %v843 = vrot.slane %v841, 5
        %v844 = vsel %vm424, %v839, %v843
        %v845 = vshrl.u32 %v379, 16
        %v847 = vrot.slane %v845, 4
        %v848 = vor.u32 %v847, %v843
        %v849 = vrot.slane %v848, 4
        %v851 = vshll.u32 %v380, 16
        %v853 = vrot.slane %v851, 5
        %v854 = vsel %vm424, %v849, %v853
        %v855 = vshrl.u32 %v380, 16
        %v857 = vrot.slane %v855, 4
        %v858 = vor.u32 %v857, %v853
        %v859 = vrot.slane %v858, 4
        %v861 = vshll.u32 %v381, 16
        %v863 = vrot.slane %v861, 5
        %v864 = vsel %vm424, %v859, %v863
        %v866 = vshrl.u32 %v382, 16
        %v868 = vrot.slane %v866, 4
        %v869 = vshll.u32 %v382, 16
        %v871 = vrot.slane %v869, 5
        %v872 = vor.u32 %v868, %v871
        %v873 = vrot.slane %v872, 4
        %v875 = vshll.u32 %v383, 16
        %v877 = vrot.slane %v875, 5
        %v878 = vsel %vm424, %v873, %v877
        %v879 = vshrl.u32 %v383, 16
        %v881 = vrot.slane %v879, 4
        %v882 = vor.u32 %v881, %v877
        %v883 = vrot.slane %v882, 4
        %v885 = vshll.u32 %v384, 16
        %v887 = vrot.slane %v885, 5
        %v888 = vsel %vm424, %v883, %v887
        %v889 = vshrl.u32 %v384, 16
        %v891 = vrot.slane %v889, 4
        %v892 = vor.u32 %v891, %v887
        %v893 = vrot.slane %v892, 4
        %v895 = vshll.u32 %v385, 16
        %v897 = vrot.slane %v895, 5
        %v898 = vsel %vm424, %v893, %v897
        %v899 = vshrl.u32 %v385, 16
        %v901 = vrot.slane %v899, 4
        %v902 = vor.u32 %v901, %v897
        %v903 = vrot.slane %v902, 4
        %v905 = vshll.u32 %v386, 16
        %v907 = vrot.slane %v905, 5
        %v908 = vsel %vm424, %v903, %v907
        %v910 = vshrl.u32 %v387, 16
        %v912 = vrot.slane %v910, 4
        %v913 = vshll.u32 %v387, 16
        %v915 = vrot.slane %v913, 5
        %v916 = vor.u32 %v912, %v915
        %v917 = vrot.slane %v916, 4
        %v919 = vshll.u32 %v388, 16
        %v921 = vrot.slane %v919, 5
        %v922 = vsel %vm424, %v917, %v921
        %v923 = vshrl.u32 %v388, 16
        %v925 = vrot.slane %v923, 4
        %v926 = vor.u32 %v925, %v921
        %v927 = vrot.slane %v926, 4
        %v929 = vshll.u32 %v389, 16
        %v931 = vrot.slane %v929, 5
        %v932 = vsel %vm424, %v927, %v931
        %v933 = vshrl.u32 %v389, 16
        %v935 = vrot.slane %v933, 4
        %v936 = vor.u32 %v935, %v931
        %v937 = vrot.slane %v936, 4
        %v939 = vshll.u32 %v390, 16
        %v941 = vrot.slane %v939, 5
        %v942 = vsel %vm424, %v937, %v941
        %v943 = vshrl.u32 %v390, 16
        %v945 = vrot.slane %v943, 4
        %v946 = vor.u32 %v945, %v941
        %v947 = vrot.slane %v946, 4
        %v949 = vshll.u32 %v391, 16
        %v951 = vrot.slane %v949, 5
        %v952 = vsel %vm424, %v947, %v951
        %v954 = vshrl.u32 %v392, 16
        %v956 = vrot.slane %v954, 4
        %v957 = vshll.u32 %v392, 16
        %v959 = vrot.slane %v957, 5
        %v960 = vor.u32 %v956, %v959
        %v961 = vrot.slane %v960, 4
        %v963 = vshll.u32 %v393, 16
        %v965 = vrot.slane %v963, 5
        %v966 = vsel %vm424, %v961, %v965
        %v967 = vshrl.u32 %v393, 16
        %v969 = vrot.slane %v967, 4
        %v970 = vor.u32 %v969, %v965
        %v971 = vrot.slane %v970, 4
        %v973 = vshll.u32 %v394, 16
        %v975 = vrot.slane %v973, 5
        %v976 = vsel %vm424, %v971, %v975
        %v977 = vshrl.u32 %v394, 16
        %v979 = vrot.slane %v977, 4
        %v980 = vor.u32 %v979, %v975
        %v981 = vrot.slane %v980, 4
        %v983 = vshll.u32 %v395, 16
        %v985 = vrot.slane %v983, 5
        %v986 = vsel %vm424, %v981, %v985
        %v987 = vshrl.u32 %v395, 16
        %v989 = vrot.slane %v987, 4
        %v990 = vor.u32 %v989, %v985
        %v991 = vrot.slane %v990, 4
        %v993 = vshll.u32 %v396, 16
        %v995 = vrot.slane %v993, 5
        %v996 = vsel %vm424, %v991, %v995
        %v998 = vshrl.u32 %v397, 16
        %v1000 = vrot.slane %v998, 4
        %v1001 = vshll.u32 %v397, 16
        %v1003 = vrot.slane %v1001, 5
        %v1004 = vor.u32 %v1000, %v1003
        %v1005 = vrot.slane %v1004, 4
        %v1007 = vshll.u32 %v398, 16
        %v1009 = vrot.slane %v1007, 5
        %v1010 = vsel %vm424, %v1005, %v1009
        %v1011 = vshrl.u32 %v398, 16
        %v1013 = vrot.slane %v1011, 4
        %v1014 = vor.u32 %v1013, %v1009
        %v1015 = vrot.slane %v1014, 4
        %v1017 = vshll.u32 %v399, 16
        %v1019 = vrot.slane %v1017, 5
        %v1020 = vsel %vm424, %v1015, %v1019
        %v1021 = vshrl.u32 %v399, 16
        %v1023 = vrot.slane %v1021, 4
        %v1024 = vor.u32 %v1023, %v1019
        %v1025 = vrot.slane %v1024, 4
        %v1027 = vshll.u32 %v400, 16
        %v1029 = vrot.slane %v1027, 5
        %v1030 = vsel %vm424, %v1025, %v1029
        %v1031 = vshrl.u32 %v400, 16
        %v1033 = vrot.slane %v1031, 4
        %v1034 = vor.u32 %v1033, %v1029
        %v1035 = vrot.slane %v1034, 4
        %v1037 = vshll.u32 %v401, 16
        %v1039 = vrot.slane %v1037, 5
        %v1040 = vsel %vm424, %v1035, %v1039
        %v1042 = vshrl.u32 %v402, 16
        %v1044 = vrot.slane %v1042, 4
        %v1045 = vshll.u32 %v402, 16
        %v1047 = vrot.slane %v1045, 5
        %v1048 = vor.u32 %v1044, %v1047
        %v1049 = vrot.slane %v1048, 4
        %v1051 = vshll.u32 %v403, 16
        %v1053 = vrot.slane %v1051, 5
        %v1054 = vsel %vm424, %v1049, %v1053
        %v1055 = vshrl.u32 %v403, 16
        %v1057 = vrot.slane %v1055, 4
        %v1058 = vor.u32 %v1057, %v1053
        %v1059 = vrot.slane %v1058, 4
        %v1061 = vshll.u32 %v404, 16
        %v1063 = vrot.slane %v1061, 5
        %v1064 = vsel %vm424, %v1059, %v1063
        %v1065 = vshrl.u32 %v404, 16
        %v1067 = vrot.slane %v1065, 4
        %v1068 = vor.u32 %v1067, %v1063
        %v1069 = vrot.slane %v1068, 4
        %v1071 = vshll.u32 %v405, 16
        %v1073 = vrot.slane %v1071, 5
        %v1074 = vsel %vm424, %v1069, %v1073
        %v1075 = vshrl.u32 %v405, 16
        %v1077 = vrot.slane %v1075, 4
        %v1078 = vor.u32 %v1077, %v1073
        %v1079 = vrot.slane %v1078, 4
        %v1081 = vshll.u32 %v406, 16
        %v1083 = vrot.slane %v1081, 5
        %v1084 = vsel %vm424, %v1079, %v1083
        %v1086 = vshrl.u32 %v407, 16
        %v1088 = vrot.slane %v1086, 4
        %v1089 = vshll.u32 %v407, 16
        %v1091 = vrot.slane %v1089, 5
        %v1092 = vor.u32 %v1088, %v1091
        %v1093 = vrot.slane %v1092, 4
        %v1095 = vshll.u32 %v408, 16
        %v1097 = vrot.slane %v1095, 5
        %v1098 = vsel %vm424, %v1093, %v1097
        %v1099 = vshrl.u32 %v408, 16
        %v1101 = vrot.slane %v1099, 4
        %v1102 = vor.u32 %v1101, %v1097
        %v1103 = vrot.slane %v1102, 4
        %v1105 = vshll.u32 %v409, 16
        %v1107 = vrot.slane %v1105, 5
        %v1108 = vsel %vm424, %v1103, %v1107
        %v1109 = vshrl.u32 %v409, 16
        %v1111 = vrot.slane %v1109, 4
        %v1112 = vor.u32 %v1111, %v1107
        %v1113 = vrot.slane %v1112, 4
        %v1115 = vshll.u32 %v410, 16
        %v1117 = vrot.slane %v1115, 5
        %v1118 = vsel %vm424, %v1113, %v1117
        %v1119 = vshrl.u32 %v410, 16
        %v1121 = vrot.slane %v1119, 4
        %v1122 = vor.u32 %v1121, %v1117
        %v1123 = vrot.slane %v1122, 4
        %v1125 = vshll.u32 %v411, 16
        %v1127 = vrot.slane %v1125, 5
        %v1128 = vsel %vm424, %v1123, %v1127
        %vm1209 = vcmask 1042432
        %vm1210 = vcmask 1046532
        %vm1211 = vmor %vm1209, %vm1210
        %v1212 = vrot.slane %v332, 5
        %v1213 = vrot.slane %v1212, 4
        %v1214 = vrot.slane %v333, 5
        %v1215 = vsel %vm1211, %v1213, %v1214
        %v1216 = vrot.slane %v1214, 4
        %v1217 = vrot.slane %v334, 5
        %v1218 = vsel %vm1211, %v1216, %v1217
        %v1219 = vrot.slane %v1217, 4
        %v1220 = vrot.slane %v335, 5
        %v1221 = vsel %vm1211, %v1219, %v1220
        %v1222 = vrot.slane %v1220, 4
        %v1223 = vrot.slane %v336, 5
        %v1224 = vsel %vm1211, %v1222, %v1223
        %v1225 = vrot.slane %v337, 5
        %v1226 = vrot.slane %v1225, 4
        %v1227 = vrot.slane %v338, 5
        %v1228 = vsel %vm1211, %v1226, %v1227
        %v1229 = vrot.slane %v1227, 4
        %v1230 = vrot.slane %v339, 5
        %v1231 = vsel %vm1211, %v1229, %v1230
        %v1232 = vrot.slane %v1230, 4
        %v1233 = vrot.slane %v340, 5
        %v1234 = vsel %vm1211, %v1232, %v1233
        %v1235 = vrot.slane %v1233, 4
        %v1236 = vrot.slane %v341, 5
        %v1237 = vsel %vm1211, %v1235, %v1236
        %v1238 = vrot.slane %v342, 5
        %v1239 = vrot.slane %v1238, 4
        %v1240 = vrot.slane %v343, 5
        %v1241 = vsel %vm1211, %v1239, %v1240
        %v1242 = vrot.slane %v1240, 4
        %v1243 = vrot.slane %v344, 5
        %v1244 = vsel %vm1211, %v1242, %v1243
        %v1245 = vrot.slane %v1243, 4
        %v1246 = vrot.slane %v345, 5
        %v1247 = vsel %vm1211, %v1245, %v1246
        %v1248 = vrot.slane %v1246, 4
        %v1249 = vrot.slane %v346, 5
        %v1250 = vsel %vm1211, %v1248, %v1249
        %v1251 = vrot.slane %v347, 5
        %v1252 = vrot.slane %v1251, 4
        %v1253 = vrot.slane %v348, 5
        %v1254 = vsel %vm1211, %v1252, %v1253
        %v1255 = vrot.slane %v1253, 4
        %v1256 = vrot.slane %v349, 5
        %v1257 = vsel %vm1211, %v1255, %v1256
        %v1258 = vrot.slane %v1256, 4
        %v1259 = vrot.slane %v350, 5
        %v1260 = vsel %vm1211, %v1258, %v1259
        %v1261 = vrot.slane %v1259, 4
        %v1262 = vrot.slane %v351, 5
        %v1263 = vsel %vm1211, %v1261, %v1262
        %v1264 = vrot.slane %v352, 5
        %v1265 = vrot.slane %v1264, 4
        %v1266 = vrot.slane %v353, 5
        %v1267 = vsel %vm1211, %v1265, %v1266
        %v1268 = vrot.slane %v1266, 4
        %v1269 = vrot.slane %v354, 5
        %v1270 = vsel %vm1211, %v1268, %v1269
        %v1271 = vrot.slane %v1269, 4
        %v1272 = vrot.slane %v355, 5
        %v1273 = vsel %vm1211, %v1271, %v1272
        %v1274 = vrot.slane %v1272, 4
        %v1275 = vrot.slane %v356, 5
        %v1276 = vsel %vm1211, %v1274, %v1275
        %v1277 = vrot.slane %v357, 5
        %v1278 = vrot.slane %v1277, 4
        %v1279 = vrot.slane %v358, 5
        %v1280 = vsel %vm1211, %v1278, %v1279
        %v1281 = vrot.slane %v1279, 4
        %v1282 = vrot.slane %v359, 5
        %v1283 = vsel %vm1211, %v1281, %v1282
        %v1284 = vrot.slane %v1282, 4
        %v1285 = vrot.slane %v360, 5
        %v1286 = vsel %vm1211, %v1284, %v1285
        %v1287 = vrot.slane %v1285, 4
        %v1288 = vrot.slane %v361, 5
        %v1289 = vsel %vm1211, %v1287, %v1288
        %v1290 = vrot.slane %v362, 5
        %v1291 = vrot.slane %v1290, 4
        %v1292 = vrot.slane %v363, 5
        %v1293 = vsel %vm1211, %v1291, %v1292
        %v1294 = vrot.slane %v1292, 4
        %v1295 = vrot.slane %v364, 5
        %v1296 = vsel %vm1211, %v1294, %v1295
        %v1297 = vrot.slane %v1295, 4
        %v1298 = vrot.slane %v365, 5
        %v1299 = vsel %vm1211, %v1297, %v1298
        %v1300 = vrot.slane %v1298, 4
        %v1301 = vrot.slane %v366, 5
        %v1302 = vsel %vm1211, %v1300, %v1301
        %v1303 = vrot.slane %v367, 5
        %v1304 = vrot.slane %v1303, 4
        %v1305 = vrot.slane %v368, 5
        %v1306 = vsel %vm1211, %v1304, %v1305
        %v1307 = vrot.slane %v1305, 4
        %v1308 = vrot.slane %v369, 5
        %v1309 = vsel %vm1211, %v1307, %v1308
        %v1310 = vrot.slane %v1308, 4
        %v1311 = vrot.slane %v370, 5
        %v1312 = vsel %vm1211, %v1310, %v1311
        %v1313 = vrot.slane %v1311, 4
        %v1314 = vrot.slane %v371, 5
        %v1315 = vsel %vm1211, %v1313, %v1314
        %v1316 = vrot.slane %v372, 5
        %v1317 = vrot.slane %v1316, 4
        %v1318 = vrot.slane %v373, 5
        %v1319 = vsel %vm1211, %v1317, %v1318
        %v1320 = vrot.slane %v1318, 4
        %v1321 = vrot.slane %v374, 5
        %v1322 = vsel %vm1211, %v1320, %v1321
        %v1323 = vrot.slane %v1321, 4
        %v1324 = vrot.slane %v375, 5
        %v1325 = vsel %vm1211, %v1323, %v1324
        %v1326 = vrot.slane %v1324, 4
        %v1327 = vrot.slane %v376, 5
        %v1328 = vsel %vm1211, %v1326, %v1327
        %v1329 = vrot.slane %v377, 5
        %v1330 = vrot.slane %v1329, 4
        %v1331 = vrot.slane %v378, 5
        %v1332 = vsel %vm1211, %v1330, %v1331
        %v1333 = vrot.slane %v1331, 4
        %v1334 = vrot.slane %v379, 5
        %v1335 = vsel %vm1211, %v1333, %v1334
        %v1336 = vrot.slane %v1334, 4
        %v1337 = vrot.slane %v380, 5
        %v1338 = vsel %vm1211, %v1336, %v1337
        %v1339 = vrot.slane %v1337, 4
        %v1340 = vrot.slane %v381, 5
        %v1341 = vsel %vm1211, %v1339, %v1340
        %v1342 = vrot.slane %v382, 5
        %v1343 = vrot.slane %v1342, 4
        %v1344 = vrot.slane %v383, 5
        %v1345 = vsel %vm1211, %v1343, %v1344
        %v1346 = vrot.slane %v1344, 4
        %v1347 = vrot.slane %v384, 5
        %v1348 = vsel %vm1211, %v1346, %v1347
        %v1349 = vrot.slane %v1347, 4
        %v1350 = vrot.slane %v385, 5
        %v1351 = vsel %vm1211, %v1349, %v1350
        %v1352 = vrot.slane %v1350, 4
        %v1353 = vrot.slane %v386, 5
        %v1354 = vsel %vm1211, %v1352, %v1353
        %v1355 = vrot.slane %v387, 5
        %v1356 = vrot.slane %v1355, 4
        %v1357 = vrot.slane %v388, 5
        %v1358 = vsel %vm1211, %v1356, %v1357
        %v1359 = vrot.slane %v1357, 4
        %v1360 = vrot.slane %v389, 5
        %v1361 = vsel %vm1211, %v1359, %v1360
        %v1362 = vrot.slane %v1360, 4
        %v1363 = vrot.slane %v390, 5
        %v1364 = vsel %vm1211, %v1362, %v1363
        %v1365 = vrot.slane %v1363, 4
        %v1366 = vrot.slane %v391, 5
        %v1367 = vsel %vm1211, %v1365, %v1366
        %v1368 = vrot.slane %v392, 5
        %v1369 = vrot.slane %v1368, 4
        %v1370 = vrot.slane %v393, 5
        %v1371 = vsel %vm1211, %v1369, %v1370
        %v1372 = vrot.slane %v1370, 4
        %v1373 = vrot.slane %v394, 5
        %v1374 = vsel %vm1211, %v1372, %v1373
        %v1375 = vrot.slane %v1373, 4
        %v1376 = vrot.slane %v395, 5
        %v1377 = vsel %vm1211, %v1375, %v1376
        %v1378 = vrot.slane %v1376, 4
        %v1379 = vrot.slane %v396, 5
        %v1380 = vsel %vm1211, %v1378, %v1379
        %v1381 = vrot.slane %v397, 5
        %v1382 = vrot.slane %v1381, 4
        %v1383 = vrot.slane %v398, 5
        %v1384 = vsel %vm1211, %v1382, %v1383
        %v1385 = vrot.slane %v1383, 4
        %v1386 = vrot.slane %v399, 5
        %v1387 = vsel %vm1211, %v1385, %v1386
        %v1388 = vrot.slane %v1386, 4
        %v1389 = vrot.slane %v400, 5
        %v1390 = vsel %vm1211, %v1388, %v1389
        %v1391 = vrot.slane %v1389, 4
        %v1392 = vrot.slane %v401, 5
        %v1393 = vsel %vm1211, %v1391, %v1392
        %v1394 = vrot.slane %v402, 5
        %v1395 = vrot.slane %v1394, 4
        %v1396 = vrot.slane %v403, 5
        %v1397 = vsel %vm1211, %v1395, %v1396
        %v1398 = vrot.slane %v1396, 4
        %v1399 = vrot.slane %v404, 5
        %v1400 = vsel %vm1211, %v1398, %v1399
        %v1401 = vrot.slane %v1399, 4
        %v1402 = vrot.slane %v405, 5
        %v1403 = vsel %vm1211, %v1401, %v1402
        %v1404 = vrot.slane %v1402, 4
        %v1405 = vrot.slane %v406, 5
        %v1406 = vsel %vm1211, %v1404, %v1405
        %v1407 = vrot.slane %v407, 5
        %v1408 = vrot.slane %v1407, 4
        %v1409 = vrot.slane %v408, 5
        %v1410 = vsel %vm1211, %v1408, %v1409
        %v1411 = vrot.slane %v1409, 4
        %v1412 = vrot.slane %v409, 5
        %v1413 = vsel %vm1211, %v1411, %v1412
        %v1414 = vrot.slane %v1412, 4
        %v1415 = vrot.slane %v410, 5
        %v1416 = vsel %vm1211, %v1414, %v1415
        %v1417 = vrot.slane %v1415, 4
        %v1418 = vrot.slane %v411, 5
        %v1419 = vsel %vm1211, %v1417, %v1418
        %v1421 = vshrl.u32 %v412, 16
        %v1423 = vrot.slane %v1421, 4
        %v1424 = vshll.u32 %v412, 16
        %v1426 = vrot.slane %v1424, 5
        %v1427 = vor.u32 %v1423, %v1426
        %v1428 = vrot.slane %v1427, 4
        %v1430 = vshll.u32 %v413, 16
        %v1432 = vrot.slane %v1430, 5
        %v1433 = vsel %vm424, %v1428, %v1432
        %v1434 = vshrl.u32 %v413, 16
        %v1436 = vrot.slane %v1434, 4
        %v1437 = vor.u32 %v1436, %v1432
        %v1438 = vrot.slane %v1437, 4
        %v1440 = vshll.u32 %v414, 16
        %v1442 = vrot.slane %v1440, 5
        %v1443 = vsel %vm424, %v1438, %v1442
        %v1444 = vshrl.u32 %v414, 16
        %v1446 = vrot.slane %v1444, 4
        %v1447 = vor.u32 %v1446, %v1442
        %v1448 = vrot.slane %v1447, 4
        %v1450 = vshll.u32 %v415, 16
        %v1452 = vrot.slane %v1450, 5
        %v1453 = vsel %vm424, %v1448, %v1452
        %v1454 = vshrl.u32 %v415, 16
        %v1456 = vrot.slane %v1454, 4
        %v1457 = vor.u32 %v1456, %v1452
        %v1458 = vrot.slane %v1457, 4
        %v1460 = vshll.u32 %v416, 16
        %v1462 = vrot.slane %v1460, 5
        %v1463 = vsel %vm424, %v1458, %v1462
        %v1469 = vrot.slane %v412, 5
        %v1470 = vrot.slane %v1469, 4
        %v1471 = vrot.slane %v413, 5
        %v1472 = vsel %vm1211, %v1470, %v1471
        %v1473 = vrot.slane %v1471, 4
        %v1474 = vrot.slane %v414, 5
        %v1475 = vsel %vm1211, %v1473, %v1474
        %v1476 = vrot.slane %v1474, 4
        %v1477 = vrot.slane %v415, 5
        %v1478 = vsel %vm1211, %v1476, %v1477
        %v1479 = vrot.slane %v1477, 4
        %v1480 = vrot.slane %v416, 5
        %v1481 = vsel %vm1211, %v1479, %v1480
        %v1483 = vshrl.u32 %v417, 16
        %v1485 = vrot.slane %v1483, 4
        %v1486 = vshll.u32 %v417, 16
        %v1488 = vrot.slane %v1486, 5
        %v1489 = vor.u32 %v1485, %v1488
        %v1490 = vrot.slane %v1489, 4
        %v1492 = vshll.u32 %v418, 16
        %v1494 = vrot.slane %v1492, 5
        %v1495 = vsel %vm424, %v1490, %v1494
        %v1496 = vshrl.u32 %v418, 16
        %v1498 = vrot.slane %v1496, 4
        %v1499 = vor.u32 %v1498, %v1494
        %v1500 = vrot.slane %v1499, 4
        %v1502 = vshll.u32 %v419, 16
        %v1504 = vrot.slane %v1502, 5
        %v1505 = vsel %vm424, %v1500, %v1504
        %v1506 = vshrl.u32 %v419, 16
        %v1508 = vrot.slane %v1506, 4
        %v1509 = vor.u32 %v1508, %v1504
        %v1510 = vrot.slane %v1509, 4
        %v1512 = vshll.u32 %v420, 16
        %v1514 = vrot.slane %v1512, 5
        %v1515 = vsel %vm424, %v1510, %v1514
        %v1516 = vshrl.u32 %v420, 16
        %v1518 = vrot.slane %v1516, 4
        %v1519 = vor.u32 %v1518, %v1514
        %v1520 = vrot.slane %v1519, 4
        %v1522 = vshll.u32 %v421, 16
        %v1524 = vrot.slane %v1522, 5
        %v1525 = vsel %vm424, %v1520, %v1524
        %v1531 = vrot.slane %v417, 5
        %v1532 = vrot.slane %v1531, 4
        %v1533 = vrot.slane %v418, 5
        %v1534 = vsel %vm1211, %v1532, %v1533
        %v1535 = vrot.slane %v1533, 4
        %v1536 = vrot.slane %v419, 5
        %v1537 = vsel %vm1211, %v1535, %v1536
        %v1538 = vrot.slane %v1536, 4
        %v1539 = vrot.slane %v420, 5
        %v1540 = vsel %vm1211, %v1538, %v1539
        %v1541 = vrot.slane %v1539, 4
        %v1542 = vrot.slane %v421, 5
        %v1543 = vsel %vm1211, %v1541, %v1542
        %v1544 = vunpack.c.l.b16 %v332
        %v1545 = vunpack.c.l.b16 %v333
        %v1546 = vunpack.c.l.b16 %v334
        %v1547 = vunpack.c.l.b16 %v335
        %v1548 = vunpack.c.l.b16 %v337
        %v1549 = vunpack.c.l.b16 %v338
        %v1550 = vunpack.c.l.b16 %v339
        %v1551 = vunpack.c.l.b16 %v340
        %v1552 = vunpack.c.l.b16 %v342
        %v1553 = vunpack.c.l.b16 %v343
        %v1554 = vunpack.c.l.b16 %v344
        %v1555 = vunpack.c.l.b16 %v345
        %v1556 = vunpack.c.l.b16 %v347
        %v1557 = vunpack.c.l.b16 %v348
        %v1558 = vunpack.c.l.b16 %v349
        %v1559 = vunpack.c.l.b16 %v350
        %v1560 = vunpack.c.l.b16 %v352
        %v1561 = vunpack.c.l.b16 %v353
        %v1562 = vunpack.c.l.b16 %v354
        %v1563 = vunpack.c.l.b16 %v355
        %v1564 = vunpack.c.l.b16 %v357
        %v1565 = vunpack.c.l.b16 %v358
        %v1566 = vunpack.c.l.b16 %v359
        %v1567 = vunpack.c.l.b16 %v360
        %v1568 = vunpack.c.l.b16 %v362
        %v1569 = vunpack.c.l.b16 %v363
        %v1570 = vunpack.c.l.b16 %v364
        %v1571 = vunpack.c.l.b16 %v365
        %v1572 = vunpack.c.l.b16 %v367
        %v1573 = vunpack.c.l.b16 %v368
        %v1574 = vunpack.c.l.b16 %v369
        %v1575 = vunpack.c.l.b16 %v370
        %v1576 = vunpack.c.l.b16 %v372
        %v1577 = vunpack.c.l.b16 %v373
        %v1578 = vunpack.c.l.b16 %v374
        %v1579 = vunpack.c.l.b16 %v375
        %v1580 = vunpack.c.l.b16 %v377
        %v1581 = vunpack.c.l.b16 %v378
        %v1582 = vunpack.c.l.b16 %v379
        %v1583 = vunpack.c.l.b16 %v380
        %v1584 = vunpack.c.l.b16 %v382
        %v1585 = vunpack.c.l.b16 %v383
        %v1586 = vunpack.c.l.b16 %v384
        %v1587 = vunpack.c.l.b16 %v385
        %v1588 = vunpack.c.l.b16 %v387
        %v1589 = vunpack.c.l.b16 %v388
        %v1590 = vunpack.c.l.b16 %v389
        %v1591 = vunpack.c.l.b16 %v390
        %v1592 = vunpack.c.l.b16 %v392
        %v1593 = vunpack.c.l.b16 %v393
        %v1594 = vunpack.c.l.b16 %v394
        %v1595 = vunpack.c.l.b16 %v395
        %v1596 = vunpack.c.l.b16 %v397
        %v1597 = vunpack.c.l.b16 %v398
        %v1598 = vunpack.c.l.b16 %v399
        %v1599 = vunpack.c.l.b16 %v400
        %v1600 = vunpack.c.l.b16 %v402
        %v1601 = vunpack.c.l.b16 %v403
        %v1602 = vunpack.c.l.b16 %v404
        %v1603 = vunpack.c.l.b16 %v405
        %v1604 = vunpack.c.l.b16 %v407
        %v1605 = vunpack.c.l.b16 %v408
        %v1606 = vunpack.c.l.b16 %v409
        %v1607 = vunpack.c.l.b16 %v410
        %v1608 = vpack.c.b16 %v1545, %v1544
        %v1609 = vpack.c.b16 %v1547, %v1546
        %v1610 = vpack.c.b16 %v1549, %v1548
        %v1611 = vpack.c.b16 %v1551, %v1550
        %v1612 = vpack.c.b16 %v1553, %v1552
        %v1613 = vpack.c.b16 %v1555, %v1554
        %v1614 = vpack.c.b16 %v1557, %v1556
        %v1615 = vpack.c.b16 %v1559, %v1558
        %v1616 = vpack.c.b16 %v1561, %v1560
        %v1617 = vpack.c.b16 %v1563, %v1562
        %v1618 = vpack.c.b16 %v1565, %v1564
        %v1619 = vpack.c.b16 %v1567, %v1566
        %v1620 = vpack.c.b16 %v1569, %v1568
        %v1621 = vpack.c.b16 %v1571, %v1570
        %v1622 = vpack.c.b16 %v1573, %v1572
        %v1623 = vpack.c.b16 %v1575, %v1574
        %v1624 = vpack.c.b16 %v1577, %v1576
        %v1625 = vpack.c.b16 %v1579, %v1578
        %v1626 = vpack.c.b16 %v1581, %v1580
        %v1627 = vpack.c.b16 %v1583, %v1582
        %v1628 = vpack.c.b16 %v1585, %v1584
        %v1629 = vpack.c.b16 %v1587, %v1586
        %v1630 = vpack.c.b16 %v1589, %v1588
        %v1631 = vpack.c.b16 %v1591, %v1590
        %v1632 = vpack.c.b16 %v1593, %v1592
        %v1633 = vpack.c.b16 %v1595, %v1594
        %v1634 = vpack.c.b16 %v1597, %v1596
        %v1635 = vpack.c.b16 %v1599, %v1598
        %v1636 = vpack.c.b16 %v1601, %v1600
        %v1637 = vpack.c.b16 %v1603, %v1602
        %v1638 = vpack.c.b16 %v1605, %v1604
        %v1639 = vpack.c.b16 %v1607, %v1606
        %v1672 = vunpack.c.l.b16 %v438
        %v1673 = vunpack.c.l.b16 %v448
        %v1674 = vunpack.c.l.b16 %v458
        %v1675 = vunpack.c.l.b16 %v468
        %v1676 = vunpack.c.l.b16 %v482
        %v1677 = vunpack.c.l.b16 %v492
        %v1678 = vunpack.c.l.b16 %v502
        %v1679 = vunpack.c.l.b16 %v512
        %v1680 = vunpack.c.l.b16 %v526
        %v1681 = vunpack.c.l.b16 %v536
        %v1682 = vunpack.c.l.b16 %v546
        %v1683 = vunpack.c.l.b16 %v556
        %v1684 = vunpack.c.l.b16 %v570
        %v1685 = vunpack.c.l.b16 %v580
        %v1686 = vunpack.c.l.b16 %v590
        %v1687 = vunpack.c.l.b16 %v600
        %v1688 = vunpack.c.l.b16 %v614
        %v1689 = vunpack.c.l.b16 %v624
        %v1690 = vunpack.c.l.b16 %v634
        %v1691 = vunpack.c.l.b16 %v644
        %v1692 = vunpack.c.l.b16 %v658
        %v1693 = vunpack.c.l.b16 %v668
        %v1694 = vunpack.c.l.b16 %v678
        %v1695 = vunpack.c.l.b16 %v688
        %v1696 = vunpack.c.l.b16 %v702
        %v1697 = vunpack.c.l.b16 %v712
        %v1698 = vunpack.c.l.b16 %v722
        %v1699 = vunpack.c.l.b16 %v732
        %v1700 = vunpack.c.l.b16 %v746
        %v1701 = vunpack.c.l.b16 %v756
        %v1702 = vunpack.c.l.b16 %v766
        %v1703 = vunpack.c.l.b16 %v776
        %v1704 = vunpack.c.l.b16 %v790
        %v1705 = vunpack.c.l.b16 %v800
        %v1706 = vunpack.c.l.b16 %v810
        %v1707 = vunpack.c.l.b16 %v820
        %v1708 = vunpack.c.l.b16 %v834
        %v1709 = vunpack.c.l.b16 %v844
        %v1710 = vunpack.c.l.b16 %v854
        %v1711 = vunpack.c.l.b16 %v864
        %v1712 = vunpack.c.l.b16 %v878
        %v1713 = vunpack.c.l.b16 %v888
        %v1714 = vunpack.c.l.b16 %v898
        %v1715 = vunpack.c.l.b16 %v908
        %v1716 = vunpack.c.l.b16 %v922
        %v1717 = vunpack.c.l.b16 %v932
        %v1718 = vunpack.c.l.b16 %v942
        %v1719 = vunpack.c.l.b16 %v952
        %v1720 = vunpack.c.l.b16 %v966
        %v1721 = vunpack.c.l.b16 %v976
        %v1722 = vunpack.c.l.b16 %v986
        %v1723 = vunpack.c.l.b16 %v996
        %v1724 = vunpack.c.l.b16 %v1010
        %v1725 = vunpack.c.l.b16 %v1020
        %v1726 = vunpack.c.l.b16 %v1030
        %v1727 = vunpack.c.l.b16 %v1040
        %v1728 = vunpack.c.l.b16 %v1054
        %v1729 = vunpack.c.l.b16 %v1064
        %v1730 = vunpack.c.l.b16 %v1074
        %v1731 = vunpack.c.l.b16 %v1084
        %v1732 = vunpack.c.l.b16 %v1098
        %v1733 = vunpack.c.l.b16 %v1108
        %v1734 = vunpack.c.l.b16 %v1118
        %v1735 = vunpack.c.l.b16 %v1128
        %v1736 = vpack.c.b16 %v1673, %v1672
        %v1737 = vpack.c.b16 %v1675, %v1674
        %v1738 = vpack.c.b16 %v1677, %v1676
        %v1739 = vpack.c.b16 %v1679, %v1678
        %v1740 = vpack.c.b16 %v1681, %v1680
        %v1741 = vpack.c.b16 %v1683, %v1682
        %v1742 = vpack.c.b16 %v1685, %v1684
        %v1743 = vpack.c.b16 %v1687, %v1686
        %v1744 = vpack.c.b16 %v1689, %v1688
        %v1745 = vpack.c.b16 %v1691, %v1690
        %v1746 = vpack.c.b16 %v1693, %v1692
        %v1747 = vpack.c.b16 %v1695, %v1694
        %v1748 = vpack.c.b16 %v1697, %v1696
        %v1749 = vpack.c.b16 %v1699, %v1698
        %v1750 = vpack.c.b16 %v1701, %v1700
        %v1751 = vpack.c.b16 %v1703, %v1702
        %v1752 = vpack.c.b16 %v1705, %v1704
        %v1753 = vpack.c.b16 %v1707, %v1706
        %v1754 = vpack.c.b16 %v1709, %v1708
        %v1755 = vpack.c.b16 %v1711, %v1710
        %v1756 = vpack.c.b16 %v1713, %v1712
        %v1757 = vpack.c.b16 %v1715, %v1714
        %v1758 = vpack.c.b16 %v1717, %v1716
        %v1759 = vpack.c.b16 %v1719, %v1718
        %v1760 = vpack.c.b16 %v1721, %v1720
        %v1761 = vpack.c.b16 %v1723, %v1722
        %v1762 = vpack.c.b16 %v1725, %v1724
        %v1763 = vpack.c.b16 %v1727, %v1726
        %v1764 = vpack.c.b16 %v1729, %v1728
        %v1765 = vpack.c.b16 %v1731, %v1730
        %v1766 = vpack.c.b16 %v1733, %v1732
        %v1767 = vpack.c.b16 %v1735, %v1734
        %v1800 = vunpack.c.l.b16 %v1215
        %v1801 = vunpack.c.l.b16 %v1218
        %v1802 = vunpack.c.l.b16 %v1221
        %v1803 = vunpack.c.l.b16 %v1224
        %v1804 = vunpack.c.l.b16 %v1228
        %v1805 = vunpack.c.l.b16 %v1231
        %v1806 = vunpack.c.l.b16 %v1234
        %v1807 = vunpack.c.l.b16 %v1237
        %v1808 = vunpack.c.l.b16 %v1241
        %v1809 = vunpack.c.l.b16 %v1244
        %v1810 = vunpack.c.l.b16 %v1247
        %v1811 = vunpack.c.l.b16 %v1250
        %v1812 = vunpack.c.l.b16 %v1254
        %v1813 = vunpack.c.l.b16 %v1257
        %v1814 = vunpack.c.l.b16 %v1260
        %v1815 = vunpack.c.l.b16 %v1263
        %v1816 = vunpack.c.l.b16 %v1267
        %v1817 = vunpack.c.l.b16 %v1270
        %v1818 = vunpack.c.l.b16 %v1273
        %v1819 = vunpack.c.l.b16 %v1276
        %v1820 = vunpack.c.l.b16 %v1280
        %v1821 = vunpack.c.l.b16 %v1283
        %v1822 = vunpack.c.l.b16 %v1286
        %v1823 = vunpack.c.l.b16 %v1289
        %v1824 = vunpack.c.l.b16 %v1293
        %v1825 = vunpack.c.l.b16 %v1296
        %v1826 = vunpack.c.l.b16 %v1299
        %v1827 = vunpack.c.l.b16 %v1302
        %v1828 = vunpack.c.l.b16 %v1306
        %v1829 = vunpack.c.l.b16 %v1309
        %v1830 = vunpack.c.l.b16 %v1312
        %v1831 = vunpack.c.l.b16 %v1315
        %v1832 = vunpack.c.l.b16 %v1319
        %v1833 = vunpack.c.l.b16 %v1322
        %v1834 = vunpack.c.l.b16 %v1325
        %v1835 = vunpack.c.l.b16 %v1328
        %v1836 = vunpack.c.l.b16 %v1332
        %v1837 = vunpack.c.l.b16 %v1335
        %v1838 = vunpack.c.l.b16 %v1338
        %v1839 = vunpack.c.l.b16 %v1341
        %v1840 = vunpack.c.l.b16 %v1345
        %v1841 = vunpack.c.l.b16 %v1348
        %v1842 = vunpack.c.l.b16 %v1351
        %v1843 = vunpack.c.l.b16 %v1354
        %v1844 = vunpack.c.l.b16 %v1358
        %v1845 = vunpack.c.l.b16 %v1361
        %v1846 = vunpack.c.l.b16 %v1364
        %v1847 = vunpack.c.l.b16 %v1367
        %v1848 = vunpack.c.l.b16 %v1371
        %v1849 = vunpack.c.l.b16 %v1374
        %v1850 = vunpack.c.l.b16 %v1377
        %v1851 = vunpack.c.l.b16 %v1380
        %v1852 = vunpack.c.l.b16 %v1384
        %v1853 = vunpack.c.l.b16 %v1387
        %v1854 = vunpack.c.l.b16 %v1390
        %v1855 = vunpack.c.l.b16 %v1393
        %v1856 = vunpack.c.l.b16 %v1397
        %v1857 = vunpack.c.l.b16 %v1400
        %v1858 = vunpack.c.l.b16 %v1403
        %v1859 = vunpack.c.l.b16 %v1406
        %v1860 = vunpack.c.l.b16 %v1410
        %v1861 = vunpack.c.l.b16 %v1413
        %v1862 = vunpack.c.l.b16 %v1416
        %v1863 = vunpack.c.l.b16 %v1419
        %v1864 = vpack.c.b16 %v1801, %v1800
        %v1865 = vpack.c.b16 %v1803, %v1802
        %v1866 = vpack.c.b16 %v1805, %v1804
        %v1867 = vpack.c.b16 %v1807, %v1806
        %v1868 = vpack.c.b16 %v1809, %v1808
        %v1869 = vpack.c.b16 %v1811, %v1810
        %v1870 = vpack.c.b16 %v1813, %v1812
        %v1871 = vpack.c.b16 %v1815, %v1814
        %v1872 = vpack.c.b16 %v1817, %v1816
        %v1873 = vpack.c.b16 %v1819, %v1818
        %v1874 = vpack.c.b16 %v1821, %v1820
        %v1875 = vpack.c.b16 %v1823, %v1822
        %v1876 = vpack.c.b16 %v1825, %v1824
        %v1877 = vpack.c.b16 %v1827, %v1826
        %v1878 = vpack.c.b16 %v1829, %v1828
        %v1879 = vpack.c.b16 %v1831, %v1830
        %v1880 = vpack.c.b16 %v1833, %v1832
        %v1881 = vpack.c.b16 %v1835, %v1834
        %v1882 = vpack.c.b16 %v1837, %v1836
        %v1883 = vpack.c.b16 %v1839, %v1838
        %v1884 = vpack.c.b16 %v1841, %v1840
        %v1885 = vpack.c.b16 %v1843, %v1842
        %v1886 = vpack.c.b16 %v1845, %v1844
        %v1887 = vpack.c.b16 %v1847, %v1846
        %v1888 = vpack.c.b16 %v1849, %v1848
        %v1889 = vpack.c.b16 %v1851, %v1850
        %v1890 = vpack.c.b16 %v1853, %v1852
        %v1891 = vpack.c.b16 %v1855, %v1854
        %v1892 = vpack.c.b16 %v1857, %v1856
        %v1893 = vpack.c.b16 %v1859, %v1858
        %v1894 = vpack.c.b16 %v1861, %v1860
        %v1895 = vpack.c.b16 %v1863, %v1862
        %v1928 = vunpack.c.l.b16 %v412
        %v1929 = vunpack.c.l.b16 %v413
        %v1930 = vunpack.c.l.b16 %v414
        %v1931 = vunpack.c.l.b16 %v415
        %v1932 = vpack.c.b16 %v1929, %v1928
        %v1933 = vpack.c.b16 %v1931, %v1930
        %v1936 = vunpack.c.l.b16 %v1433
        %v1937 = vunpack.c.l.b16 %v1443
        %v1938 = vunpack.c.l.b16 %v1453
        %v1939 = vunpack.c.l.b16 %v1463
        %v1940 = vpack.c.b16 %v1937, %v1936
        %v1941 = vpack.c.b16 %v1939, %v1938
        %v1944 = vunpack.c.l.b16 %v1472
        %v1945 = vunpack.c.l.b16 %v1475
        %v1946 = vunpack.c.l.b16 %v1478
        %v1947 = vunpack.c.l.b16 %v1481
        %v1948 = vpack.c.b16 %v1945, %v1944
        %v1949 = vpack.c.b16 %v1947, %v1946
        %v1952 = vunpack.c.l.b16 %v417
        %v1953 = vunpack.c.l.b16 %v418
        %v1954 = vunpack.c.l.b16 %v419
        %v1955 = vunpack.c.l.b16 %v420
        %v1956 = vpack.c.b16 %v1953, %v1952
        %v1957 = vpack.c.b16 %v1955, %v1954
        %v1960 = vunpack.c.l.b16 %v1495
        %v1961 = vunpack.c.l.b16 %v1505
        %v1962 = vunpack.c.l.b16 %v1515
        %v1963 = vunpack.c.l.b16 %v1525
        %v1964 = vpack.c.b16 %v1961, %v1960
        %v1965 = vpack.c.b16 %v1963, %v1962
        %v1968 = vunpack.c.l.b16 %v1534
        %v1969 = vunpack.c.l.b16 %v1537
        %v1970 = vunpack.c.l.b16 %v1540
        %v1971 = vunpack.c.l.b16 %v1543
        %v1972 = vpack.c.b16 %v1969, %v1968
        %v1973 = vpack.c.b16 %v1971, %v1970
        %v1976 = vld [vmem:[%s265] sm:$0xf]
        %v1977 = vld [vmem:[%s265 + $0x4] sm:$0xf]
        %v1978 = vld [vmem:[%s265 + $0x8] sm:$0xf]
        %v1979 = vld [vmem:[%s265 + $0xc] sm:$0xf]
        %v1980 = vld [vmem:[%s265 + $0x10] sm:$0xf]
        %v1981 = vld [vmem:[%s265 + $0x14] sm:$0xf]
        %v1982 = vld [vmem:[%s265 + $0x18] sm:$0xf]
        %v1983 = vld [vmem:[%s265 + $0x1c] sm:$0xf]
        %v1984 = vld [vmem:[%s265 + $0x20] sm:$0xf]
        %v1985 = vld [vmem:[%s265 + $0x24] sm:$0xf]
        %v1986 = vld [vmem:[%s265 + $0x28] sm:$0xf]
        %v1987 = vld [vmem:[%s265 + $0x2c] sm:$0xf]
        %v1988 = vld [vmem:[%s265 + $0x30] sm:$0xf]
        %v1989 = vld [vmem:[%s265 + $0x34] sm:$0xf]
        %v1990 = vld [vmem:[%s265 + $0x38] sm:$0xf]
        %v1991 = vld [vmem:[%s265 + $0x3c] sm:$0xf]
        %v1992 = vld [vmem:[%s265 + $0x40] sm:$0xf]
        %v1993 = vld [vmem:[%s265 + $0x44] sm:$0xf]
        %v1994 = vld [vmem:[%s265 + $0x48] sm:$0xf]
        %v1995 = vld [vmem:[%s265 + $0x4c] sm:$0xf]
        %v1996 = vld [vmem:[%s265 + $0x50] sm:$0xf]
        %v1997 = vld [vmem:[%s265 + $0x54] sm:$0xf]
        %v1998 = vld [vmem:[%s265 + $0x58] sm:$0xf]
        %v1999 = vld [vmem:[%s265 + $0x5c] sm:$0xf]
        %v2000 = vld [vmem:[%s265 + $0x60] sm:$0xf]
        %v2001 = vld [vmem:[%s265 + $0x64] sm:$0xf]
        %v2002 = vld [vmem:[%s265 + $0x68] sm:$0xf]
        %v2003 = vld [vmem:[%s265 + $0x6c] sm:$0xf]
        %v2004 = vld [vmem:[%s265 + $0x70] sm:$0xf]
        %v2005 = vld [vmem:[%s265 + $0x74] sm:$0xf]
        %v2006 = vld [vmem:[%s265 + $0x78] sm:$0xf]
        %v2007 = vld [vmem:[%s265 + $0x7c] sm:$0xf]
        %v2008 = vld [vmem:[%s265 + $0x80] sm:$0xf]
        %v2009 = vld [vmem:[%s265 + $0x84] sm:$0xf]
        %v2010 = vld [vmem:[%s265 + $0x88] sm:$0xf]
        %v2011 = vld [vmem:[%s265 + $0x8c] sm:$0xf]
        %v2012 = vld [vmem:[%s265 + $0x90] sm:$0xf]
        %v2013 = vld [vmem:[%s265 + $0x94] sm:$0xf]
        %v2014 = vld [vmem:[%s265 + $0x98] sm:$0xf]
        %v2015 = vld [vmem:[%s265 + $0x9c] sm:$0xf]
        %v2016 = vld [vmem:[%s265 + $0xa0] sm:$0xf]
        %v2017 = vld [vmem:[%s265 + $0xa4] sm:$0xf]
        %v2018 = vld [vmem:[%s265 + $0xa8] sm:$0xf]
        %v2019 = vld [vmem:[%s265 + $0xac] sm:$0xf]
        %v2020 = vld [vmem:[%s265 + $0xb0] sm:$0xf]
        %v2021 = vld [vmem:[%s265 + $0xb4] sm:$0xf]
        %v2022 = vld [vmem:[%s265 + $0xb8] sm:$0xf]
        %v2023 = vld [vmem:[%s265 + $0xbc] sm:$0xf]
        %v2024 = vld [vmem:[%s265 + $0xc0] sm:$0xf]
        %v2025 = vld [vmem:[%s265 + $0xc4] sm:$0xf]
        %v2026 = vld [vmem:[%s265 + $0xc8] sm:$0xf]
        %v2027 = vld [vmem:[%s265 + $0xcc] sm:$0xf]
        %v2028 = vld [vmem:[%s265 + $0xd0] sm:$0xf]
        %v2029 = vld [vmem:[%s265 + $0xd4] sm:$0xf]
        %v2030 = vld [vmem:[%s265 + $0xd8] sm:$0xf]
        %v2031 = vld [vmem:[%s265 + $0xdc] sm:$0xf]
        %v2032 = vld [vmem:[%s265 + $0xe0] sm:$0xf]
        %v2033 = vld [vmem:[%s265 + $0xe4] sm:$0xf]
        %v2034 = vld [vmem:[%s265 + $0xe8] sm:$0xf]
        %v2035 = vld [vmem:[%s265 + $0xec] sm:$0xf]
        %v2036 = vld [vmem:[%s265 + $0xf0] sm:$0xf]
        %v2037 = vld [vmem:[%s265 + $0xf4] sm:$0xf]
        %v2038 = vld [vmem:[%s265 + $0xf8] sm:$0xf]
        %v2039 = vld [vmem:[%s265 + $0xfc] sm:$0xf]
        %v2040 = vld [vmem:[%s265 + $0x100] sm:$0xf]
        %v2041 = vld [vmem:[%s265 + $0x104] sm:$0xf]
        %v2042 = vld [vmem:[%s265 + $0x108] sm:$0xf]
        %v2043 = vld [vmem:[%s265 + $0x10c] sm:$0xf]
        %v2044 = vld [vmem:[%s265 + $0x110] sm:$0xf]
        %v2045 = vld [vmem:[%s265 + $0x114] sm:$0xf]
        %v2046 = vld [vmem:[%s265 + $0x118] sm:$0xf]
        %v2047 = vld [vmem:[%s265 + $0x11c] sm:$0xf]
        %v2048 = vld [vmem:[%s265 + $0x120] sm:$0xf]
        %v2049 = vld [vmem:[%s265 + $0x124] sm:$0xf]
        %v2050 = vld [vmem:[%s265 + $0x128] sm:$0xf]
        %v2051 = vld [vmem:[%s265 + $0x12c] sm:$0xf]
        %v2052 = vld [vmem:[%s265 + $0x130] sm:$0xf]
        %v2053 = vld [vmem:[%s265 + $0x134] sm:$0xf]
        %v2054 = vld [vmem:[%s265 + $0x138] sm:$0xf]
        %v2055 = vld [vmem:[%s265 + $0x13c] sm:$0xf]
        %v2056 = vld [vmem:[%s265 + $0x140] sm:$0xf]
        %v2057 = vld [vmem:[%s265 + $0x144] sm:$0xf]
        %v2058 = vld [vmem:[%s265 + $0x148] sm:$0xf]
        %v2059 = vld [vmem:[%s265 + $0x14c] sm:$0xf]
        %v2060 = vld [vmem:[%s265 + $0x150] sm:$0xf]
        %v2061 = vld [vmem:[%s265 + $0x154] sm:$0xf]
        %v2062 = vld [vmem:[%s265 + $0x158] sm:$0xf]
        %v2063 = vld [vmem:[%s265 + $0x15c] sm:$0xf]
        %v2064 = vld [vmem:[%s265 + $0x160] sm:$0xf]
        %v2065 = vld [vmem:[%s265 + $0x164] sm:$0xf]
        %v2066 = vld [vmem:[%s265 + $0x168] sm:$0xf]
        %v2067 = vld [vmem:[%s265 + $0x16c] sm:$0xf]
        %v2068 = vld [vmem:[%s265 + $0x170] sm:$0xf]
        %v2069 = vld [vmem:[%s265 + $0x174] sm:$0xf]
        %v2070 = vld [vmem:[%s265 + $0x178] sm:$0xf]
        %v2071 = vld [vmem:[%s265 + $0x17c] sm:$0xf]
        %v2072 = vld [vmem:[%s265 + $0x180] sm:$0xf]
        %v2073 = vld [vmem:[%s265 + $0x184] sm:$0xf]
        %v2074 = vld [vmem:[%s265 + $0x188] sm:$0xf]
        %v2075 = vld [vmem:[%s265 + $0x18c] sm:$0xf]
        %v2076 = vld [vmem:[%s265 + $0x190] sm:$0xf]
        %v2077 = vld [vmem:[%s265 + $0x194] sm:$0xf]
        %v2078 = vld [vmem:[%s265 + $0x198] sm:$0xf]
        %v2079 = vld [vmem:[%s265 + $0x19c] sm:$0xf]
        %v2080 = vld [vmem:[%s265 + $0x1a0] sm:$0xf]
        %v2081 = vld [vmem:[%s265 + $0x1a4] sm:$0xf]
        %v2082 = vld [vmem:[%s265 + $0x1a8] sm:$0xf]
        %v2083 = vld [vmem:[%s265 + $0x1ac] sm:$0xf]
        %v2084 = vld [vmem:[%s265 + $0x1b0] sm:$0xf]
        %v2085 = vld [vmem:[%s265 + $0x1b4] sm:$0xf]
        %v2086 = vld [vmem:[%s265 + $0x1b8] sm:$0xf]
        %v2087 = vld [vmem:[%s265 + $0x1bc] sm:$0xf]
        %v2088 = vld [vmem:[%s265 + $0x1c0] sm:$0xf]
        %v2089 = vld [vmem:[%s265 + $0x1c4] sm:$0xf]
        %v2090 = vld [vmem:[%s265 + $0x1c8] sm:$0xf]
        %v2091 = vld [vmem:[%s265 + $0x1cc] sm:$0xf]
        %v2092 = vld [vmem:[%s265 + $0x1d0] sm:$0xf]
        %v2093 = vld [vmem:[%s265 + $0x1d4] sm:$0xf]
        %v2094 = vld [vmem:[%s265 + $0x1d8] sm:$0xf]
        %v2095 = vld [vmem:[%s265 + $0x1dc] sm:$0xf]
        %v2096 = vld [vmem:[%s265 + $0x1e0] sm:$0xf]
        %v2097 = vld [vmem:[%s265 + $0x1e4] sm:$0xf]
        %v2098 = vld [vmem:[%s265 + $0x1e8] sm:$0xf]
        %v2099 = vld [vmem:[%s265 + $0x1ec] sm:$0xf]
        %v2100 = vld [vmem:[%s265 + $0x1f0] sm:$0xf]
        %v2101 = vld [vmem:[%s265 + $0x1f4] sm:$0xf]
        %v2102 = vld [vmem:[%s265 + $0x1f8] sm:$0xf]
        %v2103 = vld [vmem:[%s265 + $0x1fc] sm:$0xf]
        %v2104 = vld [vmem:[%s265 + $0x200] sm:$0xf]
        %v2105 = vld [vmem:[%s265 + $0x204] sm:$0xf]
        %v2106 = vld [vmem:[%s265 + $0x208] sm:$0xf]
        %v2107 = vld [vmem:[%s265 + $0x20c] sm:$0xf]
        %v2108 = vld [vmem:[%s265 + $0x210] sm:$0xf]
        %v2109 = vld [vmem:[%s265 + $0x214] sm:$0xf]
        %v2110 = vld [vmem:[%s265 + $0x218] sm:$0xf]
        %v2111 = vld [vmem:[%s265 + $0x21c] sm:$0xf]
        %v2112 = vld [vmem:[%s265 + $0x220] sm:$0xf]
        %v2113 = vld [vmem:[%s265 + $0x224] sm:$0xf]
        %v2114 = vld [vmem:[%s265 + $0x228] sm:$0xf]
        %v2115 = vld [vmem:[%s265 + $0x22c] sm:$0xf]
        %v2116 = vld [vmem:[%s265 + $0x230] sm:$0xf]
        %v2117 = vld [vmem:[%s265 + $0x234] sm:$0xf]
        %v2118 = vld [vmem:[%s265 + $0x238] sm:$0xf]
        %v2119 = vld [vmem:[%s265 + $0x23c] sm:$0xf]
        %v2264 = vunpack.c.l.b16 %v1976
        %v2265 = vunpack.c.l.b16 %v1977
        %v2266 = vunpack.c.l.b16 %v1978
        %v2267 = vunpack.c.l.b16 %v1979
        %v2268 = vunpack.c.l.b16 %v1980
        %v2269 = vunpack.c.l.b16 %v1981
        %v2270 = vunpack.c.l.b16 %v1982
        %v2271 = vunpack.c.l.b16 %v1983
        %v2272 = vunpack.c.l.b16 %v1984
        %v2273 = vunpack.c.l.b16 %v1985
        %v2274 = vunpack.c.l.b16 %v1986
        %v2275 = vunpack.c.l.b16 %v1987
        %v2276 = vunpack.c.l.b16 %v1988
        %v2277 = vunpack.c.l.b16 %v1989
        %v2278 = vunpack.c.l.b16 %v1990
        %v2279 = vunpack.c.l.b16 %v1991
        %v2280 = vunpack.c.l.b16 %v1992
        %v2281 = vunpack.c.l.b16 %v1993
        %v2282 = vunpack.c.l.b16 %v1994
        %v2283 = vunpack.c.l.b16 %v1995
        %v2284 = vunpack.c.l.b16 %v1996
        %v2285 = vunpack.c.l.b16 %v1997
        %v2286 = vunpack.c.l.b16 %v1998
        %v2287 = vunpack.c.l.b16 %v1999
        %v2288 = vunpack.c.l.b16 %v2000
        %v2289 = vunpack.c.l.b16 %v2001
        %v2290 = vunpack.c.l.b16 %v2002
        %v2291 = vunpack.c.l.b16 %v2003
        %v2292 = vunpack.c.l.b16 %v2004
        %v2293 = vunpack.c.l.b16 %v2005
        %v2294 = vunpack.c.l.b16 %v2006
        %v2295 = vunpack.c.l.b16 %v2007
        %v2296 = vunpack.c.l.b16 %v2008
        %v2297 = vunpack.c.l.b16 %v2009
        %v2298 = vunpack.c.l.b16 %v2010
        %v2299 = vunpack.c.l.b16 %v2011
        %v2300 = vunpack.c.l.b16 %v2012
        %v2301 = vunpack.c.l.b16 %v2013
        %v2302 = vunpack.c.l.b16 %v2014
        %v2303 = vunpack.c.l.b16 %v2015
        %v2304 = vunpack.c.l.b16 %v2016
        %v2305 = vunpack.c.l.b16 %v2017
        %v2306 = vunpack.c.l.b16 %v2018
        %v2307 = vunpack.c.l.b16 %v2019
        %v2308 = vunpack.c.l.b16 %v2020
        %v2309 = vunpack.c.l.b16 %v2021
        %v2310 = vunpack.c.l.b16 %v2022
        %v2311 = vunpack.c.l.b16 %v2023
        %v2312 = vunpack.c.l.b16 %v2024
        %v2313 = vunpack.c.l.b16 %v2025
        %v2314 = vunpack.c.l.b16 %v2026
        %v2315 = vunpack.c.l.b16 %v2027
        %v2316 = vunpack.c.l.b16 %v2028
        %v2317 = vunpack.c.l.b16 %v2029
        %v2318 = vunpack.c.l.b16 %v2030
        %v2319 = vunpack.c.l.b16 %v2031
        %v2320 = vunpack.c.l.b16 %v2032
        %v2321 = vunpack.c.l.b16 %v2033
        %v2322 = vunpack.c.l.b16 %v2034
        %v2323 = vunpack.c.l.b16 %v2035
        %v2324 = vunpack.c.l.b16 %v2036
        %v2325 = vunpack.c.l.b16 %v2037
        %v2326 = vunpack.c.l.b16 %v2038
        %v2327 = vunpack.c.l.b16 %v2039
        %v2328 = vunpack.c.l.b16 %v2040
        %v2329 = vunpack.c.l.b16 %v2041
        %v2330 = vunpack.c.l.b16 %v2042
        %v2331 = vunpack.c.l.b16 %v2043
        %v2332 = vunpack.c.l.b16 %v2044
        %v2333 = vunpack.c.l.b16 %v2045
        %v2334 = vunpack.c.l.b16 %v2046
        %v2335 = vunpack.c.l.b16 %v2047
        %v2336 = vunpack.c.l.b16 %v2048
        %v2337 = vunpack.c.l.b16 %v2049
        %v2338 = vunpack.c.l.b16 %v2050
        %v2339 = vunpack.c.l.b16 %v2051
        %v2340 = vunpack.c.l.b16 %v2052
        %v2341 = vunpack.c.l.b16 %v2053
        %v2342 = vunpack.c.l.b16 %v2054
        %v2343 = vunpack.c.l.b16 %v2055
        %v2344 = vunpack.c.l.b16 %v2056
        %v2345 = vunpack.c.l.b16 %v2057
        %v2346 = vunpack.c.l.b16 %v2058
        %v2347 = vunpack.c.l.b16 %v2059
        %v2348 = vunpack.c.l.b16 %v2060
        %v2349 = vunpack.c.l.b16 %v2061
        %v2350 = vunpack.c.l.b16 %v2062
        %v2351 = vunpack.c.l.b16 %v2063
        %v2352 = vunpack.c.l.b16 %v2064
        %v2353 = vunpack.c.l.b16 %v2065
        %v2354 = vunpack.c.l.b16 %v2066
        %v2355 = vunpack.c.l.b16 %v2067
        %v2356 = vunpack.c.l.b16 %v2068
        %v2357 = vunpack.c.l.b16 %v2069
        %v2358 = vunpack.c.l.b16 %v2070
        %v2359 = vunpack.c.l.b16 %v2071
        %v2360 = vunpack.c.l.b16 %v2072
        %v2361 = vunpack.c.l.b16 %v2073
        %v2362 = vunpack.c.l.b16 %v2074
        %v2363 = vunpack.c.l.b16 %v2075
        %v2364 = vunpack.c.l.b16 %v2076
        %v2365 = vunpack.c.l.b16 %v2077
        %v2366 = vunpack.c.l.b16 %v2078
        %v2367 = vunpack.c.l.b16 %v2079
        %v2368 = vunpack.c.l.b16 %v2080
        %v2369 = vunpack.c.l.b16 %v2081
        %v2370 = vunpack.c.l.b16 %v2082
        %v2371 = vunpack.c.l.b16 %v2083
        %v2372 = vunpack.c.l.b16 %v2084
        %v2373 = vunpack.c.l.b16 %v2085
        %v2374 = vunpack.c.l.b16 %v2086
        %v2375 = vunpack.c.l.b16 %v2087
        %v2376 = vunpack.c.l.b16 %v2088
        %v2377 = vunpack.c.l.b16 %v2089
        %v2378 = vunpack.c.l.b16 %v2090
        %v2379 = vunpack.c.l.b16 %v2091
        %v2380 = vunpack.c.l.b16 %v2092
        %v2381 = vunpack.c.l.b16 %v2093
        %v2382 = vunpack.c.l.b16 %v2094
        %v2383 = vunpack.c.l.b16 %v2095
        %v2384 = vunpack.c.l.b16 %v2096
        %v2385 = vunpack.c.l.b16 %v2097
        %v2386 = vunpack.c.l.b16 %v2098
        %v2387 = vunpack.c.l.b16 %v2099
        %v2388 = vunpack.c.l.b16 %v2100
        %v2389 = vunpack.c.l.b16 %v2101
        %v2390 = vunpack.c.l.b16 %v2102
        %v2391 = vunpack.c.l.b16 %v2103
        %v2392 = vunpack.c.l.b16 %v2104
        %v2393 = vunpack.c.l.b16 %v2105
        %v2394 = vunpack.c.l.b16 %v2106
        %v2395 = vunpack.c.l.b16 %v2107
        %v2396 = vunpack.c.l.b16 %v2108
        %v2397 = vunpack.c.l.b16 %v2109
        %v2398 = vunpack.c.l.b16 %v2110
        %v2399 = vunpack.c.l.b16 %v2111
        %v2400 = vunpack.c.l.b16 %v2112
        %v2401 = vunpack.c.l.b16 %v2113
        %v2402 = vunpack.c.l.b16 %v2114
        %v2403 = vunpack.c.l.b16 %v2115
        %v2404 = vunpack.c.l.b16 %v2116
        %v2405 = vunpack.c.l.b16 %v2117
        %v2406 = vunpack.c.l.b16 %v2118
        %v2407 = vunpack.c.l.b16 %v2119
        %v2408 = vpack.c.b16 %v2265, %v2264
        %v2409 = vpack.c.b16 %v2267, %v2266
        %v2410 = vpack.c.b16 %v2269, %v2268
        %v2411 = vpack.c.b16 %v2271, %v2270
        %v2412 = vpack.c.b16 %v2273, %v2272
        %v2413 = vpack.c.b16 %v2275, %v2274
        %v2414 = vpack.c.b16 %v2277, %v2276
        %v2415 = vpack.c.b16 %v2279, %v2278
        %v2416 = vpack.c.b16 %v2281, %v2280
        %v2417 = vpack.c.b16 %v2283, %v2282
        %v2418 = vpack.c.b16 %v2285, %v2284
        %v2419 = vpack.c.b16 %v2287, %v2286
        %v2420 = vpack.c.b16 %v2289, %v2288
        %v2421 = vpack.c.b16 %v2291, %v2290
        %v2422 = vpack.c.b16 %v2293, %v2292
        %v2423 = vpack.c.b16 %v2295, %v2294
        %v2424 = vpack.c.b16 %v2297, %v2296
        %v2425 = vpack.c.b16 %v2299, %v2298
        %v2426 = vpack.c.b16 %v2301, %v2300
        %v2427 = vpack.c.b16 %v2303, %v2302
        %v2428 = vpack.c.b16 %v2305, %v2304
        %v2429 = vpack.c.b16 %v2307, %v2306
        %v2430 = vpack.c.b16 %v2309, %v2308
        %v2431 = vpack.c.b16 %v2311, %v2310
        %v2432 = vpack.c.b16 %v2313, %v2312
        %v2433 = vpack.c.b16 %v2315, %v2314
        %v2434 = vpack.c.b16 %v2317, %v2316
        %v2435 = vpack.c.b16 %v2319, %v2318
        %v2436 = vpack.c.b16 %v2321, %v2320
        %v2437 = vpack.c.b16 %v2323, %v2322
        %v2438 = vpack.c.b16 %v2325, %v2324
        %v2439 = vpack.c.b16 %v2327, %v2326
        %v2440 = vpack.c.b16 %v2329, %v2328
        %v2441 = vpack.c.b16 %v2331, %v2330
        %v2442 = vpack.c.b16 %v2333, %v2332
        %v2443 = vpack.c.b16 %v2335, %v2334
        %v2444 = vpack.c.b16 %v2337, %v2336
        %v2445 = vpack.c.b16 %v2339, %v2338
        %v2446 = vpack.c.b16 %v2341, %v2340
        %v2447 = vpack.c.b16 %v2343, %v2342
        %v2448 = vpack.c.b16 %v2345, %v2344
        %v2449 = vpack.c.b16 %v2347, %v2346
        %v2450 = vpack.c.b16 %v2349, %v2348
        %v2451 = vpack.c.b16 %v2351, %v2350
        %v2452 = vpack.c.b16 %v2353, %v2352
        %v2453 = vpack.c.b16 %v2355, %v2354
        %v2454 = vpack.c.b16 %v2357, %v2356
        %v2455 = vpack.c.b16 %v2359, %v2358
        %v2456 = vpack.c.b16 %v2361, %v2360
        %v2457 = vpack.c.b16 %v2363, %v2362
        %v2458 = vpack.c.b16 %v2365, %v2364
        %v2459 = vpack.c.b16 %v2367, %v2366
        %v2460 = vpack.c.b16 %v2369, %v2368
        %v2461 = vpack.c.b16 %v2371, %v2370
        %v2462 = vpack.c.b16 %v2373, %v2372
        %v2463 = vpack.c.b16 %v2375, %v2374
        %v2464 = vpack.c.b16 %v2377, %v2376
        %v2465 = vpack.c.b16 %v2379, %v2378
        %v2466 = vpack.c.b16 %v2381, %v2380
        %v2467 = vpack.c.b16 %v2383, %v2382
        %v2468 = vpack.c.b16 %v2385, %v2384
        %v2469 = vpack.c.b16 %v2387, %v2386
        %v2470 = vpack.c.b16 %v2389, %v2388
        %v2471 = vpack.c.b16 %v2391, %v2390
        %v2472 = vpack.c.b16 %v2393, %v2392
        %v2473 = vpack.c.b16 %v2395, %v2394
        %v2474 = vpack.c.b16 %v2397, %v2396
        %v2475 = vpack.c.b16 %v2399, %v2398
        %v2476 = vpack.c.b16 %v2401, %v2400
        %v2477 = vpack.c.b16 %v2403, %v2402
        %v2478 = vpack.c.b16 %v2405, %v2404
        %v2479 = vpack.c.b16 %v2407, %v2406
        %2552 = vmatpush.bf16.msra.mxu0 %v2415
        %2553 = vmatpush.bf16.msra.mxu0 %v2414
        %2554 = vmatpush.bf16.msra.mxu0 %v2413
        %2555 = vmatpush.bf16.msra.mxu0 %v2412
        %2556 = vmatpush.bf16.msra.mxu0 %v2411
        %2557 = vmatpush.bf16.msra.mxu0 %v2410
        %2558 = vmatpush.bf16.msra.mxu0 %v2409
        %2559 = vmatpush.bf16.msra.mxu0 %v2408
        %2560 = vmatmul.bf16.gmra.mxu0 %v1608
        %v2561 = vpop.f32.mrf.mxu0
        %v2562 = vadd.f32 0.0, %v2561
        %v2563 = vpop.f32.mrf.mxu0
        %v2564 = vadd.f32 0.0, %v2563
        %2565 = vmatmul.bf16.gmra.mxu0 %v1609
        %v2566 = vpop.f32.mrf.mxu0
        %v2567 = vadd.f32 0.0, %v2566
        %v2568 = vpop.f32.mrf.mxu0
        %v2569 = vadd.f32 0.0, %v2568
        %2570 = vmatmul.bf16.gmra.mxu0 %v1610
        %v2571 = vpop.f32.mrf.mxu0
        %v2572 = vadd.f32 0.0, %v2571
        %v2573 = vpop.f32.mrf.mxu0
        %v2574 = vadd.f32 0.0, %v2573
        %2575 = vmatmul.bf16.gmra.mxu0 %v1611
        %v2576 = vpop.f32.mrf.mxu0
        %v2577 = vadd.f32 0.0, %v2576
        %v2578 = vpop.f32.mrf.mxu0
        %v2579 = vadd.f32 0.0, %v2578
        %2580 = vmatmul.bf16.gmra.mxu0 %v1612
        %v2581 = vpop.f32.mrf.mxu0
        %v2582 = vadd.f32 0.0, %v2581
        %v2583 = vpop.f32.mrf.mxu0
        %v2584 = vadd.f32 0.0, %v2583
        %2585 = vmatmul.bf16.gmra.mxu0 %v1613
        %v2586 = vpop.f32.mrf.mxu0
        %v2587 = vadd.f32 0.0, %v2586
        %v2588 = vpop.f32.mrf.mxu0
        %v2589 = vadd.f32 0.0, %v2588
        %2590 = vmatmul.bf16.gmra.mxu0 %v1614
        %v2591 = vpop.f32.mrf.mxu0
        %v2592 = vadd.f32 0.0, %v2591
        %v2593 = vpop.f32.mrf.mxu0
        %v2594 = vadd.f32 0.0, %v2593
        %2595 = vmatmul.bf16.gmra.mxu0 %v1615
        %v2596 = vpop.f32.mrf.mxu0
        %v2597 = vadd.f32 0.0, %v2596
        %v2598 = vpop.f32.mrf.mxu0
        %v2599 = vadd.f32 0.0, %v2598
        %2600 = vmatmul.bf16.gmra.mxu0 %v1616
        %v2601 = vpop.f32.mrf.mxu0
        %v2602 = vadd.f32 0.0, %v2601
        %v2603 = vpop.f32.mrf.mxu0
        %v2604 = vadd.f32 0.0, %v2603
        %2605 = vmatmul.bf16.gmra.mxu0 %v1617
        %v2606 = vpop.f32.mrf.mxu0
        %v2607 = vadd.f32 0.0, %v2606
        %v2608 = vpop.f32.mrf.mxu0
        %v2609 = vadd.f32 0.0, %v2608
        %2610 = vmatmul.bf16.gmra.mxu0 %v1618
        %v2611 = vpop.f32.mrf.mxu0
        %v2612 = vadd.f32 0.0, %v2611
        %v2613 = vpop.f32.mrf.mxu0
        %v2614 = vadd.f32 0.0, %v2613
        %2615 = vmatmul.bf16.gmra.mxu0 %v1619
        %v2616 = vpop.f32.mrf.mxu0
        %v2617 = vadd.f32 0.0, %v2616
        %v2618 = vpop.f32.mrf.mxu0
        %v2619 = vadd.f32 0.0, %v2618
        %2620 = vmatmul.bf16.gmra.mxu0 %v1620
        %v2621 = vpop.f32.mrf.mxu0
        %v2622 = vadd.f32 0.0, %v2621
        %v2623 = vpop.f32.mrf.mxu0
        %v2624 = vadd.f32 0.0, %v2623
        %2625 = vmatmul.bf16.gmra.mxu0 %v1621
        %v2626 = vpop.f32.mrf.mxu0
        %v2627 = vadd.f32 0.0, %v2626
        %v2628 = vpop.f32.mrf.mxu0
        %v2629 = vadd.f32 0.0, %v2628
        %2630 = vmatmul.bf16.gmra.mxu0 %v1622
        %v2631 = vpop.f32.mrf.mxu0
        %v2632 = vadd.f32 0.0, %v2631
        %v2633 = vpop.f32.mrf.mxu0
        %v2634 = vadd.f32 0.0, %v2633
        %2635 = vmatmul.bf16.gmra.mxu0 %v1623
        %v2636 = vpop.f32.mrf.mxu0
        %v2637 = vadd.f32 0.0, %v2636
        %v2638 = vpop.f32.mrf.mxu0
        %v2639 = vadd.f32 0.0, %v2638
        %2640 = vmatmul.bf16.gmra.mxu0 %v1624
        %v2641 = vpop.f32.mrf.mxu0
        %v2642 = vadd.f32 0.0, %v2641
        %v2643 = vpop.f32.mrf.mxu0
        %v2644 = vadd.f32 0.0, %v2643
        %2645 = vmatmul.bf16.gmra.mxu0 %v1625
        %v2646 = vpop.f32.mrf.mxu0
        %v2647 = vadd.f32 0.0, %v2646
        %v2648 = vpop.f32.mrf.mxu0
        %v2649 = vadd.f32 0.0, %v2648
        %2650 = vmatmul.bf16.gmra.mxu0 %v1626
        %v2651 = vpop.f32.mrf.mxu0
        %v2652 = vadd.f32 0.0, %v2651
        %v2653 = vpop.f32.mrf.mxu0
        %v2654 = vadd.f32 0.0, %v2653
        %2655 = vmatmul.bf16.gmra.mxu0 %v1627
        %v2656 = vpop.f32.mrf.mxu0
        %v2657 = vadd.f32 0.0, %v2656
        %v2658 = vpop.f32.mrf.mxu0
        %v2659 = vadd.f32 0.0, %v2658
        %2660 = vmatmul.bf16.gmra.mxu0 %v1628
        %v2661 = vpop.f32.mrf.mxu0
        %v2662 = vadd.f32 0.0, %v2661
        %v2663 = vpop.f32.mrf.mxu0
        %v2664 = vadd.f32 0.0, %v2663
        %2665 = vmatmul.bf16.gmra.mxu0 %v1629
        %v2666 = vpop.f32.mrf.mxu0
        %v2667 = vadd.f32 0.0, %v2666
        %v2668 = vpop.f32.mrf.mxu0
        %v2669 = vadd.f32 0.0, %v2668
        %2670 = vmatmul.bf16.gmra.mxu0 %v1630
        %v2671 = vpop.f32.mrf.mxu0
        %v2672 = vadd.f32 0.0, %v2671
        %v2673 = vpop.f32.mrf.mxu0
        %v2674 = vadd.f32 0.0, %v2673
        %2675 = vmatmul.bf16.gmra.mxu0 %v1631
        %v2676 = vpop.f32.mrf.mxu0
        %v2677 = vadd.f32 0.0, %v2676
        %v2678 = vpop.f32.mrf.mxu0
        %v2679 = vadd.f32 0.0, %v2678
        %2680 = vmatmul.bf16.gmra.mxu0 %v1632
        %v2681 = vpop.f32.mrf.mxu0
        %v2682 = vadd.f32 0.0, %v2681
        %v2683 = vpop.f32.mrf.mxu0
        %v2684 = vadd.f32 0.0, %v2683
        %2685 = vmatmul.bf16.gmra.mxu0 %v1633
        %v2686 = vpop.f32.mrf.mxu0
        %v2687 = vadd.f32 0.0, %v2686
        %v2688 = vpop.f32.mrf.mxu0
        %v2689 = vadd.f32 0.0, %v2688
        %2690 = vmatmul.bf16.gmra.mxu0 %v1634
        %v2691 = vpop.f32.mrf.mxu0
        %v2692 = vadd.f32 0.0, %v2691
        %v2693 = vpop.f32.mrf.mxu0
        %v2694 = vadd.f32 0.0, %v2693
        %2695 = vmatmul.bf16.gmra.mxu0 %v1635
        %v2696 = vpop.f32.mrf.mxu0
        %v2697 = vadd.f32 0.0, %v2696
        %v2698 = vpop.f32.mrf.mxu0
        %v2699 = vadd.f32 0.0, %v2698
        %2700 = vmatmul.bf16.gmra.mxu0 %v1636
        %v2701 = vpop.f32.mrf.mxu0
        %v2702 = vadd.f32 0.0, %v2701
        %v2703 = vpop.f32.mrf.mxu0
        %v2704 = vadd.f32 0.0, %v2703
        %2705 = vmatmul.bf16.gmra.mxu0 %v1637
        %v2706 = vpop.f32.mrf.mxu0
        %v2707 = vadd.f32 0.0, %v2706
        %v2708 = vpop.f32.mrf.mxu0
        %v2709 = vadd.f32 0.0, %v2708
        %2710 = vmatmul.bf16.gmra.mxu0 %v1638
        %v2711 = vpop.f32.mrf.mxu0
        %v2712 = vadd.f32 0.0, %v2711
        %v2713 = vpop.f32.mrf.mxu0
        %v2714 = vadd.f32 0.0, %v2713
        %2715 = vmatmul.bf16.gmra.mxu0 %v1639
        %v2716 = vpop.f32.mrf.mxu0
        %v2717 = vadd.f32 0.0, %v2716
        %v2718 = vpop.f32.mrf.mxu0
        %v2719 = vadd.f32 0.0, %v2718
        %2720 = vdwg.mxu0
        %2721 = vmatpush.bf16.msra.mxu0 %v2423
        %2722 = vmatpush.bf16.msra.mxu0 %v2422
        %2723 = vmatpush.bf16.msra.mxu0 %v2421
        %2724 = vmatpush.bf16.msra.mxu0 %v2420
        %2725 = vmatpush.bf16.msra.mxu0 %v2419
        %2726 = vmatpush.bf16.msra.mxu0 %v2418
        %2727 = vmatpush.bf16.msra.mxu0 %v2417
        %2728 = vmatpush.bf16.msra.mxu0 %v2416
        %2729 = vmatmul.bf16.gmra.mxu0 %v1736
        %v2730 = vpop.f32.mrf.mxu0
        %v2731 = vadd.f32 %v2562, %v2730
        %v2732 = vpop.f32.mrf.mxu0
        %v2733 = vadd.f32 %v2564, %v2732
        %2734 = vmatmul.bf16.gmra.mxu0 %v1737
        %v2735 = vpop.f32.mrf.mxu0
        %v2736 = vadd.f32 %v2567, %v2735
        %v2737 = vpop.f32.mrf.mxu0
        %v2738 = vadd.f32 %v2569, %v2737
        %2739 = vmatmul.bf16.gmra.mxu0 %v1738
        %v2740 = vpop.f32.mrf.mxu0
        %v2741 = vadd.f32 %v2572, %v2740
        %v2742 = vpop.f32.mrf.mxu0
        %v2743 = vadd.f32 %v2574, %v2742
        %2744 = vmatmul.bf16.gmra.mxu0 %v1739
        %v2745 = vpop.f32.mrf.mxu0
        %v2746 = vadd.f32 %v2577, %v2745
        %v2747 = vpop.f32.mrf.mxu0
        %v2748 = vadd.f32 %v2579, %v2747
        %2749 = vmatmul.bf16.gmra.mxu0 %v1740
        %v2750 = vpop.f32.mrf.mxu0
        %v2751 = vadd.f32 %v2582, %v2750
        %v2752 = vpop.f32.mrf.mxu0
        %v2753 = vadd.f32 %v2584, %v2752
        %2754 = vmatmul.bf16.gmra.mxu0 %v1741
        %v2755 = vpop.f32.mrf.mxu0
        %v2756 = vadd.f32 %v2587, %v2755
        %v2757 = vpop.f32.mrf.mxu0
        %v2758 = vadd.f32 %v2589, %v2757
        %2759 = vmatmul.bf16.gmra.mxu0 %v1742
        %v2760 = vpop.f32.mrf.mxu0
        %v2761 = vadd.f32 %v2592, %v2760
        %v2762 = vpop.f32.mrf.mxu0
        %v2763 = vadd.f32 %v2594, %v2762
        %2764 = vmatmul.bf16.gmra.mxu0 %v1743
        %v2765 = vpop.f32.mrf.mxu0
        %v2766 = vadd.f32 %v2597, %v2765
        %v2767 = vpop.f32.mrf.mxu0
        %v2768 = vadd.f32 %v2599, %v2767
        %2769 = vmatmul.bf16.gmra.mxu0 %v1744
        %v2770 = vpop.f32.mrf.mxu0
        %v2771 = vadd.f32 %v2602, %v2770
        %v2772 = vpop.f32.mrf.mxu0
        %v2773 = vadd.f32 %v2604, %v2772
        %2774 = vmatmul.bf16.gmra.mxu0 %v1745
        %v2775 = vpop.f32.mrf.mxu0
        %v2776 = vadd.f32 %v2607, %v2775
        %v2777 = vpop.f32.mrf.mxu0
        %v2778 = vadd.f32 %v2609, %v2777
        %2779 = vmatmul.bf16.gmra.mxu0 %v1746
        %v2780 = vpop.f32.mrf.mxu0
        %v2781 = vadd.f32 %v2612, %v2780
        %v2782 = vpop.f32.mrf.mxu0
        %v2783 = vadd.f32 %v2614, %v2782
        %2784 = vmatmul.bf16.gmra.mxu0 %v1747
        %v2785 = vpop.f32.mrf.mxu0
        %v2786 = vadd.f32 %v2617, %v2785
        %v2787 = vpop.f32.mrf.mxu0
        %v2788 = vadd.f32 %v2619, %v2787
        %2789 = vmatmul.bf16.gmra.mxu0 %v1748
        %v2790 = vpop.f32.mrf.mxu0
        %v2791 = vadd.f32 %v2622, %v2790
        %v2792 = vpop.f32.mrf.mxu0
        %v2793 = vadd.f32 %v2624, %v2792
        %2794 = vmatmul.bf16.gmra.mxu0 %v1749
        %v2795 = vpop.f32.mrf.mxu0
        %v2796 = vadd.f32 %v2627, %v2795
        %v2797 = vpop.f32.mrf.mxu0
        %v2798 = vadd.f32 %v2629, %v2797
        %2799 = vmatmul.bf16.gmra.mxu0 %v1750
        %v2800 = vpop.f32.mrf.mxu0
        %v2801 = vadd.f32 %v2632, %v2800
        %v2802 = vpop.f32.mrf.mxu0
        %v2803 = vadd.f32 %v2634, %v2802
        %2804 = vmatmul.bf16.gmra.mxu0 %v1751
        %v2805 = vpop.f32.mrf.mxu0
        %v2806 = vadd.f32 %v2637, %v2805
        %v2807 = vpop.f32.mrf.mxu0
        %v2808 = vadd.f32 %v2639, %v2807
        %2809 = vmatmul.bf16.gmra.mxu0 %v1752
        %v2810 = vpop.f32.mrf.mxu0
        %v2811 = vadd.f32 %v2642, %v2810
        %v2812 = vpop.f32.mrf.mxu0
        %v2813 = vadd.f32 %v2644, %v2812
        %2814 = vmatmul.bf16.gmra.mxu0 %v1753
        %v2815 = vpop.f32.mrf.mxu0
        %v2816 = vadd.f32 %v2647, %v2815
        %v2817 = vpop.f32.mrf.mxu0
        %v2818 = vadd.f32 %v2649, %v2817
        %2819 = vmatmul.bf16.gmra.mxu0 %v1754
        %v2820 = vpop.f32.mrf.mxu0
        %v2821 = vadd.f32 %v2652, %v2820
        %v2822 = vpop.f32.mrf.mxu0
        %v2823 = vadd.f32 %v2654, %v2822
        %2824 = vmatmul.bf16.gmra.mxu0 %v1755
        %v2825 = vpop.f32.mrf.mxu0
        %v2826 = vadd.f32 %v2657, %v2825
        %v2827 = vpop.f32.mrf.mxu0
        %v2828 = vadd.f32 %v2659, %v2827
        %2829 = vmatmul.bf16.gmra.mxu0 %v1756
        %v2830 = vpop.f32.mrf.mxu0
        %v2831 = vadd.f32 %v2662, %v2830
        %v2832 = vpop.f32.mrf.mxu0
        %v2833 = vadd.f32 %v2664, %v2832
        %2834 = vmatmul.bf16.gmra.mxu0 %v1757
        %v2835 = vpop.f32.mrf.mxu0
        %v2836 = vadd.f32 %v2667, %v2835
        %v2837 = vpop.f32.mrf.mxu0
        %v2838 = vadd.f32 %v2669, %v2837
        %2839 = vmatmul.bf16.gmra.mxu0 %v1758
        %v2840 = vpop.f32.mrf.mxu0
        %v2841 = vadd.f32 %v2672, %v2840
        %v2842 = vpop.f32.mrf.mxu0
        %v2843 = vadd.f32 %v2674, %v2842
        %2844 = vmatmul.bf16.gmra.mxu0 %v1759
        %v2845 = vpop.f32.mrf.mxu0
        %v2846 = vadd.f32 %v2677, %v2845
        %v2847 = vpop.f32.mrf.mxu0
        %v2848 = vadd.f32 %v2679, %v2847
        %2849 = vmatmul.bf16.gmra.mxu0 %v1760
        %v2850 = vpop.f32.mrf.mxu0
        %v2851 = vadd.f32 %v2682, %v2850
        %v2852 = vpop.f32.mrf.mxu0
        %v2853 = vadd.f32 %v2684, %v2852
        %2854 = vmatmul.bf16.gmra.mxu0 %v1761
        %v2855 = vpop.f32.mrf.mxu0
        %v2856 = vadd.f32 %v2687, %v2855
        %v2857 = vpop.f32.mrf.mxu0
        %v2858 = vadd.f32 %v2689, %v2857
        %2859 = vmatmul.bf16.gmra.mxu0 %v1762
        %v2860 = vpop.f32.mrf.mxu0
        %v2861 = vadd.f32 %v2692, %v2860
        %v2862 = vpop.f32.mrf.mxu0
        %v2863 = vadd.f32 %v2694, %v2862
        %2864 = vmatmul.bf16.gmra.mxu0 %v1763
        %v2865 = vpop.f32.mrf.mxu0
        %v2866 = vadd.f32 %v2697, %v2865
        %v2867 = vpop.f32.mrf.mxu0
        %v2868 = vadd.f32 %v2699, %v2867
        %2869 = vmatmul.bf16.gmra.mxu0 %v1764
        %v2870 = vpop.f32.mrf.mxu0
        %v2871 = vadd.f32 %v2702, %v2870
        %v2872 = vpop.f32.mrf.mxu0
        %v2873 = vadd.f32 %v2704, %v2872
        %2874 = vmatmul.bf16.gmra.mxu0 %v1765
        %v2875 = vpop.f32.mrf.mxu0
        %v2876 = vadd.f32 %v2707, %v2875
        %v2877 = vpop.f32.mrf.mxu0
        %v2878 = vadd.f32 %v2709, %v2877
        %2879 = vmatmul.bf16.gmra.mxu0 %v1766
        %v2880 = vpop.f32.mrf.mxu0
        %v2881 = vadd.f32 %v2712, %v2880
        %v2882 = vpop.f32.mrf.mxu0
        %v2883 = vadd.f32 %v2714, %v2882
        %2884 = vmatmul.bf16.gmra.mxu0 %v1767
        %v2885 = vpop.f32.mrf.mxu0
        %v2886 = vadd.f32 %v2717, %v2885
        %v2887 = vpop.f32.mrf.mxu0
        %v2888 = vadd.f32 %v2719, %v2887
        %2889 = vdwg.mxu0
        %2890 = vmatpush.bf16.msra.mxu0 %v2431
        %2891 = vmatpush.bf16.msra.mxu0 %v2430
        %2892 = vmatpush.bf16.msra.mxu0 %v2429
        %2893 = vmatpush.bf16.msra.mxu0 %v2428
        %2894 = vmatpush.bf16.msra.mxu0 %v2427
        %2895 = vmatpush.bf16.msra.mxu0 %v2426
        %2896 = vmatpush.bf16.msra.mxu0 %v2425
        %2897 = vmatpush.bf16.msra.mxu0 %v2424
        %2898 = vmatmul.bf16.gmra.mxu0 %v1864
        %v2899 = vpop.f32.mrf.mxu0
        %v2900 = vadd.f32 %v2731, %v2899
        %v2901 = vpop.f32.mrf.mxu0
        %v2902 = vadd.f32 %v2733, %v2901
        %2903 = vmatmul.bf16.gmra.mxu0 %v1865
        %v2904 = vpop.f32.mrf.mxu0
        %v2905 = vadd.f32 %v2736, %v2904
        %v2906 = vpop.f32.mrf.mxu0
        %v2907 = vadd.f32 %v2738, %v2906
        %2908 = vmatmul.bf16.gmra.mxu0 %v1866
        %v2909 = vpop.f32.mrf.mxu0
        %v2910 = vadd.f32 %v2741, %v2909
        %v2911 = vpop.f32.mrf.mxu0
        %v2912 = vadd.f32 %v2743, %v2911
        %2913 = vmatmul.bf16.gmra.mxu0 %v1867
        %v2914 = vpop.f32.mrf.mxu0
        %v2915 = vadd.f32 %v2746, %v2914
        %v2916 = vpop.f32.mrf.mxu0
        %v2917 = vadd.f32 %v2748, %v2916
        %2918 = vmatmul.bf16.gmra.mxu0 %v1868
        %v2919 = vpop.f32.mrf.mxu0
        %v2920 = vadd.f32 %v2751, %v2919
        %v2921 = vpop.f32.mrf.mxu0
        %v2922 = vadd.f32 %v2753, %v2921
        %2923 = vmatmul.bf16.gmra.mxu0 %v1869
        %v2924 = vpop.f32.mrf.mxu0
        %v2925 = vadd.f32 %v2756, %v2924
        %v2926 = vpop.f32.mrf.mxu0
        %v2927 = vadd.f32 %v2758, %v2926
        %2928 = vmatmul.bf16.gmra.mxu0 %v1870
        %v2929 = vpop.f32.mrf.mxu0
        %v2930 = vadd.f32 %v2761, %v2929
        %v2931 = vpop.f32.mrf.mxu0
        %v2932 = vadd.f32 %v2763, %v2931
        %2933 = vmatmul.bf16.gmra.mxu0 %v1871
        %v2934 = vpop.f32.mrf.mxu0
        %v2935 = vadd.f32 %v2766, %v2934
        %v2936 = vpop.f32.mrf.mxu0
        %v2937 = vadd.f32 %v2768, %v2936
        %2938 = vmatmul.bf16.gmra.mxu0 %v1872
        %v2939 = vpop.f32.mrf.mxu0
        %v2940 = vadd.f32 %v2771, %v2939
        %v2941 = vpop.f32.mrf.mxu0
        %v2942 = vadd.f32 %v2773, %v2941
        %2943 = vmatmul.bf16.gmra.mxu0 %v1873
        %v2944 = vpop.f32.mrf.mxu0
        %v2945 = vadd.f32 %v2776, %v2944
        %v2946 = vpop.f32.mrf.mxu0
        %v2947 = vadd.f32 %v2778, %v2946
        %2948 = vmatmul.bf16.gmra.mxu0 %v1874
        %v2949 = vpop.f32.mrf.mxu0
        %v2950 = vadd.f32 %v2781, %v2949
        %v2951 = vpop.f32.mrf.mxu0
        %v2952 = vadd.f32 %v2783, %v2951
        %2953 = vmatmul.bf16.gmra.mxu0 %v1875
        %v2954 = vpop.f32.mrf.mxu0
        %v2955 = vadd.f32 %v2786, %v2954
        %v2956 = vpop.f32.mrf.mxu0
        %v2957 = vadd.f32 %v2788, %v2956
        %2958 = vmatmul.bf16.gmra.mxu0 %v1876
        %v2959 = vpop.f32.mrf.mxu0
        %v2960 = vadd.f32 %v2791, %v2959
        %v2961 = vpop.f32.mrf.mxu0
        %v2962 = vadd.f32 %v2793, %v2961
        %2963 = vmatmul.bf16.gmra.mxu0 %v1877
        %v2964 = vpop.f32.mrf.mxu0
        %v2965 = vadd.f32 %v2796, %v2964
        %v2966 = vpop.f32.mrf.mxu0
        %v2967 = vadd.f32 %v2798, %v2966
        %2968 = vmatmul.bf16.gmra.mxu0 %v1878
        %v2969 = vpop.f32.mrf.mxu0
        %v2970 = vadd.f32 %v2801, %v2969
        %v2971 = vpop.f32.mrf.mxu0
        %v2972 = vadd.f32 %v2803, %v2971
        %2973 = vmatmul.bf16.gmra.mxu0 %v1879
        %v2974 = vpop.f32.mrf.mxu0
        %v2975 = vadd.f32 %v2806, %v2974
        %v2976 = vpop.f32.mrf.mxu0
        %v2977 = vadd.f32 %v2808, %v2976
        %2978 = vmatmul.bf16.gmra.mxu0 %v1880
        %v2979 = vpop.f32.mrf.mxu0
        %v2980 = vadd.f32 %v2811, %v2979
        %v2981 = vpop.f32.mrf.mxu0
        %v2982 = vadd.f32 %v2813, %v2981
        %2983 = vmatmul.bf16.gmra.mxu0 %v1881
        %v2984 = vpop.f32.mrf.mxu0
        %v2985 = vadd.f32 %v2816, %v2984
        %v2986 = vpop.f32.mrf.mxu0
        %v2987 = vadd.f32 %v2818, %v2986
        %2988 = vmatmul.bf16.gmra.mxu0 %v1882
        %v2989 = vpop.f32.mrf.mxu0
        %v2990 = vadd.f32 %v2821, %v2989
        %v2991 = vpop.f32.mrf.mxu0
        %v2992 = vadd.f32 %v2823, %v2991
        %2993 = vmatmul.bf16.gmra.mxu0 %v1883
        %v2994 = vpop.f32.mrf.mxu0
        %v2995 = vadd.f32 %v2826, %v2994
        %v2996 = vpop.f32.mrf.mxu0
        %v2997 = vadd.f32 %v2828, %v2996
        %2998 = vmatmul.bf16.gmra.mxu0 %v1884
        %v2999 = vpop.f32.mrf.mxu0
        %v3000 = vadd.f32 %v2831, %v2999
        %v3001 = vpop.f32.mrf.mxu0
        %v3002 = vadd.f32 %v2833, %v3001
        %3003 = vmatmul.bf16.gmra.mxu0 %v1885
        %v3004 = vpop.f32.mrf.mxu0
        %v3005 = vadd.f32 %v2836, %v3004
        %v3006 = vpop.f32.mrf.mxu0
        %v3007 = vadd.f32 %v2838, %v3006
        %3008 = vmatmul.bf16.gmra.mxu0 %v1886
        %v3009 = vpop.f32.mrf.mxu0
        %v3010 = vadd.f32 %v2841, %v3009
        %v3011 = vpop.f32.mrf.mxu0
        %v3012 = vadd.f32 %v2843, %v3011
        %3013 = vmatmul.bf16.gmra.mxu0 %v1887
        %v3014 = vpop.f32.mrf.mxu0
        %v3015 = vadd.f32 %v2846, %v3014
        %v3016 = vpop.f32.mrf.mxu0
        %v3017 = vadd.f32 %v2848, %v3016
        %3018 = vmatmul.bf16.gmra.mxu0 %v1888
        %v3019 = vpop.f32.mrf.mxu0
        %v3020 = vadd.f32 %v2851, %v3019
        %v3021 = vpop.f32.mrf.mxu0
        %v3022 = vadd.f32 %v2853, %v3021
        %3023 = vmatmul.bf16.gmra.mxu0 %v1889
        %v3024 = vpop.f32.mrf.mxu0
        %v3025 = vadd.f32 %v2856, %v3024
        %v3026 = vpop.f32.mrf.mxu0
        %v3027 = vadd.f32 %v2858, %v3026
        %3028 = vmatmul.bf16.gmra.mxu0 %v1890
        %v3029 = vpop.f32.mrf.mxu0
        %v3030 = vadd.f32 %v2861, %v3029
        %v3031 = vpop.f32.mrf.mxu0
        %v3032 = vadd.f32 %v2863, %v3031
        %3033 = vmatmul.bf16.gmra.mxu0 %v1891
        %v3034 = vpop.f32.mrf.mxu0
        %v3035 = vadd.f32 %v2866, %v3034
        %v3036 = vpop.f32.mrf.mxu0
        %v3037 = vadd.f32 %v2868, %v3036
        %3038 = vmatmul.bf16.gmra.mxu0 %v1892
        %v3039 = vpop.f32.mrf.mxu0
        %v3040 = vadd.f32 %v2871, %v3039
        %v3041 = vpop.f32.mrf.mxu0
        %v3042 = vadd.f32 %v2873, %v3041
        %3043 = vmatmul.bf16.gmra.mxu0 %v1893
        %v3044 = vpop.f32.mrf.mxu0
        %v3045 = vadd.f32 %v2876, %v3044
        %v3046 = vpop.f32.mrf.mxu0
        %v3047 = vadd.f32 %v2878, %v3046
        %3048 = vmatmul.bf16.gmra.mxu0 %v1894
        %v3049 = vpop.f32.mrf.mxu0
        %v3050 = vadd.f32 %v2881, %v3049
        %v3051 = vpop.f32.mrf.mxu0
        %v3052 = vadd.f32 %v2883, %v3051
        %3053 = vmatmul.bf16.gmra.mxu0 %v1895
        %v3054 = vpop.f32.mrf.mxu0
        %v3055 = vadd.f32 %v2886, %v3054
        %v3056 = vpop.f32.mrf.mxu0
        %v3057 = vadd.f32 %v2888, %v3056
        %3058 = vdwg.mxu0
        %3059 = vmatpush.bf16.msra.mxu0 %v2439
        %3060 = vmatpush.bf16.msra.mxu0 %v2438
        %3061 = vmatpush.bf16.msra.mxu0 %v2437
        %3062 = vmatpush.bf16.msra.mxu0 %v2436
        %3063 = vmatpush.bf16.msra.mxu0 %v2435
        %3064 = vmatpush.bf16.msra.mxu0 %v2434
        %3065 = vmatpush.bf16.msra.mxu0 %v2433
        %3066 = vmatpush.bf16.msra.mxu0 %v2432
        %3067 = vmatmul.bf16.gmra.mxu0 %v1610
        %v3068 = vpop.f32.mrf.mxu0
        %v3069 = vadd.f32 %v2900, %v3068
        %v3070 = vpop.f32.mrf.mxu0
        %v3071 = vadd.f32 %v2902, %v3070
        %3072 = vmatmul.bf16.gmra.mxu0 %v1611
        %v3073 = vpop.f32.mrf.mxu0
        %v3074 = vadd.f32 %v2905, %v3073
        %v3075 = vpop.f32.mrf.mxu0
        %v3076 = vadd.f32 %v2907, %v3075
        %3077 = vmatmul.bf16.gmra.mxu0 %v1612
        %v3078 = vpop.f32.mrf.mxu0
        %v3079 = vadd.f32 %v2910, %v3078
        %v3080 = vpop.f32.mrf.mxu0
        %v3081 = vadd.f32 %v2912, %v3080
        %3082 = vmatmul.bf16.gmra.mxu0 %v1613
        %v3083 = vpop.f32.mrf.mxu0
        %v3084 = vadd.f32 %v2915, %v3083
        %v3085 = vpop.f32.mrf.mxu0
        %v3086 = vadd.f32 %v2917, %v3085
        %3087 = vmatmul.bf16.gmra.mxu0 %v1614
        %v3088 = vpop.f32.mrf.mxu0
        %v3089 = vadd.f32 %v2920, %v3088
        %v3090 = vpop.f32.mrf.mxu0
        %v3091 = vadd.f32 %v2922, %v3090
        %3092 = vmatmul.bf16.gmra.mxu0 %v1615
        %v3093 = vpop.f32.mrf.mxu0
        %v3094 = vadd.f32 %v2925, %v3093
        %v3095 = vpop.f32.mrf.mxu0
        %v3096 = vadd.f32 %v2927, %v3095
        %3097 = vmatmul.bf16.gmra.mxu0 %v1616
        %v3098 = vpop.f32.mrf.mxu0
        %v3099 = vadd.f32 %v2930, %v3098
        %v3100 = vpop.f32.mrf.mxu0
        %v3101 = vadd.f32 %v2932, %v3100
        %3102 = vmatmul.bf16.gmra.mxu0 %v1617
        %v3103 = vpop.f32.mrf.mxu0
        %v3104 = vadd.f32 %v2935, %v3103
        %v3105 = vpop.f32.mrf.mxu0
        %v3106 = vadd.f32 %v2937, %v3105
        %3107 = vmatmul.bf16.gmra.mxu0 %v1618
        %v3108 = vpop.f32.mrf.mxu0
        %v3109 = vadd.f32 %v2940, %v3108
        %v3110 = vpop.f32.mrf.mxu0
        %v3111 = vadd.f32 %v2942, %v3110
        %3112 = vmatmul.bf16.gmra.mxu0 %v1619
        %v3113 = vpop.f32.mrf.mxu0
        %v3114 = vadd.f32 %v2945, %v3113
        %v3115 = vpop.f32.mrf.mxu0
        %v3116 = vadd.f32 %v2947, %v3115
        %3117 = vmatmul.bf16.gmra.mxu0 %v1620
        %v3118 = vpop.f32.mrf.mxu0
        %v3119 = vadd.f32 %v2950, %v3118
        %v3120 = vpop.f32.mrf.mxu0
        %v3121 = vadd.f32 %v2952, %v3120
        %3122 = vmatmul.bf16.gmra.mxu0 %v1621
        %v3123 = vpop.f32.mrf.mxu0
        %v3124 = vadd.f32 %v2955, %v3123
        %v3125 = vpop.f32.mrf.mxu0
        %v3126 = vadd.f32 %v2957, %v3125
        %3127 = vmatmul.bf16.gmra.mxu0 %v1622
        %v3128 = vpop.f32.mrf.mxu0
        %v3129 = vadd.f32 %v2960, %v3128
        %v3130 = vpop.f32.mrf.mxu0
        %v3131 = vadd.f32 %v2962, %v3130
        %3132 = vmatmul.bf16.gmra.mxu0 %v1623
        %v3133 = vpop.f32.mrf.mxu0
        %v3134 = vadd.f32 %v2965, %v3133
        %v3135 = vpop.f32.mrf.mxu0
        %v3136 = vadd.f32 %v2967, %v3135
        %3137 = vmatmul.bf16.gmra.mxu0 %v1624
        %v3138 = vpop.f32.mrf.mxu0
        %v3139 = vadd.f32 %v2970, %v3138
        %v3140 = vpop.f32.mrf.mxu0
        %v3141 = vadd.f32 %v2972, %v3140
        %3142 = vmatmul.bf16.gmra.mxu0 %v1625
        %v3143 = vpop.f32.mrf.mxu0
        %v3144 = vadd.f32 %v2975, %v3143
        %v3145 = vpop.f32.mrf.mxu0
        %v3146 = vadd.f32 %v2977, %v3145
        %3147 = vmatmul.bf16.gmra.mxu0 %v1626
        %v3148 = vpop.f32.mrf.mxu0
        %v3149 = vadd.f32 %v2980, %v3148
        %v3150 = vpop.f32.mrf.mxu0
        %v3151 = vadd.f32 %v2982, %v3150
        %3152 = vmatmul.bf16.gmra.mxu0 %v1627
        %v3153 = vpop.f32.mrf.mxu0
        %v3154 = vadd.f32 %v2985, %v3153
        %v3155 = vpop.f32.mrf.mxu0
        %v3156 = vadd.f32 %v2987, %v3155
        %3157 = vmatmul.bf16.gmra.mxu0 %v1628
        %v3158 = vpop.f32.mrf.mxu0
        %v3159 = vadd.f32 %v2990, %v3158
        %v3160 = vpop.f32.mrf.mxu0
        %v3161 = vadd.f32 %v2992, %v3160
        %3162 = vmatmul.bf16.gmra.mxu0 %v1629
        %v3163 = vpop.f32.mrf.mxu0
        %v3164 = vadd.f32 %v2995, %v3163
        %v3165 = vpop.f32.mrf.mxu0
        %v3166 = vadd.f32 %v2997, %v3165
        %3167 = vmatmul.bf16.gmra.mxu0 %v1630
        %v3168 = vpop.f32.mrf.mxu0
        %v3169 = vadd.f32 %v3000, %v3168
        %v3170 = vpop.f32.mrf.mxu0
        %v3171 = vadd.f32 %v3002, %v3170
        %3172 = vmatmul.bf16.gmra.mxu0 %v1631
        %v3173 = vpop.f32.mrf.mxu0
        %v3174 = vadd.f32 %v3005, %v3173
        %v3175 = vpop.f32.mrf.mxu0
        %v3176 = vadd.f32 %v3007, %v3175
        %3177 = vmatmul.bf16.gmra.mxu0 %v1632
        %v3178 = vpop.f32.mrf.mxu0
        %v3179 = vadd.f32 %v3010, %v3178
        %v3180 = vpop.f32.mrf.mxu0
        %v3181 = vadd.f32 %v3012, %v3180
        %3182 = vmatmul.bf16.gmra.mxu0 %v1633
        %v3183 = vpop.f32.mrf.mxu0
        %v3184 = vadd.f32 %v3015, %v3183
        %v3185 = vpop.f32.mrf.mxu0
        %v3186 = vadd.f32 %v3017, %v3185
        %3187 = vmatmul.bf16.gmra.mxu0 %v1634
        %v3188 = vpop.f32.mrf.mxu0
        %v3189 = vadd.f32 %v3020, %v3188
        %v3190 = vpop.f32.mrf.mxu0
        %v3191 = vadd.f32 %v3022, %v3190
        %3192 = vmatmul.bf16.gmra.mxu0 %v1635
        %v3193 = vpop.f32.mrf.mxu0
        %v3194 = vadd.f32 %v3025, %v3193
        %v3195 = vpop.f32.mrf.mxu0
        %v3196 = vadd.f32 %v3027, %v3195
        %3197 = vmatmul.bf16.gmra.mxu0 %v1636
        %v3198 = vpop.f32.mrf.mxu0
        %v3199 = vadd.f32 %v3030, %v3198
        %v3200 = vpop.f32.mrf.mxu0
        %v3201 = vadd.f32 %v3032, %v3200
        %3202 = vmatmul.bf16.gmra.mxu0 %v1637
        %v3203 = vpop.f32.mrf.mxu0
        %v3204 = vadd.f32 %v3035, %v3203
        %v3205 = vpop.f32.mrf.mxu0
        %v3206 = vadd.f32 %v3037, %v3205
        %3207 = vmatmul.bf16.gmra.mxu0 %v1638
        %v3208 = vpop.f32.mrf.mxu0
        %v3209 = vadd.f32 %v3040, %v3208
        %v3210 = vpop.f32.mrf.mxu0
        %v3211 = vadd.f32 %v3042, %v3210
        %3212 = vmatmul.bf16.gmra.mxu0 %v1639
        %v3213 = vpop.f32.mrf.mxu0
        %v3214 = vadd.f32 %v3045, %v3213
        %v3215 = vpop.f32.mrf.mxu0
        %v3216 = vadd.f32 %v3047, %v3215
        %3217 = vmatmul.bf16.gmra.mxu0 %v1932
        %v3218 = vpop.f32.mrf.mxu0
        %v3219 = vadd.f32 %v3050, %v3218
        %v3220 = vpop.f32.mrf.mxu0
        %v3221 = vadd.f32 %v3052, %v3220
        %3222 = vmatmul.bf16.gmra.mxu0 %v1933
        %v3223 = vpop.f32.mrf.mxu0
        %v3224 = vadd.f32 %v3055, %v3223
        %v3225 = vpop.f32.mrf.mxu0
        %v3226 = vadd.f32 %v3057, %v3225
        %3227 = vdwg.mxu0
        %3228 = vmatpush.bf16.msra.mxu0 %v2447
        %3229 = vmatpush.bf16.msra.mxu0 %v2446
        %3230 = vmatpush.bf16.msra.mxu0 %v2445
        %3231 = vmatpush.bf16.msra.mxu0 %v2444
        %3232 = vmatpush.bf16.msra.mxu0 %v2443
        %3233 = vmatpush.bf16.msra.mxu0 %v2442
        %3234 = vmatpush.bf16.msra.mxu0 %v2441
        %3235 = vmatpush.bf16.msra.mxu0 %v2440
        %3236 = vmatmul.bf16.gmra.mxu0 %v1738
        %v3237 = vpop.f32.mrf.mxu0
        %v3238 = vadd.f32 %v3069, %v3237
        %v3239 = vpop.f32.mrf.mxu0
        %v3240 = vadd.f32 %v3071, %v3239
        %3241 = vmatmul.bf16.gmra.mxu0 %v1739
        %v3242 = vpop.f32.mrf.mxu0
        %v3243 = vadd.f32 %v3074, %v3242
        %v3244 = vpop.f32.mrf.mxu0
        %v3245 = vadd.f32 %v3076, %v3244
        %3246 = vmatmul.bf16.gmra.mxu0 %v1740
        %v3247 = vpop.f32.mrf.mxu0
        %v3248 = vadd.f32 %v3079, %v3247
        %v3249 = vpop.f32.mrf.mxu0
        %v3250 = vadd.f32 %v3081, %v3249
        %3251 = vmatmul.bf16.gmra.mxu0 %v1741
        %v3252 = vpop.f32.mrf.mxu0
        %v3253 = vadd.f32 %v3084, %v3252
        %v3254 = vpop.f32.mrf.mxu0
        %v3255 = vadd.f32 %v3086, %v3254
        %3256 = vmatmul.bf16.gmra.mxu0 %v1742
        %v3257 = vpop.f32.mrf.mxu0
        %v3258 = vadd.f32 %v3089, %v3257
        %v3259 = vpop.f32.mrf.mxu0
        %v3260 = vadd.f32 %v3091, %v3259
        %3261 = vmatmul.bf16.gmra.mxu0 %v1743
        %v3262 = vpop.f32.mrf.mxu0
        %v3263 = vadd.f32 %v3094, %v3262
        %v3264 = vpop.f32.mrf.mxu0
        %v3265 = vadd.f32 %v3096, %v3264
        %3266 = vmatmul.bf16.gmra.mxu0 %v1744
        %v3267 = vpop.f32.mrf.mxu0
        %v3268 = vadd.f32 %v3099, %v3267
        %v3269 = vpop.f32.mrf.mxu0
        %v3270 = vadd.f32 %v3101, %v3269
        %3271 = vmatmul.bf16.gmra.mxu0 %v1745
        %v3272 = vpop.f32.mrf.mxu0
        %v3273 = vadd.f32 %v3104, %v3272
        %v3274 = vpop.f32.mrf.mxu0
        %v3275 = vadd.f32 %v3106, %v3274
        %3276 = vmatmul.bf16.gmra.mxu0 %v1746
        %v3277 = vpop.f32.mrf.mxu0
        %v3278 = vadd.f32 %v3109, %v3277
        %v3279 = vpop.f32.mrf.mxu0
        %v3280 = vadd.f32 %v3111, %v3279
        %3281 = vmatmul.bf16.gmra.mxu0 %v1747
        %v3282 = vpop.f32.mrf.mxu0
        %v3283 = vadd.f32 %v3114, %v3282
        %v3284 = vpop.f32.mrf.mxu0
        %v3285 = vadd.f32 %v3116, %v3284
        %3286 = vmatmul.bf16.gmra.mxu0 %v1748
        %v3287 = vpop.f32.mrf.mxu0
        %v3288 = vadd.f32 %v3119, %v3287
        %v3289 = vpop.f32.mrf.mxu0
        %v3290 = vadd.f32 %v3121, %v3289
        %3291 = vmatmul.bf16.gmra.mxu0 %v1749
        %v3292 = vpop.f32.mrf.mxu0
        %v3293 = vadd.f32 %v3124, %v3292
        %v3294 = vpop.f32.mrf.mxu0
        %v3295 = vadd.f32 %v3126, %v3294
        %3296 = vmatmul.bf16.gmra.mxu0 %v1750
        %v3297 = vpop.f32.mrf.mxu0
        %v3298 = vadd.f32 %v3129, %v3297
        %v3299 = vpop.f32.mrf.mxu0
        %v3300 = vadd.f32 %v3131, %v3299
        %3301 = vmatmul.bf16.gmra.mxu0 %v1751
        %v3302 = vpop.f32.mrf.mxu0
        %v3303 = vadd.f32 %v3134, %v3302
        %v3304 = vpop.f32.mrf.mxu0
        %v3305 = vadd.f32 %v3136, %v3304
        %3306 = vmatmul.bf16.gmra.mxu0 %v1752
        %v3307 = vpop.f32.mrf.mxu0
        %v3308 = vadd.f32 %v3139, %v3307
        %v3309 = vpop.f32.mrf.mxu0
        %v3310 = vadd.f32 %v3141, %v3309
        %3311 = vmatmul.bf16.gmra.mxu0 %v1753
        %v3312 = vpop.f32.mrf.mxu0
        %v3313 = vadd.f32 %v3144, %v3312
        %v3314 = vpop.f32.mrf.mxu0
        %v3315 = vadd.f32 %v3146, %v3314
        %3316 = vmatmul.bf16.gmra.mxu0 %v1754
        %v3317 = vpop.f32.mrf.mxu0
        %v3318 = vadd.f32 %v3149, %v3317
        %v3319 = vpop.f32.mrf.mxu0
        %v3320 = vadd.f32 %v3151, %v3319
        %3321 = vmatmul.bf16.gmra.mxu0 %v1755
        %v3322 = vpop.f32.mrf.mxu0
        %v3323 = vadd.f32 %v3154, %v3322
        %v3324 = vpop.f32.mrf.mxu0
        %v3325 = vadd.f32 %v3156, %v3324
        %3326 = vmatmul.bf16.gmra.mxu0 %v1756
        %v3327 = vpop.f32.mrf.mxu0
        %v3328 = vadd.f32 %v3159, %v3327
        %v3329 = vpop.f32.mrf.mxu0
        %v3330 = vadd.f32 %v3161, %v3329
        %3331 = vmatmul.bf16.gmra.mxu0 %v1757
        %v3332 = vpop.f32.mrf.mxu0
        %v3333 = vadd.f32 %v3164, %v3332
        %v3334 = vpop.f32.mrf.mxu0
        %v3335 = vadd.f32 %v3166, %v3334
        %3336 = vmatmul.bf16.gmra.mxu0 %v1758
        %v3337 = vpop.f32.mrf.mxu0
        %v3338 = vadd.f32 %v3169, %v3337
        %v3339 = vpop.f32.mrf.mxu0
        %v3340 = vadd.f32 %v3171, %v3339
        %3341 = vmatmul.bf16.gmra.mxu0 %v1759
        %v3342 = vpop.f32.mrf.mxu0
        %v3343 = vadd.f32 %v3174, %v3342
        %v3344 = vpop.f32.mrf.mxu0
        %v3345 = vadd.f32 %v3176, %v3344
        %3346 = vmatmul.bf16.gmra.mxu0 %v1760
        %v3347 = vpop.f32.mrf.mxu0
        %v3348 = vadd.f32 %v3179, %v3347
        %v3349 = vpop.f32.mrf.mxu0
        %v3350 = vadd.f32 %v3181, %v3349
        %3351 = vmatmul.bf16.gmra.mxu0 %v1761
        %v3352 = vpop.f32.mrf.mxu0
        %v3353 = vadd.f32 %v3184, %v3352
        %v3354 = vpop.f32.mrf.mxu0
        %v3355 = vadd.f32 %v3186, %v3354
        %3356 = vmatmul.bf16.gmra.mxu0 %v1762
        %v3357 = vpop.f32.mrf.mxu0
        %v3358 = vadd.f32 %v3189, %v3357
        %v3359 = vpop.f32.mrf.mxu0
        %v3360 = vadd.f32 %v3191, %v3359
        %3361 = vmatmul.bf16.gmra.mxu0 %v1763
        %v3362 = vpop.f32.mrf.mxu0
        %v3363 = vadd.f32 %v3194, %v3362
        %v3364 = vpop.f32.mrf.mxu0
        %v3365 = vadd.f32 %v3196, %v3364
        %3366 = vmatmul.bf16.gmra.mxu0 %v1764
        %v3367 = vpop.f32.mrf.mxu0
        %v3368 = vadd.f32 %v3199, %v3367
        %v3369 = vpop.f32.mrf.mxu0
        %v3370 = vadd.f32 %v3201, %v3369
        %3371 = vmatmul.bf16.gmra.mxu0 %v1765
        %v3372 = vpop.f32.mrf.mxu0
        %v3373 = vadd.f32 %v3204, %v3372
        %v3374 = vpop.f32.mrf.mxu0
        %v3375 = vadd.f32 %v3206, %v3374
        %3376 = vmatmul.bf16.gmra.mxu0 %v1766
        %v3377 = vpop.f32.mrf.mxu0
        %v3378 = vadd.f32 %v3209, %v3377
        %v3379 = vpop.f32.mrf.mxu0
        %v3380 = vadd.f32 %v3211, %v3379
        %3381 = vmatmul.bf16.gmra.mxu0 %v1767
        %v3382 = vpop.f32.mrf.mxu0
        %v3383 = vadd.f32 %v3214, %v3382
        %v3384 = vpop.f32.mrf.mxu0
        %v3385 = vadd.f32 %v3216, %v3384
        %3386 = vmatmul.bf16.gmra.mxu0 %v1940
        %v3387 = vpop.f32.mrf.mxu0
        %v3388 = vadd.f32 %v3219, %v3387
        %v3389 = vpop.f32.mrf.mxu0
        %v3390 = vadd.f32 %v3221, %v3389
        %3391 = vmatmul.bf16.gmra.mxu0 %v1941
        %v3392 = vpop.f32.mrf.mxu0
        %v3393 = vadd.f32 %v3224, %v3392
        %v3394 = vpop.f32.mrf.mxu0
        %v3395 = vadd.f32 %v3226, %v3394
        %3396 = vdwg.mxu0
        %3397 = vmatpush.bf16.msra.mxu0 %v2455
        %3398 = vmatpush.bf16.msra.mxu0 %v2454
        %3399 = vmatpush.bf16.msra.mxu0 %v2453
        %3400 = vmatpush.bf16.msra.mxu0 %v2452
        %3401 = vmatpush.bf16.msra.mxu0 %v2451
        %3402 = vmatpush.bf16.msra.mxu0 %v2450
        %3403 = vmatpush.bf16.msra.mxu0 %v2449
        %3404 = vmatpush.bf16.msra.mxu0 %v2448
        %3405 = vmatmul.bf16.gmra.mxu0 %v1866
        %v3406 = vpop.f32.mrf.mxu0
        %v3407 = vadd.f32 %v3238, %v3406
        %v3408 = vpop.f32.mrf.mxu0
        %v3409 = vadd.f32 %v3240, %v3408
        %3410 = vmatmul.bf16.gmra.mxu0 %v1867
        %v3411 = vpop.f32.mrf.mxu0
        %v3412 = vadd.f32 %v3243, %v3411
        %v3413 = vpop.f32.mrf.mxu0
        %v3414 = vadd.f32 %v3245, %v3413
        %3415 = vmatmul.bf16.gmra.mxu0 %v1868
        %v3416 = vpop.f32.mrf.mxu0
        %v3417 = vadd.f32 %v3248, %v3416
        %v3418 = vpop.f32.mrf.mxu0
        %v3419 = vadd.f32 %v3250, %v3418
        %3420 = vmatmul.bf16.gmra.mxu0 %v1869
        %v3421 = vpop.f32.mrf.mxu0
        %v3422 = vadd.f32 %v3253, %v3421
        %v3423 = vpop.f32.mrf.mxu0
        %v3424 = vadd.f32 %v3255, %v3423
        %3425 = vmatmul.bf16.gmra.mxu0 %v1870
        %v3426 = vpop.f32.mrf.mxu0
        %v3427 = vadd.f32 %v3258, %v3426
        %v3428 = vpop.f32.mrf.mxu0
        %v3429 = vadd.f32 %v3260, %v3428
        %3430 = vmatmul.bf16.gmra.mxu0 %v1871
        %v3431 = vpop.f32.mrf.mxu0
        %v3432 = vadd.f32 %v3263, %v3431
        %v3433 = vpop.f32.mrf.mxu0
        %v3434 = vadd.f32 %v3265, %v3433
        %3435 = vmatmul.bf16.gmra.mxu0 %v1872
        %v3436 = vpop.f32.mrf.mxu0
        %v3437 = vadd.f32 %v3268, %v3436
        %v3438 = vpop.f32.mrf.mxu0
        %v3439 = vadd.f32 %v3270, %v3438
        %3440 = vmatmul.bf16.gmra.mxu0 %v1873
        %v3441 = vpop.f32.mrf.mxu0
        %v3442 = vadd.f32 %v3273, %v3441
        %v3443 = vpop.f32.mrf.mxu0
        %v3444 = vadd.f32 %v3275, %v3443
        %3445 = vmatmul.bf16.gmra.mxu0 %v1874
        %v3446 = vpop.f32.mrf.mxu0
        %v3447 = vadd.f32 %v3278, %v3446
        %v3448 = vpop.f32.mrf.mxu0
        %v3449 = vadd.f32 %v3280, %v3448
        %3450 = vmatmul.bf16.gmra.mxu0 %v1875
        %v3451 = vpop.f32.mrf.mxu0
        %v3452 = vadd.f32 %v3283, %v3451
        %v3453 = vpop.f32.mrf.mxu0
        %v3454 = vadd.f32 %v3285, %v3453
        %3455 = vmatmul.bf16.gmra.mxu0 %v1876
        %v3456 = vpop.f32.mrf.mxu0
        %v3457 = vadd.f32 %v3288, %v3456
        %v3458 = vpop.f32.mrf.mxu0
        %v3459 = vadd.f32 %v3290, %v3458
        %3460 = vmatmul.bf16.gmra.mxu0 %v1877
        %v3461 = vpop.f32.mrf.mxu0
        %v3462 = vadd.f32 %v3293, %v3461
        %v3463 = vpop.f32.mrf.mxu0
        %v3464 = vadd.f32 %v3295, %v3463
        %3465 = vmatmul.bf16.gmra.mxu0 %v1878
        %v3466 = vpop.f32.mrf.mxu0
        %v3467 = vadd.f32 %v3298, %v3466
        %v3468 = vpop.f32.mrf.mxu0
        %v3469 = vadd.f32 %v3300, %v3468
        %3470 = vmatmul.bf16.gmra.mxu0 %v1879
        %v3471 = vpop.f32.mrf.mxu0
        %v3472 = vadd.f32 %v3303, %v3471
        %v3473 = vpop.f32.mrf.mxu0
        %v3474 = vadd.f32 %v3305, %v3473
        %3475 = vmatmul.bf16.gmra.mxu0 %v1880
        %v3476 = vpop.f32.mrf.mxu0
        %v3477 = vadd.f32 %v3308, %v3476
        %v3478 = vpop.f32.mrf.mxu0
        %v3479 = vadd.f32 %v3310, %v3478
        %3480 = vmatmul.bf16.gmra.mxu0 %v1881
        %v3481 = vpop.f32.mrf.mxu0
        %v3482 = vadd.f32 %v3313, %v3481
        %v3483 = vpop.f32.mrf.mxu0
        %v3484 = vadd.f32 %v3315, %v3483
        %3485 = vmatmul.bf16.gmra.mxu0 %v1882
        %v3486 = vpop.f32.mrf.mxu0
        %v3487 = vadd.f32 %v3318, %v3486
        %v3488 = vpop.f32.mrf.mxu0
        %v3489 = vadd.f32 %v3320, %v3488
        %3490 = vmatmul.bf16.gmra.mxu0 %v1883
        %v3491 = vpop.f32.mrf.mxu0
        %v3492 = vadd.f32 %v3323, %v3491
        %v3493 = vpop.f32.mrf.mxu0
        %v3494 = vadd.f32 %v3325, %v3493
        %3495 = vmatmul.bf16.gmra.mxu0 %v1884
        %v3496 = vpop.f32.mrf.mxu0
        %v3497 = vadd.f32 %v3328, %v3496
        %v3498 = vpop.f32.mrf.mxu0
        %v3499 = vadd.f32 %v3330, %v3498
        %3500 = vmatmul.bf16.gmra.mxu0 %v1885
        %v3501 = vpop.f32.mrf.mxu0
        %v3502 = vadd.f32 %v3333, %v3501
        %v3503 = vpop.f32.mrf.mxu0
        %v3504 = vadd.f32 %v3335, %v3503
        %3505 = vmatmul.bf16.gmra.mxu0 %v1886
        %v3506 = vpop.f32.mrf.mxu0
        %v3507 = vadd.f32 %v3338, %v3506
        %v3508 = vpop.f32.mrf.mxu0
        %v3509 = vadd.f32 %v3340, %v3508
        %3510 = vmatmul.bf16.gmra.mxu0 %v1887
        %v3511 = vpop.f32.mrf.mxu0
        %v3512 = vadd.f32 %v3343, %v3511
        %v3513 = vpop.f32.mrf.mxu0
        %v3514 = vadd.f32 %v3345, %v3513
        %3515 = vmatmul.bf16.gmra.mxu0 %v1888
        %v3516 = vpop.f32.mrf.mxu0
        %v3517 = vadd.f32 %v3348, %v3516
        %v3518 = vpop.f32.mrf.mxu0
        %v3519 = vadd.f32 %v3350, %v3518
        %3520 = vmatmul.bf16.gmra.mxu0 %v1889
        %v3521 = vpop.f32.mrf.mxu0
        %v3522 = vadd.f32 %v3353, %v3521
        %v3523 = vpop.f32.mrf.mxu0
        %v3524 = vadd.f32 %v3355, %v3523
        %3525 = vmatmul.bf16.gmra.mxu0 %v1890
        %v3526 = vpop.f32.mrf.mxu0
        %v3527 = vadd.f32 %v3358, %v3526
        %v3528 = vpop.f32.mrf.mxu0
        %v3529 = vadd.f32 %v3360, %v3528
        %3530 = vmatmul.bf16.gmra.mxu0 %v1891
        %v3531 = vpop.f32.mrf.mxu0
        %v3532 = vadd.f32 %v3363, %v3531
        %v3533 = vpop.f32.mrf.mxu0
        %v3534 = vadd.f32 %v3365, %v3533
        %3535 = vmatmul.bf16.gmra.mxu0 %v1892
        %v3536 = vpop.f32.mrf.mxu0
        %v3537 = vadd.f32 %v3368, %v3536
        %v3538 = vpop.f32.mrf.mxu0
        %v3539 = vadd.f32 %v3370, %v3538
        %3540 = vmatmul.bf16.gmra.mxu0 %v1893
        %v3541 = vpop.f32.mrf.mxu0
        %v3542 = vadd.f32 %v3373, %v3541
        %v3543 = vpop.f32.mrf.mxu0
        %v3544 = vadd.f32 %v3375, %v3543
        %3545 = vmatmul.bf16.gmra.mxu0 %v1894
        %v3546 = vpop.f32.mrf.mxu0
        %v3547 = vadd.f32 %v3378, %v3546
        %v3548 = vpop.f32.mrf.mxu0
        %v3549 = vadd.f32 %v3380, %v3548
        %3550 = vmatmul.bf16.gmra.mxu0 %v1895
        %v3551 = vpop.f32.mrf.mxu0
        %v3552 = vadd.f32 %v3383, %v3551
        %v3553 = vpop.f32.mrf.mxu0
        %v3554 = vadd.f32 %v3385, %v3553
        %3555 = vmatmul.bf16.gmra.mxu0 %v1948
        %v3556 = vpop.f32.mrf.mxu0
        %v3557 = vadd.f32 %v3388, %v3556
        %v3558 = vpop.f32.mrf.mxu0
        %v3559 = vadd.f32 %v3390, %v3558
        %3560 = vmatmul.bf16.gmra.mxu0 %v1949
        %v3561 = vpop.f32.mrf.mxu0
        %v3562 = vadd.f32 %v3393, %v3561
        %v3563 = vpop.f32.mrf.mxu0
        %v3564 = vadd.f32 %v3395, %v3563
        %3565 = vdwg.mxu0
        %3566 = vmatpush.bf16.msra.mxu0 %v2463
        %3567 = vmatpush.bf16.msra.mxu0 %v2462
        %3568 = vmatpush.bf16.msra.mxu0 %v2461
        %3569 = vmatpush.bf16.msra.mxu0 %v2460
        %3570 = vmatpush.bf16.msra.mxu0 %v2459
        %3571 = vmatpush.bf16.msra.mxu0 %v2458
        %3572 = vmatpush.bf16.msra.mxu0 %v2457
        %3573 = vmatpush.bf16.msra.mxu0 %v2456
        %3574 = vmatmul.bf16.gmra.mxu0 %v1612
        %v3575 = vpop.f32.mrf.mxu0
        %v3576 = vadd.f32 %v3407, %v3575
        %v3577 = vpop.f32.mrf.mxu0
        %v3578 = vadd.f32 %v3409, %v3577
        %3579 = vmatmul.bf16.gmra.mxu0 %v1613
        %v3580 = vpop.f32.mrf.mxu0
        %v3581 = vadd.f32 %v3412, %v3580
        %v3582 = vpop.f32.mrf.mxu0
        %v3583 = vadd.f32 %v3414, %v3582
        %3584 = vmatmul.bf16.gmra.mxu0 %v1614
        %v3585 = vpop.f32.mrf.mxu0
        %v3586 = vadd.f32 %v3417, %v3585
        %v3587 = vpop.f32.mrf.mxu0
        %v3588 = vadd.f32 %v3419, %v3587
        %3589 = vmatmul.bf16.gmra.mxu0 %v1615
        %v3590 = vpop.f32.mrf.mxu0
        %v3591 = vadd.f32 %v3422, %v3590
        %v3592 = vpop.f32.mrf.mxu0
        %v3593 = vadd.f32 %v3424, %v3592
        %3594 = vmatmul.bf16.gmra.mxu0 %v1616
        %v3595 = vpop.f32.mrf.mxu0
        %v3596 = vadd.f32 %v3427, %v3595
        %v3597 = vpop.f32.mrf.mxu0
        %v3598 = vadd.f32 %v3429, %v3597
        %3599 = vmatmul.bf16.gmra.mxu0 %v1617
        %v3600 = vpop.f32.mrf.mxu0
        %v3601 = vadd.f32 %v3432, %v3600
        %v3602 = vpop.f32.mrf.mxu0
        %v3603 = vadd.f32 %v3434, %v3602
        %3604 = vmatmul.bf16.gmra.mxu0 %v1618
        %v3605 = vpop.f32.mrf.mxu0
        %v3606 = vadd.f32 %v3437, %v3605
        %v3607 = vpop.f32.mrf.mxu0
        %v3608 = vadd.f32 %v3439, %v3607
        %3609 = vmatmul.bf16.gmra.mxu0 %v1619
        %v3610 = vpop.f32.mrf.mxu0
        %v3611 = vadd.f32 %v3442, %v3610
        %v3612 = vpop.f32.mrf.mxu0
        %v3613 = vadd.f32 %v3444, %v3612
        %3614 = vmatmul.bf16.gmra.mxu0 %v1620
        %v3615 = vpop.f32.mrf.mxu0
        %v3616 = vadd.f32 %v3447, %v3615
        %v3617 = vpop.f32.mrf.mxu0
        %v3618 = vadd.f32 %v3449, %v3617
        %3619 = vmatmul.bf16.gmra.mxu0 %v1621
        %v3620 = vpop.f32.mrf.mxu0
        %v3621 = vadd.f32 %v3452, %v3620
        %v3622 = vpop.f32.mrf.mxu0
        %v3623 = vadd.f32 %v3454, %v3622
        %3624 = vmatmul.bf16.gmra.mxu0 %v1622
        %v3625 = vpop.f32.mrf.mxu0
        %v3626 = vadd.f32 %v3457, %v3625
        %v3627 = vpop.f32.mrf.mxu0
        %v3628 = vadd.f32 %v3459, %v3627
        %3629 = vmatmul.bf16.gmra.mxu0 %v1623
        %v3630 = vpop.f32.mrf.mxu0
        %v3631 = vadd.f32 %v3462, %v3630
        %v3632 = vpop.f32.mrf.mxu0
        %v3633 = vadd.f32 %v3464, %v3632
        %3634 = vmatmul.bf16.gmra.mxu0 %v1624
        %v3635 = vpop.f32.mrf.mxu0
        %v3636 = vadd.f32 %v3467, %v3635
        %v3637 = vpop.f32.mrf.mxu0
        %v3638 = vadd.f32 %v3469, %v3637
        %3639 = vmatmul.bf16.gmra.mxu0 %v1625
        %v3640 = vpop.f32.mrf.mxu0
        %v3641 = vadd.f32 %v3472, %v3640
        %v3642 = vpop.f32.mrf.mxu0
        %v3643 = vadd.f32 %v3474, %v3642
        %3644 = vmatmul.bf16.gmra.mxu0 %v1626
        %v3645 = vpop.f32.mrf.mxu0
        %v3646 = vadd.f32 %v3477, %v3645
        %v3647 = vpop.f32.mrf.mxu0
        %v3648 = vadd.f32 %v3479, %v3647
        %3649 = vmatmul.bf16.gmra.mxu0 %v1627
        %v3650 = vpop.f32.mrf.mxu0
        %v3651 = vadd.f32 %v3482, %v3650
        %v3652 = vpop.f32.mrf.mxu0
        %v3653 = vadd.f32 %v3484, %v3652
        %3654 = vmatmul.bf16.gmra.mxu0 %v1628
        %v3655 = vpop.f32.mrf.mxu0
        %v3656 = vadd.f32 %v3487, %v3655
        %v3657 = vpop.f32.mrf.mxu0
        %v3658 = vadd.f32 %v3489, %v3657
        %3659 = vmatmul.bf16.gmra.mxu0 %v1629
        %v3660 = vpop.f32.mrf.mxu0
        %v3661 = vadd.f32 %v3492, %v3660
        %v3662 = vpop.f32.mrf.mxu0
        %v3663 = vadd.f32 %v3494, %v3662
        %3664 = vmatmul.bf16.gmra.mxu0 %v1630
        %v3665 = vpop.f32.mrf.mxu0
        %v3666 = vadd.f32 %v3497, %v3665
        %v3667 = vpop.f32.mrf.mxu0
        %v3668 = vadd.f32 %v3499, %v3667
        %3669 = vmatmul.bf16.gmra.mxu0 %v1631
        %v3670 = vpop.f32.mrf.mxu0
        %v3671 = vadd.f32 %v3502, %v3670
        %v3672 = vpop.f32.mrf.mxu0
        %v3673 = vadd.f32 %v3504, %v3672
        %3674 = vmatmul.bf16.gmra.mxu0 %v1632
        %v3675 = vpop.f32.mrf.mxu0
        %v3676 = vadd.f32 %v3507, %v3675
        %v3677 = vpop.f32.mrf.mxu0
        %v3678 = vadd.f32 %v3509, %v3677
        %3679 = vmatmul.bf16.gmra.mxu0 %v1633
        %v3680 = vpop.f32.mrf.mxu0
        %v3681 = vadd.f32 %v3512, %v3680
        %v3682 = vpop.f32.mrf.mxu0
        %v3683 = vadd.f32 %v3514, %v3682
        %3684 = vmatmul.bf16.gmra.mxu0 %v1634
        %v3685 = vpop.f32.mrf.mxu0
        %v3686 = vadd.f32 %v3517, %v3685
        %v3687 = vpop.f32.mrf.mxu0
        %v3688 = vadd.f32 %v3519, %v3687
        %3689 = vmatmul.bf16.gmra.mxu0 %v1635
        %v3690 = vpop.f32.mrf.mxu0
        %v3691 = vadd.f32 %v3522, %v3690
        %v3692 = vpop.f32.mrf.mxu0
        %v3693 = vadd.f32 %v3524, %v3692
        %3694 = vmatmul.bf16.gmra.mxu0 %v1636
        %v3695 = vpop.f32.mrf.mxu0
        %v3696 = vadd.f32 %v3527, %v3695
        %v3697 = vpop.f32.mrf.mxu0
        %v3698 = vadd.f32 %v3529, %v3697
        %3699 = vmatmul.bf16.gmra.mxu0 %v1637
        %v3700 = vpop.f32.mrf.mxu0
        %v3701 = vadd.f32 %v3532, %v3700
        %v3702 = vpop.f32.mrf.mxu0
        %v3703 = vadd.f32 %v3534, %v3702
        %3704 = vmatmul.bf16.gmra.mxu0 %v1638
        %v3705 = vpop.f32.mrf.mxu0
        %v3706 = vadd.f32 %v3537, %v3705
        %v3707 = vpop.f32.mrf.mxu0
        %v3708 = vadd.f32 %v3539, %v3707
        %3709 = vmatmul.bf16.gmra.mxu0 %v1639
        %v3710 = vpop.f32.mrf.mxu0
        %v3711 = vadd.f32 %v3542, %v3710
        %v3712 = vpop.f32.mrf.mxu0
        %v3713 = vadd.f32 %v3544, %v3712
        %3714 = vmatmul.bf16.gmra.mxu0 %v1932
        %v3715 = vpop.f32.mrf.mxu0
        %v3716 = vadd.f32 %v3547, %v3715
        %v3717 = vpop.f32.mrf.mxu0
        %v3718 = vadd.f32 %v3549, %v3717
        %3719 = vmatmul.bf16.gmra.mxu0 %v1933
        %v3720 = vpop.f32.mrf.mxu0
        %v3721 = vadd.f32 %v3552, %v3720
        %v3722 = vpop.f32.mrf.mxu0
        %v3723 = vadd.f32 %v3554, %v3722
        %3724 = vmatmul.bf16.gmra.mxu0 %v1956
        %v3725 = vpop.f32.mrf.mxu0
        %v3726 = vadd.f32 %v3557, %v3725
        %v3727 = vpop.f32.mrf.mxu0
        %v3728 = vadd.f32 %v3559, %v3727
        %3729 = vmatmul.bf16.gmra.mxu0 %v1957
        %v3730 = vpop.f32.mrf.mxu0
        %v3731 = vadd.f32 %v3562, %v3730
        %v3732 = vpop.f32.mrf.mxu0
        %v3733 = vadd.f32 %v3564, %v3732
        %3734 = vdwg.mxu0
        %3735 = vmatpush.bf16.msra.mxu0 %v2471
        %3736 = vmatpush.bf16.msra.mxu0 %v2470
        %3737 = vmatpush.bf16.msra.mxu0 %v2469
        %3738 = vmatpush.bf16.msra.mxu0 %v2468
        %3739 = vmatpush.bf16.msra.mxu0 %v2467
        %3740 = vmatpush.bf16.msra.mxu0 %v2466
        %3741 = vmatpush.bf16.msra.mxu0 %v2465
        %3742 = vmatpush.bf16.msra.mxu0 %v2464
        %3743 = vmatmul.bf16.gmra.mxu0 %v1740
        %v3744 = vpop.f32.mrf.mxu0
        %v3745 = vadd.f32 %v3576, %v3744
        %v3746 = vpop.f32.mrf.mxu0
        %v3747 = vadd.f32 %v3578, %v3746
        %3748 = vmatmul.bf16.gmra.mxu0 %v1741
        %v3749 = vpop.f32.mrf.mxu0
        %v3750 = vadd.f32 %v3581, %v3749
        %v3751 = vpop.f32.mrf.mxu0
        %v3752 = vadd.f32 %v3583, %v3751
        %3753 = vmatmul.bf16.gmra.mxu0 %v1742
        %v3754 = vpop.f32.mrf.mxu0
        %v3755 = vadd.f32 %v3586, %v3754
        %v3756 = vpop.f32.mrf.mxu0
        %v3757 = vadd.f32 %v3588, %v3756
        %3758 = vmatmul.bf16.gmra.mxu0 %v1743
        %v3759 = vpop.f32.mrf.mxu0
        %v3760 = vadd.f32 %v3591, %v3759
        %v3761 = vpop.f32.mrf.mxu0
        %v3762 = vadd.f32 %v3593, %v3761
        %3763 = vmatmul.bf16.gmra.mxu0 %v1744
        %v3764 = vpop.f32.mrf.mxu0
        %v3765 = vadd.f32 %v3596, %v3764
        %v3766 = vpop.f32.mrf.mxu0
        %v3767 = vadd.f32 %v3598, %v3766
        %3768 = vmatmul.bf16.gmra.mxu0 %v1745
        %v3769 = vpop.f32.mrf.mxu0
        %v3770 = vadd.f32 %v3601, %v3769
        %v3771 = vpop.f32.mrf.mxu0
        %v3772 = vadd.f32 %v3603, %v3771
        %3773 = vmatmul.bf16.gmra.mxu0 %v1746
        %v3774 = vpop.f32.mrf.mxu0
        %v3775 = vadd.f32 %v3606, %v3774
        %v3776 = vpop.f32.mrf.mxu0
        %v3777 = vadd.f32 %v3608, %v3776
        %3778 = vmatmul.bf16.gmra.mxu0 %v1747
        %v3779 = vpop.f32.mrf.mxu0
        %v3780 = vadd.f32 %v3611, %v3779
        %v3781 = vpop.f32.mrf.mxu0
        %v3782 = vadd.f32 %v3613, %v3781
        %3783 = vmatmul.bf16.gmra.mxu0 %v1748
        %v3784 = vpop.f32.mrf.mxu0
        %v3785 = vadd.f32 %v3616, %v3784
        %v3786 = vpop.f32.mrf.mxu0
        %v3787 = vadd.f32 %v3618, %v3786
        %3788 = vmatmul.bf16.gmra.mxu0 %v1749
        %v3789 = vpop.f32.mrf.mxu0
        %v3790 = vadd.f32 %v3621, %v3789
        %v3791 = vpop.f32.mrf.mxu0
        %v3792 = vadd.f32 %v3623, %v3791
        %3793 = vmatmul.bf16.gmra.mxu0 %v1750
        %v3794 = vpop.f32.mrf.mxu0
        %v3795 = vadd.f32 %v3626, %v3794
        %v3796 = vpop.f32.mrf.mxu0
        %v3797 = vadd.f32 %v3628, %v3796
        %3798 = vmatmul.bf16.gmra.mxu0 %v1751
        %v3799 = vpop.f32.mrf.mxu0
        %v3800 = vadd.f32 %v3631, %v3799
        %v3801 = vpop.f32.mrf.mxu0
        %v3802 = vadd.f32 %v3633, %v3801
        %3803 = vmatmul.bf16.gmra.mxu0 %v1752
        %v3804 = vpop.f32.mrf.mxu0
        %v3805 = vadd.f32 %v3636, %v3804
        %v3806 = vpop.f32.mrf.mxu0
        %v3807 = vadd.f32 %v3638, %v3806
        %3808 = vmatmul.bf16.gmra.mxu0 %v1753
        %v3809 = vpop.f32.mrf.mxu0
        %v3810 = vadd.f32 %v3641, %v3809
        %v3811 = vpop.f32.mrf.mxu0
        %v3812 = vadd.f32 %v3643, %v3811
        %3813 = vmatmul.bf16.gmra.mxu0 %v1754
        %v3814 = vpop.f32.mrf.mxu0
        %v3815 = vadd.f32 %v3646, %v3814
        %v3816 = vpop.f32.mrf.mxu0
        %v3817 = vadd.f32 %v3648, %v3816
        %3818 = vmatmul.bf16.gmra.mxu0 %v1755
        %v3819 = vpop.f32.mrf.mxu0
        %v3820 = vadd.f32 %v3651, %v3819
        %v3821 = vpop.f32.mrf.mxu0
        %v3822 = vadd.f32 %v3653, %v3821
        %3823 = vmatmul.bf16.gmra.mxu0 %v1756
        %v3824 = vpop.f32.mrf.mxu0
        %v3825 = vadd.f32 %v3656, %v3824
        %v3826 = vpop.f32.mrf.mxu0
        %v3827 = vadd.f32 %v3658, %v3826
        %3828 = vmatmul.bf16.gmra.mxu0 %v1757
        %v3829 = vpop.f32.mrf.mxu0
        %v3830 = vadd.f32 %v3661, %v3829
        %v3831 = vpop.f32.mrf.mxu0
        %v3832 = vadd.f32 %v3663, %v3831
        %3833 = vmatmul.bf16.gmra.mxu0 %v1758
        %v3834 = vpop.f32.mrf.mxu0
        %v3835 = vadd.f32 %v3666, %v3834
        %v3836 = vpop.f32.mrf.mxu0
        %v3837 = vadd.f32 %v3668, %v3836
        %3838 = vmatmul.bf16.gmra.mxu0 %v1759
        %v3839 = vpop.f32.mrf.mxu0
        %v3840 = vadd.f32 %v3671, %v3839
        %v3841 = vpop.f32.mrf.mxu0
        %v3842 = vadd.f32 %v3673, %v3841
        %3843 = vmatmul.bf16.gmra.mxu0 %v1760
        %v3844 = vpop.f32.mrf.mxu0
        %v3845 = vadd.f32 %v3676, %v3844
        %v3846 = vpop.f32.mrf.mxu0
        %v3847 = vadd.f32 %v3678, %v3846
        %3848 = vmatmul.bf16.gmra.mxu0 %v1761
        %v3849 = vpop.f32.mrf.mxu0
        %v3850 = vadd.f32 %v3681, %v3849
        %v3851 = vpop.f32.mrf.mxu0
        %v3852 = vadd.f32 %v3683, %v3851
        %3853 = vmatmul.bf16.gmra.mxu0 %v1762
        %v3854 = vpop.f32.mrf.mxu0
        %v3855 = vadd.f32 %v3686, %v3854
        %v3856 = vpop.f32.mrf.mxu0
        %v3857 = vadd.f32 %v3688, %v3856
        %3858 = vmatmul.bf16.gmra.mxu0 %v1763
        %v3859 = vpop.f32.mrf.mxu0
        %v3860 = vadd.f32 %v3691, %v3859
        %v3861 = vpop.f32.mrf.mxu0
        %v3862 = vadd.f32 %v3693, %v3861
        %3863 = vmatmul.bf16.gmra.mxu0 %v1764
        %v3864 = vpop.f32.mrf.mxu0
        %v3865 = vadd.f32 %v3696, %v3864
        %v3866 = vpop.f32.mrf.mxu0
        %v3867 = vadd.f32 %v3698, %v3866
        %3868 = vmatmul.bf16.gmra.mxu0 %v1765
        %v3869 = vpop.f32.mrf.mxu0
        %v3870 = vadd.f32 %v3701, %v3869
        %v3871 = vpop.f32.mrf.mxu0
        %v3872 = vadd.f32 %v3703, %v3871
        %3873 = vmatmul.bf16.gmra.mxu0 %v1766
        %v3874 = vpop.f32.mrf.mxu0
        %v3875 = vadd.f32 %v3706, %v3874
        %v3876 = vpop.f32.mrf.mxu0
        %v3877 = vadd.f32 %v3708, %v3876
        %3878 = vmatmul.bf16.gmra.mxu0 %v1767
        %v3879 = vpop.f32.mrf.mxu0
        %v3880 = vadd.f32 %v3711, %v3879
        %v3881 = vpop.f32.mrf.mxu0
        %v3882 = vadd.f32 %v3713, %v3881
        %3883 = vmatmul.bf16.gmra.mxu0 %v1940
        %v3884 = vpop.f32.mrf.mxu0
        %v3885 = vadd.f32 %v3716, %v3884
        %v3886 = vpop.f32.mrf.mxu0
        %v3887 = vadd.f32 %v3718, %v3886
        %3888 = vmatmul.bf16.gmra.mxu0 %v1941
        %v3889 = vpop.f32.mrf.mxu0
        %v3890 = vadd.f32 %v3721, %v3889
        %v3891 = vpop.f32.mrf.mxu0
        %v3892 = vadd.f32 %v3723, %v3891
        %3893 = vmatmul.bf16.gmra.mxu0 %v1964
        %v3894 = vpop.f32.mrf.mxu0
        %v3895 = vadd.f32 %v3726, %v3894
        %v3896 = vpop.f32.mrf.mxu0
        %v3897 = vadd.f32 %v3728, %v3896
        %3898 = vmatmul.bf16.gmra.mxu0 %v1965
        %v3899 = vpop.f32.mrf.mxu0
        %v3900 = vadd.f32 %v3731, %v3899
        %v3901 = vpop.f32.mrf.mxu0
        %v3902 = vadd.f32 %v3733, %v3901
        %3903 = vdwg.mxu0
        %3904 = vmatpush.bf16.msra.mxu0 %v2479
        %3905 = vmatpush.bf16.msra.mxu0 %v2478
        %3906 = vmatpush.bf16.msra.mxu0 %v2477
        %3907 = vmatpush.bf16.msra.mxu0 %v2476
        %3908 = vmatpush.bf16.msra.mxu0 %v2475
        %3909 = vmatpush.bf16.msra.mxu0 %v2474
        %3910 = vmatpush.bf16.msra.mxu0 %v2473
        %3911 = vmatpush.bf16.msra.mxu0 %v2472
        %3912 = vmatmul.bf16.gmra.mxu0 %v1868
        %v3913 = vpop.f32.mrf.mxu0
        %v3914 = vadd.f32 %v3745, %v3913
        %v3915 = vpop.f32.mrf.mxu0
        %v3916 = vadd.f32 %v3747, %v3915
        %3917 = vmatmul.bf16.gmra.mxu0 %v1869
        %v3918 = vpop.f32.mrf.mxu0
        %v3919 = vadd.f32 %v3750, %v3918
        %v3920 = vpop.f32.mrf.mxu0
        %v3921 = vadd.f32 %v3752, %v3920
        %3922 = vmatmul.bf16.gmra.mxu0 %v1870
        %v3923 = vpop.f32.mrf.mxu0
        %v3924 = vadd.f32 %v3755, %v3923
        %v3925 = vpop.f32.mrf.mxu0
        %v3926 = vadd.f32 %v3757, %v3925
        %3927 = vmatmul.bf16.gmra.mxu0 %v1871
        %v3928 = vpop.f32.mrf.mxu0
        %v3929 = vadd.f32 %v3760, %v3928
        %v3930 = vpop.f32.mrf.mxu0
        %v3931 = vadd.f32 %v3762, %v3930
        %3932 = vmatmul.bf16.gmra.mxu0 %v1872
        %v3933 = vpop.f32.mrf.mxu0
        %v3934 = vadd.f32 %v3765, %v3933
        %v3935 = vpop.f32.mrf.mxu0
        %v3936 = vadd.f32 %v3767, %v3935
        %3937 = vmatmul.bf16.gmra.mxu0 %v1873
        %v3938 = vpop.f32.mrf.mxu0
        %v3939 = vadd.f32 %v3770, %v3938
        %v3940 = vpop.f32.mrf.mxu0
        %v3941 = vadd.f32 %v3772, %v3940
        %3942 = vmatmul.bf16.gmra.mxu0 %v1874
        %v3943 = vpop.f32.mrf.mxu0
        %v3944 = vadd.f32 %v3775, %v3943
        %v3945 = vpop.f32.mrf.mxu0
        %v3946 = vadd.f32 %v3777, %v3945
        %3947 = vmatmul.bf16.gmra.mxu0 %v1875
        %v3948 = vpop.f32.mrf.mxu0
        %v3949 = vadd.f32 %v3780, %v3948
        %v3950 = vpop.f32.mrf.mxu0
        %v3951 = vadd.f32 %v3782, %v3950
        %3952 = vmatmul.bf16.gmra.mxu0 %v1876
        %v3953 = vpop.f32.mrf.mxu0
        %v3954 = vadd.f32 %v3785, %v3953
        %v3955 = vpop.f32.mrf.mxu0
        %v3956 = vadd.f32 %v3787, %v3955
        %3957 = vmatmul.bf16.gmra.mxu0 %v1877
        %v3958 = vpop.f32.mrf.mxu0
        %v3959 = vadd.f32 %v3790, %v3958
        %v3960 = vpop.f32.mrf.mxu0
        %v3961 = vadd.f32 %v3792, %v3960
        %3962 = vmatmul.bf16.gmra.mxu0 %v1878
        %v3963 = vpop.f32.mrf.mxu0
        %v3964 = vadd.f32 %v3795, %v3963
        %v3965 = vpop.f32.mrf.mxu0
        %v3966 = vadd.f32 %v3797, %v3965
        %3967 = vmatmul.bf16.gmra.mxu0 %v1879
        %v3968 = vpop.f32.mrf.mxu0
        %v3969 = vadd.f32 %v3800, %v3968
        %v3970 = vpop.f32.mrf.mxu0
        %v3971 = vadd.f32 %v3802, %v3970
        %3972 = vmatmul.bf16.gmra.mxu0 %v1880
        %v3973 = vpop.f32.mrf.mxu0
        %v3974 = vadd.f32 %v3805, %v3973
        %v3975 = vpop.f32.mrf.mxu0
        %v3976 = vadd.f32 %v3807, %v3975
        %3977 = vmatmul.bf16.gmra.mxu0 %v1881
        %v3978 = vpop.f32.mrf.mxu0
        %v3979 = vadd.f32 %v3810, %v3978
        %v3980 = vpop.f32.mrf.mxu0
        %v3981 = vadd.f32 %v3812, %v3980
        %3982 = vmatmul.bf16.gmra.mxu0 %v1882
        %v3983 = vpop.f32.mrf.mxu0
        %v3984 = vadd.f32 %v3815, %v3983
        %v3985 = vpop.f32.mrf.mxu0
        %v3986 = vadd.f32 %v3817, %v3985
        %3987 = vmatmul.bf16.gmra.mxu0 %v1883
        %v3988 = vpop.f32.mrf.mxu0
        %v3989 = vadd.f32 %v3820, %v3988
        %v3990 = vpop.f32.mrf.mxu0
        %v3991 = vadd.f32 %v3822, %v3990
        %3992 = vmatmul.bf16.gmra.mxu0 %v1884
        %v3993 = vpop.f32.mrf.mxu0
        %v3994 = vadd.f32 %v3825, %v3993
        %v3995 = vpop.f32.mrf.mxu0
        %v3996 = vadd.f32 %v3827, %v3995
        %3997 = vmatmul.bf16.gmra.mxu0 %v1885
        %v3998 = vpop.f32.mrf.mxu0
        %v3999 = vadd.f32 %v3830, %v3998
        %v4000 = vpop.f32.mrf.mxu0
        %v4001 = vadd.f32 %v3832, %v4000
        %4002 = vmatmul.bf16.gmra.mxu0 %v1886
        %v4003 = vpop.f32.mrf.mxu0
        %v4004 = vadd.f32 %v3835, %v4003
        %v4005 = vpop.f32.mrf.mxu0
        %v4006 = vadd.f32 %v3837, %v4005
        %4007 = vmatmul.bf16.gmra.mxu0 %v1887
        %v4008 = vpop.f32.mrf.mxu0
        %v4009 = vadd.f32 %v3840, %v4008
        %v4010 = vpop.f32.mrf.mxu0
        %v4011 = vadd.f32 %v3842, %v4010
        %4012 = vmatmul.bf16.gmra.mxu0 %v1888
        %v4013 = vpop.f32.mrf.mxu0
        %v4014 = vadd.f32 %v3845, %v4013
        %v4015 = vpop.f32.mrf.mxu0
        %v4016 = vadd.f32 %v3847, %v4015
        %4017 = vmatmul.bf16.gmra.mxu0 %v1889
        %v4018 = vpop.f32.mrf.mxu0
        %v4019 = vadd.f32 %v3850, %v4018
        %v4020 = vpop.f32.mrf.mxu0
        %v4021 = vadd.f32 %v3852, %v4020
        %4022 = vmatmul.bf16.gmra.mxu0 %v1890
        %v4023 = vpop.f32.mrf.mxu0
        %v4024 = vadd.f32 %v3855, %v4023
        %v4025 = vpop.f32.mrf.mxu0
        %v4026 = vadd.f32 %v3857, %v4025
        %4027 = vmatmul.bf16.gmra.mxu0 %v1891
        %v4028 = vpop.f32.mrf.mxu0
        %v4029 = vadd.f32 %v3860, %v4028
        %v4030 = vpop.f32.mrf.mxu0
        %v4031 = vadd.f32 %v3862, %v4030
        %4032 = vmatmul.bf16.gmra.mxu0 %v1892
        %v4033 = vpop.f32.mrf.mxu0
        %v4034 = vadd.f32 %v3865, %v4033
        %v4035 = vpop.f32.mrf.mxu0
        %v4036 = vadd.f32 %v3867, %v4035
        %4037 = vmatmul.bf16.gmra.mxu0 %v1893
        %v4038 = vpop.f32.mrf.mxu0
        %v4039 = vadd.f32 %v3870, %v4038
        %v4040 = vpop.f32.mrf.mxu0
        %v4041 = vadd.f32 %v3872, %v4040
        %4042 = vmatmul.bf16.gmra.mxu0 %v1894
        %v4043 = vpop.f32.mrf.mxu0
        %v4044 = vadd.f32 %v3875, %v4043
        %v4045 = vpop.f32.mrf.mxu0
        %v4046 = vadd.f32 %v3877, %v4045
        %4047 = vmatmul.bf16.gmra.mxu0 %v1895
        %v4048 = vpop.f32.mrf.mxu0
        %v4049 = vadd.f32 %v3880, %v4048
        %v4050 = vpop.f32.mrf.mxu0
        %v4051 = vadd.f32 %v3882, %v4050
        %4052 = vmatmul.bf16.gmra.mxu0 %v1948
        %v4053 = vpop.f32.mrf.mxu0
        %v4054 = vadd.f32 %v3885, %v4053
        %v4055 = vpop.f32.mrf.mxu0
        %v4056 = vadd.f32 %v3887, %v4055
        %4057 = vmatmul.bf16.gmra.mxu0 %v1949
        %v4058 = vpop.f32.mrf.mxu0
        %v4059 = vadd.f32 %v3890, %v4058
        %v4060 = vpop.f32.mrf.mxu0
        %v4061 = vadd.f32 %v3892, %v4060
        %4062 = vmatmul.bf16.gmra.mxu0 %v1972
        %v4063 = vpop.f32.mrf.mxu0
        %v4064 = vadd.f32 %v3895, %v4063
        %v4065 = vpop.f32.mrf.mxu0
        %v4066 = vadd.f32 %v3897, %v4065
        %4067 = vmatmul.bf16.gmra.mxu0 %v1973
        %v4068 = vpop.f32.mrf.mxu0
        %v4069 = vadd.f32 %v3900, %v4068
        %v4070 = vpop.f32.mrf.mxu0
        %v4071 = vadd.f32 %v3902, %v4070
        %4072 = vdwg.mxu0
        %v4073 = vld [vmem:[%s274] sm:$0x1]
        %v4075 = vperm.slane %v4073, 0
        %v4077 = vmul.f32 %v3914, %v4075
        %v4078 = vmul.f32 %v3916, %v4075
        %v4079 = vmul.f32 %v3919, %v4075
        %v4080 = vmul.f32 %v3921, %v4075
        %v4081 = vmul.f32 %v3924, %v4075
        %v4082 = vmul.f32 %v3926, %v4075
        %v4083 = vmul.f32 %v3929, %v4075
        %v4084 = vmul.f32 %v3931, %v4075
        %v4085 = vmul.f32 %v3934, %v4075
        %v4086 = vmul.f32 %v3936, %v4075
        %v4087 = vmul.f32 %v3939, %v4075
        %v4088 = vmul.f32 %v3941, %v4075
        %v4089 = vmul.f32 %v3944, %v4075
        %v4090 = vmul.f32 %v3946, %v4075
        %v4091 = vmul.f32 %v3949, %v4075
        %v4092 = vmul.f32 %v3951, %v4075
        %v4093 = vmul.f32 %v3954, %v4075
        %v4094 = vmul.f32 %v3956, %v4075
        %v4095 = vmul.f32 %v3959, %v4075
        %v4096 = vmul.f32 %v3961, %v4075
        %v4097 = vmul.f32 %v3964, %v4075
        %v4098 = vmul.f32 %v3966, %v4075
        %v4099 = vmul.f32 %v3969, %v4075
        %v4100 = vmul.f32 %v3971, %v4075
        %v4101 = vmul.f32 %v3974, %v4075
        %v4102 = vmul.f32 %v3976, %v4075
        %v4103 = vmul.f32 %v3979, %v4075
        %v4104 = vmul.f32 %v3981, %v4075
        %v4105 = vmul.f32 %v3984, %v4075
        %v4106 = vmul.f32 %v3986, %v4075
        %v4107 = vmul.f32 %v3989, %v4075
        %v4108 = vmul.f32 %v3991, %v4075
        %v4109 = vmul.f32 %v3994, %v4075
        %v4110 = vmul.f32 %v3996, %v4075
        %v4111 = vmul.f32 %v3999, %v4075
        %v4112 = vmul.f32 %v4001, %v4075
        %v4113 = vmul.f32 %v4004, %v4075
        %v4114 = vmul.f32 %v4006, %v4075
        %v4115 = vmul.f32 %v4009, %v4075
        %v4116 = vmul.f32 %v4011, %v4075
        %v4117 = vmul.f32 %v4014, %v4075
        %v4118 = vmul.f32 %v4016, %v4075
        %v4119 = vmul.f32 %v4019, %v4075
        %v4120 = vmul.f32 %v4021, %v4075
        %v4121 = vmul.f32 %v4024, %v4075
        %v4122 = vmul.f32 %v4026, %v4075
        %v4123 = vmul.f32 %v4029, %v4075
        %v4124 = vmul.f32 %v4031, %v4075
        %v4125 = vmul.f32 %v4034, %v4075
        %v4126 = vmul.f32 %v4036, %v4075
        %v4127 = vmul.f32 %v4039, %v4075
        %v4128 = vmul.f32 %v4041, %v4075
        %v4129 = vmul.f32 %v4044, %v4075
        %v4130 = vmul.f32 %v4046, %v4075
        %v4131 = vmul.f32 %v4049, %v4075
        %v4132 = vmul.f32 %v4051, %v4075
        %v4133 = vmul.f32 %v4054, %v4075
        %v4134 = vmul.f32 %v4056, %v4075
        %v4135 = vmul.f32 %v4059, %v4075
        %v4136 = vmul.f32 %v4061, %v4075
        %v4137 = vmul.f32 %v4064, %v4075
        %v4138 = vmul.f32 %v4066, %v4075
        %v4139 = vmul.f32 %v4069, %v4075
        %v4140 = vmul.f32 %v4071, %v4075
        %v4141 = vld [vmem:[%s283] sm:$0x1]
        %v4143 = vperm.slane %v4141, 0
        %v4145 = vadd.f32 %v4077, %v4143
        %v4146 = vadd.f32 %v4078, %v4143
        %v4147 = vadd.f32 %v4079, %v4143
        %v4148 = vadd.f32 %v4080, %v4143
        %v4149 = vadd.f32 %v4081, %v4143
        %v4150 = vadd.f32 %v4082, %v4143
        %v4151 = vadd.f32 %v4083, %v4143
        %v4152 = vadd.f32 %v4084, %v4143
        %v4153 = vadd.f32 %v4085, %v4143
        %v4154 = vadd.f32 %v4086, %v4143
        %v4155 = vadd.f32 %v4087, %v4143
        %v4156 = vadd.f32 %v4088, %v4143
        %v4157 = vadd.f32 %v4089, %v4143
        %v4158 = vadd.f32 %v4090, %v4143
        %v4159 = vadd.f32 %v4091, %v4143
        %v4160 = vadd.f32 %v4092, %v4143
        %v4161 = vadd.f32 %v4093, %v4143
        %v4162 = vadd.f32 %v4094, %v4143
        %v4163 = vadd.f32 %v4095, %v4143
        %v4164 = vadd.f32 %v4096, %v4143
        %v4165 = vadd.f32 %v4097, %v4143
        %v4166 = vadd.f32 %v4098, %v4143
        %v4167 = vadd.f32 %v4099, %v4143
        %v4168 = vadd.f32 %v4100, %v4143
        %v4169 = vadd.f32 %v4101, %v4143
        %v4170 = vadd.f32 %v4102, %v4143
        %v4171 = vadd.f32 %v4103, %v4143
        %v4172 = vadd.f32 %v4104, %v4143
        %v4173 = vadd.f32 %v4105, %v4143
        %v4174 = vadd.f32 %v4106, %v4143
        %v4175 = vadd.f32 %v4107, %v4143
        %v4176 = vadd.f32 %v4108, %v4143
        %v4177 = vadd.f32 %v4109, %v4143
        %v4178 = vadd.f32 %v4110, %v4143
        %v4179 = vadd.f32 %v4111, %v4143
        %v4180 = vadd.f32 %v4112, %v4143
        %v4181 = vadd.f32 %v4113, %v4143
        %v4182 = vadd.f32 %v4114, %v4143
        %v4183 = vadd.f32 %v4115, %v4143
        %v4184 = vadd.f32 %v4116, %v4143
        %v4185 = vadd.f32 %v4117, %v4143
        %v4186 = vadd.f32 %v4118, %v4143
        %v4187 = vadd.f32 %v4119, %v4143
        %v4188 = vadd.f32 %v4120, %v4143
        %v4189 = vadd.f32 %v4121, %v4143
        %v4190 = vadd.f32 %v4122, %v4143
        %v4191 = vadd.f32 %v4123, %v4143
        %v4192 = vadd.f32 %v4124, %v4143
        %v4193 = vadd.f32 %v4125, %v4143
        %v4194 = vadd.f32 %v4126, %v4143
        %v4195 = vadd.f32 %v4127, %v4143
        %v4196 = vadd.f32 %v4128, %v4143
        %v4197 = vadd.f32 %v4129, %v4143
        %v4198 = vadd.f32 %v4130, %v4143
        %v4199 = vadd.f32 %v4131, %v4143
        %v4200 = vadd.f32 %v4132, %v4143
        %v4201 = vadd.f32 %v4133, %v4143
        %v4202 = vadd.f32 %v4134, %v4143
        %v4203 = vadd.f32 %v4135, %v4143
        %v4204 = vadd.f32 %v4136, %v4143
        %v4205 = vadd.f32 %v4137, %v4143
        %v4206 = vadd.f32 %v4138, %v4143
        %v4207 = vadd.f32 %v4139, %v4143
        %v4208 = vadd.f32 %v4140, %v4143
        %v4209 = vmax.f32 %v4145, 0.0
        %v4210 = vmax.f32 %v4146, 0.0
        %v4211 = vmax.f32 %v4147, 0.0
        %v4212 = vmax.f32 %v4148, 0.0
        %v4213 = vmax.f32 %v4149, 0.0
        %v4214 = vmax.f32 %v4150, 0.0
        %v4215 = vmax.f32 %v4151, 0.0
        %v4216 = vmax.f32 %v4152, 0.0
        %v4217 = vmax.f32 %v4153, 0.0
        %v4218 = vmax.f32 %v4154, 0.0
        %v4219 = vmax.f32 %v4155, 0.0
        %v4220 = vmax.f32 %v4156, 0.0
        %v4221 = vmax.f32 %v4157, 0.0
        %v4222 = vmax.f32 %v4158, 0.0
        %v4223 = vmax.f32 %v4159, 0.0
        %v4224 = vmax.f32 %v4160, 0.0
        %v4225 = vmax.f32 %v4161, 0.0
        %v4226 = vmax.f32 %v4162, 0.0
        %v4227 = vmax.f32 %v4163, 0.0
        %v4228 = vmax.f32 %v4164, 0.0
        %v4229 = vmax.f32 %v4165, 0.0
        %v4230 = vmax.f32 %v4166, 0.0
        %v4231 = vmax.f32 %v4167, 0.0
        %v4232 = vmax.f32 %v4168, 0.0
        %v4233 = vmax.f32 %v4169, 0.0
        %v4234 = vmax.f32 %v4170, 0.0
        %v4235 = vmax.f32 %v4171, 0.0
        %v4236 = vmax.f32 %v4172, 0.0
        %v4237 = vmax.f32 %v4173, 0.0
        %v4238 = vmax.f32 %v4174, 0.0
        %v4239 = vmax.f32 %v4175, 0.0
        %v4240 = vmax.f32 %v4176, 0.0
        %v4241 = vmax.f32 %v4177, 0.0
        %v4242 = vmax.f32 %v4178, 0.0
        %v4243 = vmax.f32 %v4179, 0.0
        %v4244 = vmax.f32 %v4180, 0.0
        %v4245 = vmax.f32 %v4181, 0.0
        %v4246 = vmax.f32 %v4182, 0.0
        %v4247 = vmax.f32 %v4183, 0.0
        %v4248 = vmax.f32 %v4184, 0.0
        %v4249 = vmax.f32 %v4185, 0.0
        %v4250 = vmax.f32 %v4186, 0.0
        %v4251 = vmax.f32 %v4187, 0.0
        %v4252 = vmax.f32 %v4188, 0.0
        %v4253 = vmax.f32 %v4189, 0.0
        %v4254 = vmax.f32 %v4190, 0.0
        %v4255 = vmax.f32 %v4191, 0.0
        %v4256 = vmax.f32 %v4192, 0.0
        %v4257 = vmax.f32 %v4193, 0.0
        %v4258 = vmax.f32 %v4194, 0.0
        %v4259 = vmax.f32 %v4195, 0.0
        %v4260 = vmax.f32 %v4196, 0.0
        %v4261 = vmax.f32 %v4197, 0.0
        %v4262 = vmax.f32 %v4198, 0.0
        %v4263 = vmax.f32 %v4199, 0.0
        %v4264 = vmax.f32 %v4200, 0.0
        %v4265 = vmax.f32 %v4201, 0.0
        %v4266 = vmax.f32 %v4202, 0.0
        %v4267 = vmax.f32 %v4203, 0.0
        %v4268 = vmax.f32 %v4204, 0.0
        %v4269 = vmax.f32 %v4205, 0.0
        %v4270 = vmax.f32 %v4206, 0.0
        %v4271 = vmax.f32 %v4207, 0.0
        %v4272 = vmax.f32 %v4208, 0.0
        %v4273 = vpack.c.bf16 %v4209, %v4209
        %v4274 = vpack.c.bf16 %v4210, %v4210
        %v4275 = vpack.c.bf16 %v4211, %v4211
        %v4276 = vpack.c.bf16 %v4212, %v4212
        %v4277 = vpack.c.bf16 %v4213, %v4213
        %v4278 = vpack.c.bf16 %v4214, %v4214
        %v4279 = vpack.c.bf16 %v4215, %v4215
        %v4280 = vpack.c.bf16 %v4216, %v4216
        %v4281 = vpack.c.bf16 %v4217, %v4217
        %v4282 = vpack.c.bf16 %v4218, %v4218
        %v4283 = vpack.c.bf16 %v4219, %v4219
        %v4284 = vpack.c.bf16 %v4220, %v4220
        %v4285 = vpack.c.bf16 %v4221, %v4221
        %v4286 = vpack.c.bf16 %v4222, %v4222
        %v4287 = vpack.c.bf16 %v4223, %v4223
        %v4288 = vpack.c.bf16 %v4224, %v4224
        %v4289 = vpack.c.bf16 %v4225, %v4225
        %v4290 = vpack.c.bf16 %v4226, %v4226
        %v4291 = vpack.c.bf16 %v4227, %v4227
        %v4292 = vpack.c.bf16 %v4228, %v4228
        %v4293 = vpack.c.bf16 %v4229, %v4229
        %v4294 = vpack.c.bf16 %v4230, %v4230
        %v4295 = vpack.c.bf16 %v4231, %v4231
        %v4296 = vpack.c.bf16 %v4232, %v4232
        %v4297 = vpack.c.bf16 %v4233, %v4233
        %v4298 = vpack.c.bf16 %v4234, %v4234
        %v4299 = vpack.c.bf16 %v4235, %v4235
        %v4300 = vpack.c.bf16 %v4236, %v4236
        %v4301 = vpack.c.bf16 %v4237, %v4237
        %v4302 = vpack.c.bf16 %v4238, %v4238
        %v4303 = vpack.c.bf16 %v4239, %v4239
        %v4304 = vpack.c.bf16 %v4240, %v4240
        %v4305 = vpack.c.bf16 %v4241, %v4241
        %v4306 = vpack.c.bf16 %v4242, %v4242
        %v4307 = vpack.c.bf16 %v4243, %v4243
        %v4308 = vpack.c.bf16 %v4244, %v4244
        %v4309 = vpack.c.bf16 %v4245, %v4245
        %v4310 = vpack.c.bf16 %v4246, %v4246
        %v4311 = vpack.c.bf16 %v4247, %v4247
        %v4312 = vpack.c.bf16 %v4248, %v4248
        %v4313 = vpack.c.bf16 %v4249, %v4249
        %v4314 = vpack.c.bf16 %v4250, %v4250
        %v4315 = vpack.c.bf16 %v4251, %v4251
        %v4316 = vpack.c.bf16 %v4252, %v4252
        %v4317 = vpack.c.bf16 %v4253, %v4253
        %v4318 = vpack.c.bf16 %v4254, %v4254
        %v4319 = vpack.c.bf16 %v4255, %v4255
        %v4320 = vpack.c.bf16 %v4256, %v4256
        %v4321 = vpack.c.bf16 %v4257, %v4257
        %v4322 = vpack.c.bf16 %v4258, %v4258
        %v4323 = vpack.c.bf16 %v4259, %v4259
        %v4324 = vpack.c.bf16 %v4260, %v4260
        %v4325 = vpack.c.bf16 %v4261, %v4261
        %v4326 = vpack.c.bf16 %v4262, %v4262
        %v4327 = vpack.c.bf16 %v4263, %v4263
        %v4328 = vpack.c.bf16 %v4264, %v4264
        %v4329 = vpack.c.bf16 %v4265, %v4265
        %v4330 = vpack.c.bf16 %v4266, %v4266
        %v4331 = vpack.c.bf16 %v4267, %v4267
        %v4332 = vpack.c.bf16 %v4268, %v4268
        %v4333 = vpack.c.bf16 %v4269, %v4269
        %v4334 = vpack.c.bf16 %v4270, %v4270
        %v4335 = vpack.c.bf16 %v4271, %v4271
        %v4336 = vpack.c.bf16 %v4272, %v4272
        %4337 = vst [vmem:[%s321] sm:$0xf] %v4273
        %4338 = vst [vmem:[%s321 + $0x4] sm:$0xf] %v4274
        %4339 = vst [vmem:[%s321 + $0x8] sm:$0xf] %v4275
        %4340 = vst [vmem:[%s321 + $0xc] sm:$0xf] %v4276
        %4341 = vst [vmem:[%s321 + $0x10] sm:$0xf] %v4277
        %4342 = vst [vmem:[%s321 + $0x14] sm:$0xf] %v4278
        %4343 = vst [vmem:[%s321 + $0x18] sm:$0xf] %v4279
        %4344 = vst [vmem:[%s321 + $0x1c] sm:$0xf] %v4280
        %4345 = vst [vmem:[%s321 + $0x20] sm:$0xf] %v4281
        %4346 = vst [vmem:[%s321 + $0x24] sm:$0xf] %v4282
        %4347 = vst [vmem:[%s321 + $0x28] sm:$0xf] %v4283
        %4348 = vst [vmem:[%s321 + $0x2c] sm:$0xf] %v4284
        %4349 = vst [vmem:[%s321 + $0x30] sm:$0xf] %v4285
        %4350 = vst [vmem:[%s321 + $0x34] sm:$0xf] %v4286
        %4351 = vst [vmem:[%s321 + $0x38] sm:$0xf] %v4287
        %4352 = vst [vmem:[%s321 + $0x3c] sm:$0xf] %v4288
        %4353 = vst [vmem:[%s321 + $0x40] sm:$0xf] %v4289
        %4354 = vst [vmem:[%s321 + $0x44] sm:$0xf] %v4290
        %4355 = vst [vmem:[%s321 + $0x48] sm:$0xf] %v4291
        %4356 = vst [vmem:[%s321 + $0x4c] sm:$0xf] %v4292
        %4357 = vst [vmem:[%s321 + $0x50] sm:$0xf] %v4293
        %4358 = vst [vmem:[%s321 + $0x54] sm:$0xf] %v4294
        %4359 = vst [vmem:[%s321 + $0x58] sm:$0xf] %v4295
        %4360 = vst [vmem:[%s321 + $0x5c] sm:$0xf] %v4296
        %4361 = vst [vmem:[%s321 + $0x60] sm:$0xf] %v4297
        %4362 = vst [vmem:[%s321 + $0x64] sm:$0xf] %v4298
        %4363 = vst [vmem:[%s321 + $0x68] sm:$0xf] %v4299
        %4364 = vst [vmem:[%s321 + $0x6c] sm:$0xf] %v4300
        %4365 = vst [vmem:[%s321 + $0x70] sm:$0xf] %v4301
        %4366 = vst [vmem:[%s321 + $0x74] sm:$0xf] %v4302
        %4367 = vst [vmem:[%s321 + $0x78] sm:$0xf] %v4303
        %4368 = vst [vmem:[%s321 + $0x7c] sm:$0xf] %v4304
        %4369 = vst [vmem:[%s321 + $0x80] sm:$0xf] %v4305
        %4370 = vst [vmem:[%s321 + $0x84] sm:$0xf] %v4306
        %4371 = vst [vmem:[%s321 + $0x88] sm:$0xf] %v4307
        %4372 = vst [vmem:[%s321 + $0x8c] sm:$0xf] %v4308
        %4373 = vst [vmem:[%s321 + $0x90] sm:$0xf] %v4309
        %4374 = vst [vmem:[%s321 + $0x94] sm:$0xf] %v4310
        %4375 = vst [vmem:[%s321 + $0x98] sm:$0xf] %v4311
        %4376 = vst [vmem:[%s321 + $0x9c] sm:$0xf] %v4312
        %4377 = vst [vmem:[%s321 + $0xa0] sm:$0xf] %v4313
        %4378 = vst [vmem:[%s321 + $0xa4] sm:$0xf] %v4314
        %4379 = vst [vmem:[%s321 + $0xa8] sm:$0xf] %v4315
        %4380 = vst [vmem:[%s321 + $0xac] sm:$0xf] %v4316
        %4381 = vst [vmem:[%s321 + $0xb0] sm:$0xf] %v4317
        %4382 = vst [vmem:[%s321 + $0xb4] sm:$0xf] %v4318
        %4383 = vst [vmem:[%s321 + $0xb8] sm:$0xf] %v4319
        %4384 = vst [vmem:[%s321 + $0xbc] sm:$0xf] %v4320
        %4385 = vst [vmem:[%s321 + $0xc0] sm:$0xf] %v4321
        %4386 = vst [vmem:[%s321 + $0xc4] sm:$0xf] %v4322
        %4387 = vst [vmem:[%s321 + $0xc8] sm:$0xf] %v4323
        %4388 = vst [vmem:[%s321 + $0xcc] sm:$0xf] %v4324
        %4389 = vst [vmem:[%s321 + $0xd0] sm:$0xf] %v4325
        %4390 = vst [vmem:[%s321 + $0xd4] sm:$0xf] %v4326
        %4391 = vst [vmem:[%s321 + $0xd8] sm:$0xf] %v4327
        %4392 = vst [vmem:[%s321 + $0xdc] sm:$0xf] %v4328
        %4393 = vst [vmem:[%s321 + $0xe0] sm:$0xf] %v4329
        %4394 = vst [vmem:[%s321 + $0xe4] sm:$0xf] %v4330
        %4395 = vst [vmem:[%s321 + $0xe8] sm:$0xf] %v4331
        %4396 = vst [vmem:[%s321 + $0xec] sm:$0xf] %v4332
        %4397 = vst [vmem:[%s321 + $0xf0] sm:$0xf] %v4333
        %4398 = vst [vmem:[%s321 + $0xf4] sm:$0xf] %v4334
        %4399 = vst [vmem:[%s321 + $0xf8] sm:$0xf] %v4335
        %4400 = vst [vmem:[%s321 + $0xfc] sm:$0xf] %v4336
        %s4401 = sand.u32 %s159, 1
        %s4402 = scalar_lea.sflag [#allocation4], %s4401
        %s4403 = sand.u32 %s159, 1
        %s4404 = smul.addr %s4403, 256
        %s4405 = scalar_lea.vmem [#allocation8], %s4404
        // Predicated region
        $region49: #{tpu_custom_call.1} parent=35 // pred_check
          %p4406 = pneg %p169
        $region50: #{tpu_custom_call.1} parent=35 // pred_check_branch
          %4408 = sbr.rel (%p4406) target = $region52
        $region51: #{tpu_custom_call.1} parent=35 // pred_region
          %s4409 = smul.u32 16, %s31
          %4411 = vsyncadd %s4402, 0
          %s4412 = smul.addr %s4409, 12
          %s4413 = sadd.s32 %s30, %s4412
          %s4414 = smul.addr %s29, 384
          %s4415 = sadd.s32 %s4413, %s4414
          %s4416 = smul.addr %s4415, 4
          %s4417 = scalar_lea.hbm %s4, %s4416
          %s4418 = sshll.u32 %s4405, 4
          %s4419 = int_to_ptr.vmem [resolvable:$true] %s4418
          %s4420 = sshll.u32 %s4417, 4
          %s4421 = int_to_ptr.hbm [resolvable:$true] %s4420
          %4426 = dma.vmem_to_hbm [thread:$0]  %s4419, 4096, %s4421, %s4402, 64, 192, 4
        $region52: #{tpu_custom_call.1} parent=35 // pred_fallthru
          _
      $region36: #{tpu_custom_call.1} parent=5 // pred_fallthru
        _
      %p4427 = scmp.le.s32.totalorder 2, %s19
      // Predicated region
      $region53: #{tpu_custom_call.1} parent=5 // pred_check
        %p4428 = pneg %p4427
      $region54: #{tpu_custom_call.1} parent=5 // pred_check_branch
        %4430 = sbr.rel (%p4428) target = $region56
      $region55: #{tpu_custom_call.1} parent=5 // pred_region
        %s4431 = ssub.s32 %s19, 2
        // Predicated region
        $region57: #{tpu_custom_call.1} parent=55 // pred_check
          %p4432 = pneg %p175
        $region58: #{tpu_custom_call.1} parent=55 // pred_check_branch
          %4434 = sbr.rel (%p4432) target = $region60
        $region59: #{tpu_custom_call.1} parent=55 // pred_region
          %s4435 = sand.u32 %s160, 1
          %s4436 = scalar_lea.sflag [#allocation4], %s4435
          %s4437 = sand.u32 %s160, 1
          %s4438 = smul.addr %s4437, 256
          %s4439 = scalar_lea.vmem [#allocation8], %s4438
          %4441 = dma.done %s4436, 4096
        $region60: #{tpu_custom_call.1} parent=55 // pred_fallthru
          _
      $region56: #{tpu_custom_call.1} parent=5 // pred_fallthru
        _
    $region6: #{tpu_custom_call.1} parent=1 // loop_footer
      %s23 = sadd.s32 1, %s19
    $region7: #{tpu_custom_call.1} parent=1 // loop_footer_branch
      %18 = sbr.rel target = $region3
    $region8: #{tpu_custom_call.1} parent=1 // loop_exit
      _
    %4442 = vsyncpa [#allocation3], 1
    %s4443 = scalar_lea.sflag [#allocation3], 1
    %4444 = vsyncpa %s4443, 1
    %4445 = vsyncpa [#allocation6], 1
    %s4446 = scalar_lea.sflag [#allocation6], 1
    %4447 = vsyncpa %s4446, 1
    %4448 = vsyncpa [#allocation4], 1
    %s4449 = scalar_lea.sflag [#allocation4], 1
    %4450 = vsyncpa %s4449, 1

</llo_original>
